<compile_context>
chip_gen: v5e
topology: v5e:2x2
jax: 0.10.0
libtpu: 0.0.40
codegen_flags: <defaults>
</compile_context>

<pallas_src>
import jax
import jax.numpy as jnp
from jax.experimental import pallas as pl
from jax.experimental.pallas import tpu as pltpu


# ----------------------------------------------------------------------------
# Per-device budget (VMEM limit + M tile), with a safe fallback.
# ----------------------------------------------------------------------------
def _tpu_vmem_capacity_bytes():
    try:
        return int(pltpu.get_tpu_info().vmem_capacity_bytes)
    except Exception:
        return 64 * 1024 * 1024  # conservative (v7x per-TC VMEM)


def _budget():
    cap = _tpu_vmem_capacity_bytes()
    vmem_limit = max(32 * 1024 * 1024, min((cap * 3) // 4, 96 * 1024 * 1024))
    tile_m = 1024 if cap >= 100 * 1024 * 1024 else 512   # v5e/v6e vs v7x
    return vmem_limit, tile_m


# ----------------------------------------------------------------------------
# Kernel A: out1 = relu(bn1(x @ w1))        (1x1 conv + folded BN + ReLU)
# ----------------------------------------------------------------------------
def _matmul_bn_relu_kernel(x_ref, w_ref, s_ref, b_ref, o_ref):
    acc = jnp.dot(x_ref[...], w_ref[...], preferred_element_type=jnp.float32)
    acc = jnp.maximum(acc * s_ref[...] + b_ref[...], 0.0)
    o_ref[...] = acc.astype(o_ref.dtype)


def matmul_bn_relu(x, w, scale, shift, *, out_dtype, tile_m, vmem_limit):
    """x: (M, K) bf16; w: (K, P) bf16; scale/shift: (1, P) f32."""
    M, K = x.shape
    P = w.shape[1]
    tm = min(tile_m, M)
    return pl.pallas_call(
        _matmul_bn_relu_kernel,
        out_shape=jax.ShapeDtypeStruct((M, P), out_dtype),
        grid_spec=pltpu.PrefetchScalarGridSpec(
            num_scalar_prefetch=0,
            grid=(pl.cdiv(M, tm),),
            in_specs=[
                pl.BlockSpec((tm, K), lambda i: (i, 0)),   # activation tile
                pl.BlockSpec((K, P), lambda i: (0, 0)),    # conv1 weight
                pl.BlockSpec((1, P), lambda i: (0, 0)),    # BN scale
                pl.BlockSpec((1, P), lambda i: (0, 0)),    # BN shift
            ],
            out_specs=pl.BlockSpec((tm, P), lambda i: (i, 0)),
        ),
        compiler_params=pltpu.CompilerParams(
            dimension_semantics=("parallel",),
            vmem_limit_bytes=vmem_limit),
    )(x, w, scale, shift)


# ----------------------------------------------------------------------------
# Kernel B: 3x3 conv (pad=1, stride=1) + folded BN + ReLU, row-group matmuls.
# Grid = (image, row_group).  Per group: 3 dots of (R*W, 3C) x (3C, Cout),
# with the 3 vertical taps folded into the contraction dim.
# ----------------------------------------------------------------------------
def _pick_row_tile(H):
    for r in (16, 14, 8, 7, 4, 2, 1):
        if r <= H and H % r == 0:
            return r
    return 1


def _conv3x3_bn_relu_kernel(x_ref, w_ref, s_ref, b_ref, o_ref):
    # x_ref: (H+2, W+2, C) zero-padded NHWC image (resident across row groups)
    # w_ref: (3, 3C, Cout) taps, laid out [dw, dh*C + cin, cout]
    # s_ref, b_ref: (1, Cout) f32 folded BN
    # o_ref: (R, W, Cout) output row group
    R, W, cout = o_ref.shape
    k3 = w_ref.shape[1]
    g = pl.program_id(1)

    slab = x_ref[pl.ds(g * R, R + 2)]                       # (R+2, W+2, C)
    # Fold the 3 vertical taps into K: cat[r, w, dh*C + c] = slab[r+dh, w, c]
    cat = jnp.concatenate([slab[0:R], slab[1:R + 1], slab[2:R + 2]], axis=-1)

    acc = jnp.zeros((R * W, cout), jnp.float32)
    for dw in range(3):                                     # 3 MXU pushes / group
        win = cat[:, dw:dw + W, :].reshape(R * W, k3)
        acc = acc + jnp.dot(win, w_ref[dw],
                            preferred_element_type=jnp.float32)
    acc = jnp.maximum(acc * s_ref[...] + b_ref[...], 0.0)
    o_ref[...] = acc.reshape(R, W, cout).astype(o_ref.dtype)


def conv3x3_bn_relu(x_nhwc, w_k3, scale, shift, *, out_dtype, vmem_limit):
    """x_nhwc: (N, H, W, C); w_k3: (3, 3C, Cout) = [dw, dh*C + cin, cout]."""
    nb, H, W, C = x_nhwc.shape
    cout = w_k3.shape[-1]
    R = _pick_row_tile(H)
    x_pad = jnp.pad(x_nhwc, ((0, 0), (1, 1), (1, 1), (0, 0)))
    return pl.pallas_call(
        _conv3x3_bn_relu_kernel,
        out_shape=jax.ShapeDtypeStruct((nb, H, W, cout), out_dtype),
        grid_spec=pltpu.PrefetchScalarGridSpec(
            num_scalar_prefetch=0,
            grid=(nb, H // R),
            in_specs=[
                # whole padded image, block index constant across row groups
                pl.BlockSpec((None, H + 2, W + 2, C), lambda n, g: (n, 0, 0, 0)),
                pl.BlockSpec((3, 3 * C, cout), lambda n, g: (0, 0, 0)),
                pl.BlockSpec((1, cout), lambda n, g: (0, 0)),
                pl.BlockSpec((1, cout), lambda n, g: (0, 0)),
            ],
            out_specs=pl.BlockSpec((None, R, W, cout), lambda n, g: (n, g, 0, 0)),
        ),
        compiler_params=pltpu.CompilerParams(
            dimension_semantics=("parallel", "parallel"),
            vmem_limit_bytes=vmem_limit),
    )(x_pad, w_k3, scale, shift)


# ----------------------------------------------------------------------------
# Kernel C: out = relu(bn3(y @ w3)) + x @ wid   (conv3 + BN3 + ReLU + identity)
# The identity 1x1 conv is fused here so it never touches HBM.
# ----------------------------------------------------------------------------
def _conv3_bn_relu_add_id_kernel(y_ref, x_ref, w3_ref, wid_ref, s_ref, b_ref,
                                 o_ref):
    acc = jnp.dot(y_ref[...], w3_ref[...], preferred_element_type=jnp.float32)
    acc = jnp.maximum(acc * s_ref[...] + b_ref[...], 0.0)
    acc = acc + jnp.dot(x_ref[...], wid_ref[...],
                        preferred_element_type=jnp.float32)
    o_ref[...] = acc.astype(o_ref.dtype)


def conv3_bn_relu_add_identity(y, x, w3, wid, scale, shift, *, out_dtype,
                               tile_m, tile_n, vmem_limit):
    """y: (M, K1) conv2 output; x: (M, K2) block input; w3: (K1, N); wid: (K2, N)."""
    M, K1 = y.shape
    K2 = x.shape[1]
    N = w3.shape[1]
    tm = min(tile_m, M)
    tn = min(tile_n, N)
    return pl.pallas_call(
        _conv3_bn_relu_add_id_kernel,
        out_shape=jax.ShapeDtypeStruct((M, N), out_dtype),
        grid_spec=pltpu.PrefetchScalarGridSpec(
            num_scalar_prefetch=0,
            grid=(pl.cdiv(M, tm), pl.cdiv(N, tn)),
            in_specs=[
                pl.BlockSpec((tm, K1), lambda i, j: (i, 0)),   # conv2 output tile
                pl.BlockSpec((tm, K2), lambda i, j: (i, 0)),   # block input tile
                pl.BlockSpec((K1, tn), lambda i, j: (0, j)),   # conv3 weight
                pl.BlockSpec((K2, tn), lambda i, j: (0, j)),   # identity weight
                pl.BlockSpec((1, tn), lambda i, j: (0, j)),    # BN3 scale
                pl.BlockSpec((1, tn), lambda i, j: (0, j)),    # BN3 shift
            ],
            out_specs=pl.BlockSpec((tm, tn), lambda i, j: (i, j)),
        ),
        compiler_params=pltpu.CompilerParams(
            dimension_semantics=("parallel", "parallel"),
            vmem_limit_bytes=vmem_limit),
    )(y, x, w3, wid, scale, shift)


# ----------------------------------------------------------------------------
# Parameter construction (deterministic, synthetic) + BN folding
# ----------------------------------------------------------------------------
def init_bottleneck_params(key, inplanes, planes, dtype=jnp.float32):
    exp = 4
    ks = jax.random.split(key, 16)
    eps = 1e-5

    def conv_w(k, cout, cin, kh, kw):
        return jax.random.normal(k, (cout, cin, kh, kw), dtype) * 0.1

    def bn(kg, kb, km, kv, c):
        gamma = 1.0 + 0.1 * jax.random.normal(kg, (c,), dtype)
        beta = 0.1 * jax.random.normal(kb, (c,), dtype)
        mean = 0.1 * jax.random.normal(km, (c,), dtype)
        var = 1.0 + 0.1 * jax.random.uniform(kv, (c,), dtype)
        return dict(gamma=gamma, beta=beta, mean=mean, var=var, eps=eps)

    return dict(
        inplanes=inplanes, planes=planes, expansion=exp,
        conv_w=conv_w(ks[0], planes * exp, inplanes, 1, 1),   # identity branch
        conv1_w=conv_w(ks[1], planes, inplanes, 1, 1),
        conv2_w=conv_w(ks[2], planes, planes, 3, 3),
        conv3_w=conv_w(ks[3], planes * exp, planes, 1, 1),
        bn1=bn(ks[4], ks[5], ks[6], ks[7], planes),
        bn2=bn(ks[8], ks[9], ks[10], ks[11], planes),
        bn3=bn(ks[12], ks[13], ks[14], ks[15], planes * exp),
    )


def _bn_fold(bn):
    scale = bn["gamma"] / jnp.sqrt(bn["var"] + bn["eps"])
    shift = bn["beta"] - bn["mean"] * scale
    return scale[None, :].astype(jnp.float32), shift[None, :].astype(jnp.float32)


# ----------------------------------------------------------------------------
# Forward pass (glue around the Pallas kernels)
# ----------------------------------------------------------------------------
def bottleneck_forward(x_nchw, params, *, compute_dtype=jnp.bfloat16):
    N, Cin, H, W = x_nchw.shape
    p = params["planes"]
    e = params["expansion"]
    M = N * H * W
    vmem_limit, tile_m = _budget()

    # NHWC-flattened activations in bf16 (half HBM bytes, native MXU rate)
    x_nhwc = jnp.transpose(x_nchw, (0, 2, 3, 1)).astype(compute_dtype)
    x2d = x_nhwc.reshape(M, Cin)

    # out1 = relu(bn1(conv1x1(x)))
    w1 = params["conv1_w"].reshape(p, Cin).T.astype(compute_dtype)       # (Cin, p)
    s1, b1 = _bn_fold(params["bn1"])
    out1 = matmul_bn_relu(x2d, w1, s1, b1, out_dtype=compute_dtype,
                          tile_m=tile_m, vmem_limit=vmem_limit)

    # out2 = relu(bn2(conv3x3(out1)))
    w2 = (jnp.transpose(params["conv2_w"], (3, 2, 1, 0))   # (kw, kh, cin, cout)
          .reshape(3, 3 * p, p).astype(compute_dtype))     # (3, 3C, Cout)
    s2, b2 = _bn_fold(params["bn2"])
    out2 = conv3x3_bn_relu(out1.reshape(N, H, W, p), w2, s2, b2,
                           out_dtype=compute_dtype, vmem_limit=vmem_limit)

    # out = relu(bn3(conv1x1(out2))) + conv1x1_id(x)   (module order: relu, add)
    w3 = params["conv3_w"].reshape(p * e, p).T.astype(compute_dtype)     # (p, 4p)
    wid = params["conv_w"].reshape(p * e, Cin).T.astype(compute_dtype)   # (Cin, 4p)
    s3, b3 = _bn_fold(params["bn3"])
    out = conv3_bn_relu_add_identity(
        out2.reshape(M, p), x2d, w3, wid, s3, b3,
        out_dtype=jnp.float32,       # module-facing output dtype
        tile_m=tile_m, tile_n=1024, vmem_limit=vmem_limit)

    return jnp.transpose(out.reshape(N, H, W, p * e), (0, 3, 1, 2))


# ----------------------------------------------------------------------------
# Pure-JAX reference (mirrors the PyTorch forward, eval-mode BN)
# ----------------------------------------------------------------------------
def bottleneck_reference(x, params):
    dn = ("NCHW", "OIHW", "NCHW")

    def conv(v, w, pad):
        return jax.lax.conv_general_dilated(
            v, w, window_strides=(1, 1), padding=pad, dimension_numbers=dn)

    def bn(v, b):
        s = b["gamma"] / jnp.sqrt(b["var"] + b["eps"])
        return (v * s[None, :, None, None]
                + (b["beta"] - b["mean"] * s)[None, :, None, None])

    relu = lambda v: jnp.maximum(v, 0.0)
    identity = conv(x, params["conv_w"], "VALID")
    out = relu(bn(conv(x, params["conv1_w"], "VALID"), params["bn1"]))
    out = relu(bn(conv(out, params["conv2_w"], ((1, 1), (1, 1))), params["bn2"]))
    out = relu(bn(conv(out, params["conv3_w"], "VALID"), params["bn3"]))
    return out + identity


if __name__ == "__main__":
    key = jax.random.PRNGKey(0)
    k_x, k_p = jax.random.split(key)

    N, inplanes, planes, H, W = 2, 8, 4, 16, 16     # M = N*H*W = 512
    x = jax.random.normal(k_x, (N, inplanes, H, W), jnp.float32)
    params = init_bottleneck_params(k_p, inplanes, planes)

    fwd = jax.jit(lambda xx: bottleneck_forward(xx, params))
    y = jax.block_until_ready(fwd(x))

    y_ref = jax.block_until_ready(bottleneck_reference(x, params))
    assert y.shape == (N, planes * 4, H, W), y.shape
    max_err = float(jnp.max(jnp.abs(y - y_ref)))
    assert jnp.allclose(y, y_ref, atol=3e-2, rtol=3e-2), max_err  # bf16 tolerance

    print("KERNEL_OK")
</pallas_src>

<mosaic_0001>
module attributes {stable_mosaic.version = 11 : i64} {
  func.func @_matmul_bn_relu_kernel(%arg0: i32, %arg1: memref<512x8xbf16, #tpu.memory_space<vmem>>, %arg2: memref<8x4xbf16, #tpu.memory_space<vmem>>, %arg3: memref<1x4xf32, #tpu.memory_space<vmem>>, %arg4: memref<1x4xf32, #tpu.memory_space<vmem>>, %arg5: memref<512x4xbf16, #tpu.memory_space<vmem>>) attributes {dimension_semantics = [#tpu.dimension_semantics<parallel>], iteration_bounds = array<i64: 1>, scalar_prefetch = 0 : i64, scratch_operands = 0 : i64, tpu.core_type = #tpu.core_type<tc>, window_params = [{transform_indices = @transform_0, window_bounds = array<i64: 512, 8>}, {pipeline_mode = #tpu.pipeline_mode<synchronous>, transform_indices = @transform_1, window_bounds = array<i64: 8, 4>}, {pipeline_mode = #tpu.pipeline_mode<synchronous>, transform_indices = @transform_2, window_bounds = array<i64: 1, 4>}, {pipeline_mode = #tpu.pipeline_mode<synchronous>, transform_indices = @transform_3, window_bounds = array<i64: 1, 4>}, {transform_indices = @transform_4, window_bounds = array<i64: 512, 4>}]} {
    %c0 = arith.constant 0 : index
    %c0_0 = arith.constant 0 : index
    %0 = vector.load %arg1[%c0, %c0_0] : memref<512x8xbf16, #tpu.memory_space<vmem>>, vector<512x8xbf16>
    %c0_1 = arith.constant 0 : index
    %c0_2 = arith.constant 0 : index
    %1 = vector.load %arg2[%c0_1, %c0_2] : memref<8x4xbf16, #tpu.memory_space<vmem>>, vector<8x4xbf16>
    %cst = arith.constant dense<0.000000e+00> : vector<512x4xf32>
    %2 = tpu.matmul %0, %1, %cst {dimension_numbers = #tpu.dot_dimension_numbers<[1], [0], [0], [1], [0, 0, 1, 1], [], []>} : vector<512x8xbf16>, vector<8x4xbf16>, vector<512x4xf32> -> vector<512x4xf32>
    %c0_3 = arith.constant 0 : index
    %c0_4 = arith.constant 0 : index
    %3 = vector.load %arg3[%c0_3, %c0_4] : memref<1x4xf32, #tpu.memory_space<vmem>>, vector<1x4xf32>
    %4 = vector.broadcast %3 : vector<1x4xf32> to vector<512x4xf32>
    %5 = arith.mulf %2, %4 : vector<512x4xf32>
    %c0_5 = arith.constant 0 : index
    %c0_6 = arith.constant 0 : index
    %6 = vector.load %arg4[%c0_5, %c0_6] : memref<1x4xf32, #tpu.memory_space<vmem>>, vector<1x4xf32>
    %7 = vector.broadcast %6 : vector<1x4xf32> to vector<512x4xf32>
    %8 = arith.addf %5, %7 : vector<512x4xf32>
    %cst_7 = arith.constant 0.000000e+00 : f32
    %9 = vector.broadcast %cst_7 : f32 to vector<512x4xf32>
    %10 = arith.maximumf %8, %9 : vector<512x4xf32>
    %11 = arith.truncf %10 : vector<512x4xf32> to vector<512x4xbf16>
    %c0_8 = arith.constant 0 : index
    %c0_9 = arith.constant 0 : index
    %12 = vector.load %arg5[%c0_8, %c0_9] : memref<512x4xbf16, #tpu.memory_space<vmem>>, vector<512x4xbf16>
    tpu.vector_store %arg5[%c0_8, %c0_9], %11 {strides = array<i32>} : memref<512x4xbf16, #tpu.memory_space<vmem>>, vector<512x4xbf16>,
    return
  }
  func.func @transform_0(%arg0: i32) -> (i32, i32) {
    %c0_i32 = arith.constant 0 : i32
    %c0_i32_0 = arith.constant 0 : i32
    return %arg0, %c0_i32 : i32, i32
  }
  func.func @transform_1(%arg0: i32) -> (i32, i32) {
    %c0_i32 = arith.constant 0 : i32
    %c0_i32_0 = arith.constant 0 : i32
    %c0_i32_1 = arith.constant 0 : i32
    return %c0_i32, %c0_i32_0 : i32, i32
  }
  func.func @transform_2(%arg0: i32) -> (i32, i32) {
    %c0_i32 = arith.constant 0 : i32
    %c0_i32_0 = arith.constant 0 : i32
    %c0_i32_1 = arith.constant 0 : i32
    return %c0_i32, %c0_i32_0 : i32, i32
  }
  func.func @transform_3(%arg0: i32) -> (i32, i32) {
    %c0_i32 = arith.constant 0 : i32
    %c0_i32_0 = arith.constant 0 : i32
    %c0_i32_1 = arith.constant 0 : i32
    return %c0_i32, %c0_i32_0 : i32, i32
  }
  func.func @transform_4(%arg0: i32) -> (i32, i32) {
    %c0_i32 = arith.constant 0 : i32
    %c0_i32_0 = arith.constant 0 : i32
    return %arg0, %c0_i32 : i32, i32
  }
}

module attributes {stable_mosaic.version = 11 : i64} {
  func.func @_conv3x3_bn_relu_kernel(%arg0: i32, %arg1: i32, %arg2: memref<1x18x18x4xbf16, #tpu.memory_space<vmem>>, %arg3: memref<3x12x4xbf16, #tpu.memory_space<vmem>>, %arg4: memref<1x4xf32, #tpu.memory_space<vmem>>, %arg5: memref<1x4xf32, #tpu.memory_space<vmem>>, %arg6: memref<1x16x16x4xbf16, #tpu.memory_space<vmem>>) attributes {dimension_semantics = [#tpu.dimension_semantics<parallel>, #tpu.dimension_semantics<parallel>], iteration_bounds = array<i64: 2, 1>, scalar_prefetch = 0 : i64, scratch_operands = 0 : i64, tpu.core_type = #tpu.core_type<tc>, window_params = [{transform_indices = @transform_0, window_bounds = array<i64: 1, 18, 18, 4>}, {pipeline_mode = #tpu.pipeline_mode<synchronous>, transform_indices = @transform_1, window_bounds = array<i64: 3, 12, 4>}, {pipeline_mode = #tpu.pipeline_mode<synchronous>, transform_indices = @transform_2, window_bounds = array<i64: 1, 4>}, {pipeline_mode = #tpu.pipeline_mode<synchronous>, transform_indices = @transform_3, window_bounds = array<i64: 1, 4>}, {transform_indices = @transform_4, window_bounds = array<i64: 1, 16, 16, 4>}]} {
    %c16_i32 = arith.constant 16 : i32
    %0 = arith.muli %arg1, %c16_i32 : i32
    %c0 = arith.constant 0 : index
    %1 = arith.index_cast %0 : i32 to index
    %c0_0 = arith.constant 0 : index
    %c0_1 = arith.constant 0 : index
    %2 = vector.load %arg2[%c0, %1, %c0_0, %c0_1] : memref<1x18x18x4xbf16, #tpu.memory_space<vmem>>, vector<1x18x18x4xbf16>
    %3 = vector.shape_cast %2 : vector<1x18x18x4xbf16> to vector<18x18x4xbf16>
    %4 = vector.extract_strided_slice %3 {offsets = [0, 0, 0], sizes = [16, 18, 4], strides = [1, 1, 1]} : vector<18x18x4xbf16> to vector<16x18x4xbf16>
    %5 = vector.extract_strided_slice %3 {offsets = [1, 0, 0], sizes = [16, 18, 4], strides = [1, 1, 1]} : vector<18x18x4xbf16> to vector<16x18x4xbf16>
    %6 = vector.extract_strided_slice %3 {offsets = [2, 0, 0], sizes = [16, 18, 4], strides = [1, 1, 1]} : vector<18x18x4xbf16> to vector<16x18x4xbf16>
    %7 = tpu.concatenate %4, %5, %6 in 2 : vector<16x18x4xbf16>, vector<16x18x4xbf16>, vector<16x18x4xbf16> -> vector<16x18x12xbf16>
    %cst = arith.constant 0.000000e+00 : f32
    %8 = vector.broadcast %cst : f32 to vector<256x4xf32>
    %9 = vector.extract_strided_slice %7 {offsets = [0, 0, 0], sizes = [16, 16, 12], strides = [1, 1, 1]} : vector<16x18x12xbf16> to vector<16x16x12xbf16>
    %10 = vector.shape_cast %9 : vector<16x16x12xbf16> to vector<256x12xbf16>
    %c0_2 = arith.constant 0 : index
    %c0_3 = arith.constant 0 : index
    %c0_4 = arith.constant 0 : index
    %11 = vector.load %arg3[%c0_2, %c0_3, %c0_4] : memref<3x12x4xbf16, #tpu.memory_space<vmem>>, vector<1x12x4xbf16>
    %12 = vector.shape_cast %11 : vector<1x12x4xbf16> to vector<12x4xbf16>
    %cst_5 = arith.constant dense<0.000000e+00> : vector<256x4xf32>
    %13 = tpu.matmul %10, %12, %cst_5 {dimension_numbers = #tpu.dot_dimension_numbers<[1], [0], [0], [1], [0, 0, 1, 1], [], []>} : vector<256x12xbf16>, vector<12x4xbf16>, vector<256x4xf32> -> vector<256x4xf32>
    %14 = arith.addf %8, %13 : vector<256x4xf32>
    %15 = vector.extract_strided_slice %7 {offsets = [0, 1, 0], sizes = [16, 16, 12], strides = [1, 1, 1]} : vector<16x18x12xbf16> to vector<16x16x12xbf16>
    %16 = vector.shape_cast %15 : vector<16x16x12xbf16> to vector<256x12xbf16>
    %c1 = arith.constant 1 : index
    %c0_6 = arith.constant 0 : index
    %c0_7 = arith.constant 0 : index
    %17 = vector.load %arg3[%c1, %c0_6, %c0_7] : memref<3x12x4xbf16, #tpu.memory_space<vmem>>, vector<1x12x4xbf16>
    %18 = vector.shape_cast %17 : vector<1x12x4xbf16> to vector<12x4xbf16>
    %cst_8 = arith.constant dense<0.000000e+00> : vector<256x4xf32>
    %19 = tpu.matmul %16, %18, %cst_8 {dimension_numbers = #tpu.dot_dimension_numbers<[1], [0], [0], [1], [0, 0, 1, 1], [], []>} : vector<256x12xbf16>, vector<12x4xbf16>, vector<256x4xf32> -> vector<256x4xf32>
    %20 = arith.addf %14, %19 : vector<256x4xf32>
    %21 = vector.extract_strided_slice %7 {offsets = [0, 2, 0], sizes = [16, 16, 12], strides = [1, 1, 1]} : vector<16x18x12xbf16> to vector<16x16x12xbf16>
    %22 = vector.shape_cast %21 : vector<16x16x12xbf16> to vector<256x12xbf16>
    %c2 = arith.constant 2 : index
    %c0_9 = arith.constant 0 : index
    %c0_10 = arith.constant 0 : index
    %23 = vector.load %arg3[%c2, %c0_9, %c0_10] : memref<3x12x4xbf16, #tpu.memory_space<vmem>>, vector<1x12x4xbf16>
    %24 = vector.shape_cast %23 : vector<1x12x4xbf16> to vector<12x4xbf16>
    %cst_11 = arith.constant dense<0.000000e+00> : vector<256x4xf32>
    %25 = tpu.matmul %22, %24, %cst_11 {dimension_numbers = #tpu.dot_dimension_numbers<[1], [0], [0], [1], [0, 0, 1, 1], [], []>} : vector<256x12xbf16>, vector<12x4xbf16>, vector<256x4xf32> -> vector<256x4xf32>
    %26 = arith.addf %20, %25 : vector<256x4xf32>
    %c0_12 = arith.constant 0 : index
    %c0_13 = arith.constant 0 : index
    %27 = vector.load %arg4[%c0_12, %c0_13] : memref<1x4xf32, #tpu.memory_space<vmem>>, vector<1x4xf32>
    %28 = vector.broadcast %27 : vector<1x4xf32> to vector<256x4xf32>
    %29 = arith.mulf %26, %28 : vector<256x4xf32>
    %c0_14 = arith.constant 0 : index
    %c0_15 = arith.constant 0 : index
    %30 = vector.load %arg5[%c0_14, %c0_15] : memref<1x4xf32, #tpu.memory_space<vmem>>, vector<1x4xf32>
    %31 = vector.broadcast %30 : vector<1x4xf32> to vector<256x4xf32>
    %32 = arith.addf %29, %31 : vector<256x4xf32>
    %cst_16 = arith.constant 0.000000e+00 : f32
    %33 = vector.broadcast %cst_16 : f32 to vector<256x4xf32>
    %34 = arith.maximumf %32, %33 : vector<256x4xf32>
    %35 = vector.shape_cast %34 : vector<256x4xf32> to vector<16x16x4xf32>
    %36 = arith.truncf %35 : vector<16x16x4xf32> to vector<16x16x4xbf16>
    %c0_17 = arith.constant 0 : index
    %c0_18 = arith.constant 0 : index
    %c0_19 = arith.constant 0 : index
    %c0_20 = arith.constant 0 : index
    %37 = vector.load %arg6[%c0_17, %c0_18, %c0_19, %c0_20] : memref<1x16x16x4xbf16, #tpu.memory_space<vmem>>, vector<1x16x16x4xbf16>
    %38 = vector.shape_cast %37 : vector<1x16x16x4xbf16> to vector<16x16x4xbf16>
    %39 = vector.shape_cast %36 : vector<16x16x4xbf16> to vector<1x16x16x4xbf16>
    tpu.vector_store %arg6[%c0_17, %c0_18, %c0_19, %c0_20], %39 {strides = array<i32>} : memref<1x16x16x4xbf16, #tpu.memory_space<vmem>>, vector<1x16x16x4xbf16>,
    return
  }
  func.func @transform_0(%arg0: i32, %arg1: i32) -> (i32, i32, i32, i32) {
    %c0_i32 = arith.constant 0 : i32
    %c0_i32_0 = arith.constant 0 : i32
    %c0_i32_1 = arith.constant 0 : i32
    %c0_i32_2 = arith.constant 0 : i32
    return %arg0, %c0_i32, %c0_i32_0, %c0_i32_1 : i32, i32, i32, i32
  }
  func.func @transform_1(%arg0: i32, %arg1: i32) -> (i32, i32, i32) {
    %c0_i32 = arith.constant 0 : i32
    %c0_i32_0 = arith.constant 0 : i32
    %c0_i32_1 = arith.constant 0 : i32
    %c0_i32_2 = arith.constant 0 : i32
    return %c0_i32, %c0_i32_0, %c0_i32_1 : i32, i32, i32
  }
  func.func @transform_2(%arg0: i32, %arg1: i32) -> (i32, i32) {
    %c0_i32 = arith.constant 0 : i32
    %c0_i32_0 = arith.constant 0 : i32
    %c0_i32_1 = arith.constant 0 : i32
    return %c0_i32, %c0_i32_0 : i32, i32
  }
  func.func @transform_3(%arg0: i32, %arg1: i32) -> (i32, i32) {
    %c0_i32 = arith.constant 0 : i32
    %c0_i32_0 = arith.constant 0 : i32
    %c0_i32_1 = arith.constant 0 : i32
    return %c0_i32, %c0_i32_0 : i32, i32
  }
  func.func @transform_4(%arg0: i32, %arg1: i32) -> (i32, i32, i32, i32) {
    %c0_i32 = arith.constant 0 : i32
    %c0_i32_0 = arith.constant 0 : i32
    %c0_i32_1 = arith.constant 0 : i32
    return %arg0, %arg1, %c0_i32, %c0_i32_0 : i32, i32, i32, i32
  }
}

module attributes {stable_mosaic.version = 11 : i64} {
  func.func @_conv3_bn_relu_add_id_kernel(%arg0: i32, %arg1: i32, %arg2: memref<512x4xbf16, #tpu.memory_space<vmem>>, %arg3: memref<512x8xbf16, #tpu.memory_space<vmem>>, %arg4: memref<4x16xbf16, #tpu.memory_space<vmem>>, %arg5: memref<8x16xbf16, #tpu.memory_space<vmem>>, %arg6: memref<1x16xf32, #tpu.memory_space<vmem>>, %arg7: memref<1x16xf32, #tpu.memory_space<vmem>>, %arg8: memref<512x16xf32, #tpu.memory_space<vmem>>) attributes {dimension_semantics = [#tpu.dimension_semantics<parallel>, #tpu.dimension_semantics<parallel>], iteration_bounds = array<i64: 1, 1>, scalar_prefetch = 0 : i64, scratch_operands = 0 : i64, tpu.core_type = #tpu.core_type<tc>, window_params = [{transform_indices = @transform_0, window_bounds = array<i64: 512, 4>}, {transform_indices = @transform_1, window_bounds = array<i64: 512, 8>}, {transform_indices = @transform_2, window_bounds = array<i64: 4, 16>}, {transform_indices = @transform_3, window_bounds = array<i64: 8, 16>}, {transform_indices = @transform_4, window_bounds = array<i64: 1, 16>}, {transform_indices = @transform_5, window_bounds = array<i64: 1, 16>}, {transform_indices = @transform_6, window_bounds = array<i64: 512, 16>}]} {
    %c0 = arith.constant 0 : index
    %c0_0 = arith.constant 0 : index
    %0 = vector.load %arg2[%c0, %c0_0] : memref<512x4xbf16, #tpu.memory_space<vmem>>, vector<512x4xbf16>
    %c0_1 = arith.constant 0 : index
    %c0_2 = arith.constant 0 : index
    %1 = vector.load %arg4[%c0_1, %c0_2] : memref<4x16xbf16, #tpu.memory_space<vmem>>, vector<4x16xbf16>
    %cst = arith.constant dense<0.000000e+00> : vector<512x16xf32>
    %2 = tpu.matmul %0, %1, %cst {dimension_numbers = #tpu.dot_dimension_numbers<[1], [0], [0], [1], [0, 0, 1, 1], [], []>} : vector<512x4xbf16>, vector<4x16xbf16>, vector<512x16xf32> -> vector<512x16xf32>
    %c0_3 = arith.constant 0 : index
    %c0_4 = arith.constant 0 : index
    %3 = vector.load %arg6[%c0_3, %c0_4] : memref<1x16xf32, #tpu.memory_space<vmem>>, vector<1x16xf32>
    %4 = vector.broadcast %3 : vector<1x16xf32> to vector<512x16xf32>
    %5 = arith.mulf %2, %4 : vector<512x16xf32>
    %c0_5 = arith.constant 0 : index
    %c0_6 = arith.constant 0 : index
    %6 = vector.load %arg7[%c0_5, %c0_6] : memref<1x16xf32, #tpu.memory_space<vmem>>, vector<1x16xf32>
    %7 = vector.broadcast %6 : vector<1x16xf32> to vector<512x16xf32>
    %8 = arith.addf %5, %7 : vector<512x16xf32>
    %cst_7 = arith.constant 0.000000e+00 : f32
    %9 = vector.broadcast %cst_7 : f32 to vector<512x16xf32>
    %10 = arith.maximumf %8, %9 : vector<512x16xf32>
    %c0_8 = arith.constant 0 : index
    %c0_9 = arith.constant 0 : index
    %11 = vector.load %arg3[%c0_8, %c0_9] : memref<512x8xbf16, #tpu.memory_space<vmem>>, vector<512x8xbf16>
    %c0_10 = arith.constant 0 : index
    %c0_11 = arith.constant 0 : index
    %12 = vector.load %arg5[%c0_10, %c0_11] : memref<8x16xbf16, #tpu.memory_space<vmem>>, vector<8x16xbf16>
    %cst_12 = arith.constant dense<0.000000e+00> : vector<512x16xf32>
    %13 = tpu.matmul %11, %12, %cst_12 {dimension_numbers = #tpu.dot_dimension_numbers<[1], [0], [0], [1], [0, 0, 1, 1], [], []>} : vector<512x8xbf16>, vector<8x16xbf16>, vector<512x16xf32> -> vector<512x16xf32>
    %14 = arith.addf %10, %13 : vector<512x16xf32>
    %c0_13 = arith.constant 0 : index
    %c0_14 = arith.constant 0 : index
    %15 = vector.load %arg8[%c0_13, %c0_14] : memref<512x16xf32, #tpu.memory_space<vmem>>, vector<512x16xf32>
    tpu.vector_store %arg8[%c0_13, %c0_14], %14 {strides = array<i32>} : memref<512x16xf32, #tpu.memory_space<vmem>>, vector<512x16xf32>,
    return
  }
  func.func @transform_0(%arg0: i32, %arg1: i32) -> (i32, i32) {
    %c0_i32 = arith.constant 0 : i32
    %c0_i32_0 = arith.constant 0 : i32
    return %arg0, %c0_i32 : i32, i32
  }
  func.func @transform_1(%arg0: i32, %arg1: i32) -> (i32, i32) {
    %c0_i32 = arith.constant 0 : i32
    %c0_i32_0 = arith.constant 0 : i32
    return %arg0, %c0_i32 : i32, i32
  }
  func.func @transform_2(%arg0: i32, %arg1: i32) -> (i32, i32) {
    %c0_i32 = arith.constant 0 : i32
    %c0_i32_0 = arith.constant 0 : i32
    return %c0_i32, %arg1 : i32, i32
  }
  func.func @transform_3(%arg0: i32, %arg1: i32) -> (i32, i32) {
    %c0_i32 = arith.constant 0 : i32
    %c0_i32_0 = arith.constant 0 : i32
    return %c0_i32, %arg1 : i32, i32
  }
  func.func @transform_4(%arg0: i32, %arg1: i32) -> (i32, i32) {
    %c0_i32 = arith.constant 0 : i32
    %c0_i32_0 = arith.constant 0 : i32
    return %c0_i32, %arg1 : i32, i32
  }
  func.func @transform_5(%arg0: i32, %arg1: i32) -> (i32, i32) {
    %c0_i32 = arith.constant 0 : i32
    %c0_i32_0 = arith.constant 0 : i32
    return %c0_i32, %arg1 : i32, i32
  }
  func.func @transform_6(%arg0: i32, %arg1: i32) -> (i32, i32) {
    %c0_i32 = arith.constant 0 : i32
    return %arg0, %arg1 : i32, i32
  }
}

</mosaic_0001>

<llo_original>
// kernel: _lambda_.3
$region0: #{_lambda_.3}
  #allocation0 [shape = 'u32[]', space=smem, size = 0x4, offset = 0x4, fixed_abs, tag = 'smem constant byte address 0x4 - core index']
  #allocation1 [shape = 'u32[72,128]{1,0:T(1,128)}', space=vmem, size = 0x9000, scoped, tag = 'internal scratch']
  %s0 = inlined_call_operand.vmem [shape: bf16[512,8], index: 0, kind: input, shape index: {}]
  %s1 = inlined_call_operand.vmem [shape: bf16[8,4], index: 1, kind: input, shape index: {}]
  %s2 = inlined_call_operand.vmem [shape: f32[1,4], index: 2, kind: input, shape index: {}]
  %s3 = inlined_call_operand.vmem [shape: f32[1,4], index: 3, kind: input, shape index: {}]
  %s4 = inlined_call_operand.vmem [shape: bf16[512,4], index: 4, kind: output, shape index: {}]
  %s5 = sld [smem:[#allocation0]]
  $region26: #{_lambda_.3} parent=0
    _
  %s7 = ssub.s32 1, %s5
  %s8 = scalar_select 0, %s7, %s5
  // Predicated region
  $region2: #{_lambda_.3} parent=0 // pred_check
    _
  $region3: #{_lambda_.3} parent=0 // pred_check_branch
    %10 = sbr.rel (0) target = $region5
  $region4: #{_lambda_.3} parent=0 // pred_region
    _
  $region5: #{_lambda_.3} parent=0 // pred_fallthru
    _
  // Predicated region
  $region6: #{_lambda_.3} parent=0 // pred_check
    _
  $region7: #{_lambda_.3} parent=0 // pred_check_branch
    %12 = sbr.rel (0) target = $region9
  $region8: #{_lambda_.3} parent=0 // pred_region
    _
  $region9: #{_lambda_.3} parent=0 // pred_fallthru
    _
  // Predicated region
  $region10: #{_lambda_.3} parent=0 // pred_check
    _
  $region11: #{_lambda_.3} parent=0 // pred_check_branch
    %14 = sbr.rel (0) target = $region13
  $region12: #{_lambda_.3} parent=0 // pred_region
    _
  $region13: #{_lambda_.3} parent=0 // pred_fallthru
    _
  // Predicated region
  $region14: #{_lambda_.3} parent=0 // pred_check
    _
  $region15: #{_lambda_.3} parent=0 // pred_check_branch
    %16 = sbr.rel (0) target = $region17
  $region16: #{_lambda_.3} parent=0 // pred_region
    _
  $region17: #{_lambda_.3} parent=0 // pred_fallthru
    _
  %v18 = vld [vmem:[%s0] sm:$0xf]
  %v19 = vld [vmem:[%s0 + $0x4] sm:$0xf]
  %v20 = vld [vmem:[%s0 + $0x8] sm:$0xf]
  %v21 = vld [vmem:[%s0 + $0xc] sm:$0xf]
  %v22 = vld [vmem:[%s0 + $0x10] sm:$0xf]
  %v23 = vld [vmem:[%s0 + $0x14] sm:$0xf]
  %v24 = vld [vmem:[%s0 + $0x18] sm:$0xf]
  %v25 = vld [vmem:[%s0 + $0x1c] sm:$0xf]
  %v26 = vld [vmem:[%s0 + $0x20] sm:$0xf]
  %v27 = vld [vmem:[%s0 + $0x24] sm:$0xf]
  %v28 = vld [vmem:[%s0 + $0x28] sm:$0xf]
  %v29 = vld [vmem:[%s0 + $0x2c] sm:$0xf]
  %v30 = vld [vmem:[%s0 + $0x30] sm:$0xf]
  %v31 = vld [vmem:[%s0 + $0x34] sm:$0xf]
  %v32 = vld [vmem:[%s0 + $0x38] sm:$0xf]
  %v33 = vld [vmem:[%s0 + $0x3c] sm:$0xf]
  %v34 = vld [vmem:[%s0 + $0x40] sm:$0xf]
  %v35 = vld [vmem:[%s0 + $0x44] sm:$0xf]
  %v36 = vld [vmem:[%s0 + $0x48] sm:$0xf]
  %v37 = vld [vmem:[%s0 + $0x4c] sm:$0xf]
  %v38 = vld [vmem:[%s0 + $0x50] sm:$0xf]
  %v39 = vld [vmem:[%s0 + $0x54] sm:$0xf]
  %v40 = vld [vmem:[%s0 + $0x58] sm:$0xf]
  %v41 = vld [vmem:[%s0 + $0x5c] sm:$0xf]
  %v42 = vld [vmem:[%s0 + $0x60] sm:$0xf]
  %v43 = vld [vmem:[%s0 + $0x64] sm:$0xf]
  %v44 = vld [vmem:[%s0 + $0x68] sm:$0xf]
  %v45 = vld [vmem:[%s0 + $0x6c] sm:$0xf]
  %v46 = vld [vmem:[%s0 + $0x70] sm:$0xf]
  %v47 = vld [vmem:[%s0 + $0x74] sm:$0xf]
  %v48 = vld [vmem:[%s0 + $0x78] sm:$0xf]
  %v49 = vld [vmem:[%s0 + $0x7c] sm:$0xf]
  %v50 = vld [vmem:[%s0 + $0x80] sm:$0xf]
  %v51 = vld [vmem:[%s0 + $0x84] sm:$0xf]
  %v52 = vld [vmem:[%s0 + $0x88] sm:$0xf]
  %v53 = vld [vmem:[%s0 + $0x8c] sm:$0xf]
  %v54 = vld [vmem:[%s0 + $0x90] sm:$0xf]
  %v55 = vld [vmem:[%s0 + $0x94] sm:$0xf]
  %v56 = vld [vmem:[%s0 + $0x98] sm:$0xf]
  %v57 = vld [vmem:[%s0 + $0x9c] sm:$0xf]
  %v58 = vld [vmem:[%s0 + $0xa0] sm:$0xf]
  %v59 = vld [vmem:[%s0 + $0xa4] sm:$0xf]
  %v60 = vld [vmem:[%s0 + $0xa8] sm:$0xf]
  %v61 = vld [vmem:[%s0 + $0xac] sm:$0xf]
  %v62 = vld [vmem:[%s0 + $0xb0] sm:$0xf]
  %v63 = vld [vmem:[%s0 + $0xb4] sm:$0xf]
  %v64 = vld [vmem:[%s0 + $0xb8] sm:$0xf]
  %v65 = vld [vmem:[%s0 + $0xbc] sm:$0xf]
  %v66 = vld [vmem:[%s0 + $0xc0] sm:$0xf]
  %v67 = vld [vmem:[%s0 + $0xc4] sm:$0xf]
  %v68 = vld [vmem:[%s0 + $0xc8] sm:$0xf]
  %v69 = vld [vmem:[%s0 + $0xcc] sm:$0xf]
  %v70 = vld [vmem:[%s0 + $0xd0] sm:$0xf]
  %v71 = vld [vmem:[%s0 + $0xd4] sm:$0xf]
  %v72 = vld [vmem:[%s0 + $0xd8] sm:$0xf]
  %v73 = vld [vmem:[%s0 + $0xdc] sm:$0xf]
  %v74 = vld [vmem:[%s0 + $0xe0] sm:$0xf]
  %v75 = vld [vmem:[%s0 + $0xe4] sm:$0xf]
  %v76 = vld [vmem:[%s0 + $0xe8] sm:$0xf]
  %v77 = vld [vmem:[%s0 + $0xec] sm:$0xf]
  %v78 = vld [vmem:[%s0 + $0xf0] sm:$0xf]
  %v79 = vld [vmem:[%s0 + $0xf4] sm:$0xf]
  %v80 = vld [vmem:[%s0 + $0xf8] sm:$0xf]
  %v81 = vld [vmem:[%s0 + $0xfc] sm:$0xf]
  %v82 = vld [vmem:[%s1] sm:$0xf]
  %v147 = vunpack.c.l.b16 %v18
  %v148 = vunpack.c.l.b16 %v19
  %v149 = vunpack.c.l.b16 %v20
  %v150 = vunpack.c.l.b16 %v21
  %v151 = vunpack.c.l.b16 %v22
  %v152 = vunpack.c.l.b16 %v23
  %v153 = vunpack.c.l.b16 %v24
  %v154 = vunpack.c.l.b16 %v25
  %v155 = vunpack.c.l.b16 %v26
  %v156 = vunpack.c.l.b16 %v27
  %v157 = vunpack.c.l.b16 %v28
  %v158 = vunpack.c.l.b16 %v29
  %v159 = vunpack.c.l.b16 %v30
  %v160 = vunpack.c.l.b16 %v31
  %v161 = vunpack.c.l.b16 %v32
  %v162 = vunpack.c.l.b16 %v33
  %v163 = vunpack.c.l.b16 %v34
  %v164 = vunpack.c.l.b16 %v35
  %v165 = vunpack.c.l.b16 %v36
  %v166 = vunpack.c.l.b16 %v37
  %v167 = vunpack.c.l.b16 %v38
  %v168 = vunpack.c.l.b16 %v39
  %v169 = vunpack.c.l.b16 %v40
  %v170 = vunpack.c.l.b16 %v41
  %v171 = vunpack.c.l.b16 %v42
  %v172 = vunpack.c.l.b16 %v43
  %v173 = vunpack.c.l.b16 %v44
  %v174 = vunpack.c.l.b16 %v45
  %v175 = vunpack.c.l.b16 %v46
  %v176 = vunpack.c.l.b16 %v47
  %v177 = vunpack.c.l.b16 %v48
  %v178 = vunpack.c.l.b16 %v49
  %v179 = vunpack.c.l.b16 %v50
  %v180 = vunpack.c.l.b16 %v51
  %v181 = vunpack.c.l.b16 %v52
  %v182 = vunpack.c.l.b16 %v53
  %v183 = vunpack.c.l.b16 %v54
  %v184 = vunpack.c.l.b16 %v55
  %v185 = vunpack.c.l.b16 %v56
  %v186 = vunpack.c.l.b16 %v57
  %v187 = vunpack.c.l.b16 %v58
  %v188 = vunpack.c.l.b16 %v59
  %v189 = vunpack.c.l.b16 %v60
  %v190 = vunpack.c.l.b16 %v61
  %v191 = vunpack.c.l.b16 %v62
  %v192 = vunpack.c.l.b16 %v63
  %v193 = vunpack.c.l.b16 %v64
  %v194 = vunpack.c.l.b16 %v65
  %v195 = vunpack.c.l.b16 %v66
  %v196 = vunpack.c.l.b16 %v67
  %v197 = vunpack.c.l.b16 %v68
  %v198 = vunpack.c.l.b16 %v69
  %v199 = vunpack.c.l.b16 %v70
  %v200 = vunpack.c.l.b16 %v71
  %v201 = vunpack.c.l.b16 %v72
  %v202 = vunpack.c.l.b16 %v73
  %v203 = vunpack.c.l.b16 %v74
  %v204 = vunpack.c.l.b16 %v75
  %v205 = vunpack.c.l.b16 %v76
  %v206 = vunpack.c.l.b16 %v77
  %v207 = vunpack.c.l.b16 %v78
  %v208 = vunpack.c.l.b16 %v79
  %v209 = vunpack.c.l.b16 %v80
  %v210 = vunpack.c.l.b16 %v81
  %v211 = vpack.c.b16 %v148, %v147
  %v212 = vpack.c.b16 %v150, %v149
  %v213 = vpack.c.b16 %v152, %v151
  %v214 = vpack.c.b16 %v154, %v153
  %v215 = vpack.c.b16 %v156, %v155
  %v216 = vpack.c.b16 %v158, %v157
  %v217 = vpack.c.b16 %v160, %v159
  %v218 = vpack.c.b16 %v162, %v161
  %v219 = vpack.c.b16 %v164, %v163
  %v220 = vpack.c.b16 %v166, %v165
  %v221 = vpack.c.b16 %v168, %v167
  %v222 = vpack.c.b16 %v170, %v169
  %v223 = vpack.c.b16 %v172, %v171
  %v224 = vpack.c.b16 %v174, %v173
  %v225 = vpack.c.b16 %v176, %v175
  %v226 = vpack.c.b16 %v178, %v177
  %v227 = vpack.c.b16 %v180, %v179
  %v228 = vpack.c.b16 %v182, %v181
  %v229 = vpack.c.b16 %v184, %v183
  %v230 = vpack.c.b16 %v186, %v185
  %v231 = vpack.c.b16 %v188, %v187
  %v232 = vpack.c.b16 %v190, %v189
  %v233 = vpack.c.b16 %v192, %v191
  %v234 = vpack.c.b16 %v194, %v193
  %v235 = vpack.c.b16 %v196, %v195
  %v236 = vpack.c.b16 %v198, %v197
  %v237 = vpack.c.b16 %v200, %v199
  %v238 = vpack.c.b16 %v202, %v201
  %v239 = vpack.c.b16 %v204, %v203
  %v240 = vpack.c.b16 %v206, %v205
  %v241 = vpack.c.b16 %v208, %v207
  %v242 = vpack.c.b16 %v210, %v209
  %vm243 = vcmask 64512
  %v245 = vsel %vm243, %v211, 0
  %v248 = vsel %vm243, %v212, 0
  %v251 = vsel %vm243, %v213, 0
  %v254 = vsel %vm243, %v214, 0
  %v257 = vsel %vm243, %v215, 0
  %v260 = vsel %vm243, %v216, 0
  %v263 = vsel %vm243, %v217, 0
  %v266 = vsel %vm243, %v218, 0
  %v269 = vsel %vm243, %v219, 0
  %v272 = vsel %vm243, %v220, 0
  %v275 = vsel %vm243, %v221, 0
  %v278 = vsel %vm243, %v222, 0
  %v281 = vsel %vm243, %v223, 0
  %v284 = vsel %vm243, %v224, 0
  %v287 = vsel %vm243, %v225, 0
  %v290 = vsel %vm243, %v226, 0
  %v293 = vsel %vm243, %v227, 0
  %v296 = vsel %vm243, %v228, 0
  %v299 = vsel %vm243, %v229, 0
  %v302 = vsel %vm243, %v230, 0
  %v305 = vsel %vm243, %v231, 0
  %v308 = vsel %vm243, %v232, 0
  %v311 = vsel %vm243, %v233, 0
  %v314 = vsel %vm243, %v234, 0
  %v317 = vsel %vm243, %v235, 0
  %v320 = vsel %vm243, %v236, 0
  %v323 = vsel %vm243, %v237, 0
  %v326 = vsel %vm243, %v238, 0
  %v329 = vsel %vm243, %v239, 0
  %v332 = vsel %vm243, %v240, 0
  %v335 = vsel %vm243, %v241, 0
  %v338 = vsel %vm243, %v242, 0
  %vm340 = vcmask 1043456
  %v342 = vsel %vm340, %v82, 0
  %344 = vmatpush.bf16.msra.mxu0 0
  %345 = vmatpush.bf16.msra.mxu0 0
  %346 = vmatpush.bf16.msra.mxu0 0
  %347 = vmatpush.bf16.msra.mxu0 0
  %348 = vmatpush.bf16.msra.mxu0 0
  %349 = vmatpush.bf16.msra.mxu0 0
  %350 = vmatpush.bf16.msra.mxu0 0
  %351 = vmatpush.bf16.msra.mxu0 %v342
  %352 = vmatmul.bf16.gmra.mxu0 %v245
  %v353 = vpop.f32.mrf.mxu0
  %v354 = vadd.f32 0.0, %v353
  %v355 = vpop.f32.mrf.mxu0
  %v356 = vadd.f32 0.0, %v355
  %357 = vmatmul.bf16.gmra.mxu0 %v248
  %v358 = vpop.f32.mrf.mxu0
  %v359 = vadd.f32 0.0, %v358
  %v360 = vpop.f32.mrf.mxu0
  %v361 = vadd.f32 0.0, %v360
  %362 = vmatmul.bf16.gmra.mxu0 %v251
  %v363 = vpop.f32.mrf.mxu0
  %v364 = vadd.f32 0.0, %v363
  %v365 = vpop.f32.mrf.mxu0
  %v366 = vadd.f32 0.0, %v365
  %367 = vmatmul.bf16.gmra.mxu0 %v254
  %v368 = vpop.f32.mrf.mxu0
  %v369 = vadd.f32 0.0, %v368
  %v370 = vpop.f32.mrf.mxu0
  %v371 = vadd.f32 0.0, %v370
  %372 = vmatmul.bf16.gmra.mxu0 %v257
  %v373 = vpop.f32.mrf.mxu0
  %v374 = vadd.f32 0.0, %v373
  %v375 = vpop.f32.mrf.mxu0
  %v376 = vadd.f32 0.0, %v375
  %377 = vmatmul.bf16.gmra.mxu0 %v260
  %v378 = vpop.f32.mrf.mxu0
  %v379 = vadd.f32 0.0, %v378
  %v380 = vpop.f32.mrf.mxu0
  %v381 = vadd.f32 0.0, %v380
  %382 = vmatmul.bf16.gmra.mxu0 %v263
  %v383 = vpop.f32.mrf.mxu0
  %v384 = vadd.f32 0.0, %v383
  %v385 = vpop.f32.mrf.mxu0
  %v386 = vadd.f32 0.0, %v385
  %387 = vmatmul.bf16.gmra.mxu0 %v266
  %v388 = vpop.f32.mrf.mxu0
  %v389 = vadd.f32 0.0, %v388
  %v390 = vpop.f32.mrf.mxu0
  %v391 = vadd.f32 0.0, %v390
  %392 = vmatmul.bf16.gmra.mxu0 %v269
  %v393 = vpop.f32.mrf.mxu0
  %v394 = vadd.f32 0.0, %v393
  %v395 = vpop.f32.mrf.mxu0
  %v396 = vadd.f32 0.0, %v395
  %397 = vmatmul.bf16.gmra.mxu0 %v272
  %v398 = vpop.f32.mrf.mxu0
  %v399 = vadd.f32 0.0, %v398
  %v400 = vpop.f32.mrf.mxu0
  %v401 = vadd.f32 0.0, %v400
  %402 = vmatmul.bf16.gmra.mxu0 %v275
  %v403 = vpop.f32.mrf.mxu0
  %v404 = vadd.f32 0.0, %v403
  %v405 = vpop.f32.mrf.mxu0
  %v406 = vadd.f32 0.0, %v405
  %407 = vmatmul.bf16.gmra.mxu0 %v278
  %v408 = vpop.f32.mrf.mxu0
  %v409 = vadd.f32 0.0, %v408
  %v410 = vpop.f32.mrf.mxu0
  %v411 = vadd.f32 0.0, %v410
  %412 = vmatmul.bf16.gmra.mxu0 %v281
  %v413 = vpop.f32.mrf.mxu0
  %v414 = vadd.f32 0.0, %v413
  %v415 = vpop.f32.mrf.mxu0
  %v416 = vadd.f32 0.0, %v415
  %417 = vmatmul.bf16.gmra.mxu0 %v284
  %v418 = vpop.f32.mrf.mxu0
  %v419 = vadd.f32 0.0, %v418
  %v420 = vpop.f32.mrf.mxu0
  %v421 = vadd.f32 0.0, %v420
  %422 = vmatmul.bf16.gmra.mxu0 %v287
  %v423 = vpop.f32.mrf.mxu0
  %v424 = vadd.f32 0.0, %v423
  %v425 = vpop.f32.mrf.mxu0
  %v426 = vadd.f32 0.0, %v425
  %427 = vmatmul.bf16.gmra.mxu0 %v290
  %v428 = vpop.f32.mrf.mxu0
  %v429 = vadd.f32 0.0, %v428
  %v430 = vpop.f32.mrf.mxu0
  %v431 = vadd.f32 0.0, %v430
  %432 = vmatmul.bf16.gmra.mxu0 %v293
  %v433 = vpop.f32.mrf.mxu0
  %v434 = vadd.f32 0.0, %v433
  %v435 = vpop.f32.mrf.mxu0
  %v436 = vadd.f32 0.0, %v435
  %437 = vmatmul.bf16.gmra.mxu0 %v296
  %v438 = vpop.f32.mrf.mxu0
  %v439 = vadd.f32 0.0, %v438
  %v440 = vpop.f32.mrf.mxu0
  %v441 = vadd.f32 0.0, %v440
  %442 = vmatmul.bf16.gmra.mxu0 %v299
  %v443 = vpop.f32.mrf.mxu0
  %v444 = vadd.f32 0.0, %v443
  %v445 = vpop.f32.mrf.mxu0
  %v446 = vadd.f32 0.0, %v445
  %447 = vmatmul.bf16.gmra.mxu0 %v302
  %v448 = vpop.f32.mrf.mxu0
  %v449 = vadd.f32 0.0, %v448
  %v450 = vpop.f32.mrf.mxu0
  %v451 = vadd.f32 0.0, %v450
  %452 = vmatmul.bf16.gmra.mxu0 %v305
  %v453 = vpop.f32.mrf.mxu0
  %v454 = vadd.f32 0.0, %v453
  %v455 = vpop.f32.mrf.mxu0
  %v456 = vadd.f32 0.0, %v455
  %457 = vmatmul.bf16.gmra.mxu0 %v308
  %v458 = vpop.f32.mrf.mxu0
  %v459 = vadd.f32 0.0, %v458
  %v460 = vpop.f32.mrf.mxu0
  %v461 = vadd.f32 0.0, %v460
  %462 = vmatmul.bf16.gmra.mxu0 %v311
  %v463 = vpop.f32.mrf.mxu0
  %v464 = vadd.f32 0.0, %v463
  %v465 = vpop.f32.mrf.mxu0
  %v466 = vadd.f32 0.0, %v465
  %467 = vmatmul.bf16.gmra.mxu0 %v314
  %v468 = vpop.f32.mrf.mxu0
  %v469 = vadd.f32 0.0, %v468
  %v470 = vpop.f32.mrf.mxu0
  %v471 = vadd.f32 0.0, %v470
  %472 = vmatmul.bf16.gmra.mxu0 %v317
  %v473 = vpop.f32.mrf.mxu0
  %v474 = vadd.f32 0.0, %v473
  %v475 = vpop.f32.mrf.mxu0
  %v476 = vadd.f32 0.0, %v475
  %477 = vmatmul.bf16.gmra.mxu0 %v320
  %v478 = vpop.f32.mrf.mxu0
  %v479 = vadd.f32 0.0, %v478
  %v480 = vpop.f32.mrf.mxu0
  %v481 = vadd.f32 0.0, %v480
  %482 = vmatmul.bf16.gmra.mxu0 %v323
  %v483 = vpop.f32.mrf.mxu0
  %v484 = vadd.f32 0.0, %v483
  %v485 = vpop.f32.mrf.mxu0
  %v486 = vadd.f32 0.0, %v485
  %487 = vmatmul.bf16.gmra.mxu0 %v326
  %v488 = vpop.f32.mrf.mxu0
  %v489 = vadd.f32 0.0, %v488
  %v490 = vpop.f32.mrf.mxu0
  %v491 = vadd.f32 0.0, %v490
  %492 = vmatmul.bf16.gmra.mxu0 %v329
  %v493 = vpop.f32.mrf.mxu0
  %v494 = vadd.f32 0.0, %v493
  %v495 = vpop.f32.mrf.mxu0
  %v496 = vadd.f32 0.0, %v495
  %497 = vmatmul.bf16.gmra.mxu0 %v332
  %v498 = vpop.f32.mrf.mxu0
  %v499 = vadd.f32 0.0, %v498
  %v500 = vpop.f32.mrf.mxu0
  %v501 = vadd.f32 0.0, %v500
  %502 = vmatmul.bf16.gmra.mxu0 %v335
  %v503 = vpop.f32.mrf.mxu0
  %v504 = vadd.f32 0.0, %v503
  %v505 = vpop.f32.mrf.mxu0
  %v506 = vadd.f32 0.0, %v505
  %507 = vmatmul.bf16.gmra.mxu0 %v338
  %v508 = vpop.f32.mrf.mxu0
  %v509 = vadd.f32 0.0, %v508
  %v510 = vpop.f32.mrf.mxu0
  %v511 = vadd.f32 0.0, %v510
  %512 = vdwg.mxu0
  %v513 = vld [vmem:[%s2] sm:$0x1]
  %v515 = vperm.slane %v513, 0
  %v517 = vmul.f32 %v354, %v515
  %v518 = vmul.f32 %v356, %v515
  %v519 = vmul.f32 %v359, %v515
  %v520 = vmul.f32 %v361, %v515
  %v521 = vmul.f32 %v364, %v515
  %v522 = vmul.f32 %v366, %v515
  %v523 = vmul.f32 %v369, %v515
  %v524 = vmul.f32 %v371, %v515
  %v525 = vmul.f32 %v374, %v515
  %v526 = vmul.f32 %v376, %v515
  %v527 = vmul.f32 %v379, %v515
  %v528 = vmul.f32 %v381, %v515
  %v529 = vmul.f32 %v384, %v515
  %v530 = vmul.f32 %v386, %v515
  %v531 = vmul.f32 %v389, %v515
  %v532 = vmul.f32 %v391, %v515
  %v533 = vmul.f32 %v394, %v515
  %v534 = vmul.f32 %v396, %v515
  %v535 = vmul.f32 %v399, %v515
  %v536 = vmul.f32 %v401, %v515
  %v537 = vmul.f32 %v404, %v515
  %v538 = vmul.f32 %v406, %v515
  %v539 = vmul.f32 %v409, %v515
  %v540 = vmul.f32 %v411, %v515
  %v541 = vmul.f32 %v414, %v515
  %v542 = vmul.f32 %v416, %v515
  %v543 = vmul.f32 %v419, %v515
  %v544 = vmul.f32 %v421, %v515
  %v545 = vmul.f32 %v424, %v515
  %v546 = vmul.f32 %v426, %v515
  %v547 = vmul.f32 %v429, %v515
  %v548 = vmul.f32 %v431, %v515
  %v549 = vmul.f32 %v434, %v515
  %v550 = vmul.f32 %v436, %v515
  %v551 = vmul.f32 %v439, %v515
  %v552 = vmul.f32 %v441, %v515
  %v553 = vmul.f32 %v444, %v515
  %v554 = vmul.f32 %v446, %v515
  %v555 = vmul.f32 %v449, %v515
  %v556 = vmul.f32 %v451, %v515
  %v557 = vmul.f32 %v454, %v515
  %v558 = vmul.f32 %v456, %v515
  %v559 = vmul.f32 %v459, %v515
  %v560 = vmul.f32 %v461, %v515
  %v561 = vmul.f32 %v464, %v515
  %v562 = vmul.f32 %v466, %v515
  %v563 = vmul.f32 %v469, %v515
  %v564 = vmul.f32 %v471, %v515
  %v565 = vmul.f32 %v474, %v515
  %v566 = vmul.f32 %v476, %v515
  %v567 = vmul.f32 %v479, %v515
  %v568 = vmul.f32 %v481, %v515
  %v569 = vmul.f32 %v484, %v515
  %v570 = vmul.f32 %v486, %v515
  %v571 = vmul.f32 %v489, %v515
  %v572 = vmul.f32 %v491, %v515
  %v573 = vmul.f32 %v494, %v515
  %v574 = vmul.f32 %v496, %v515
  %v575 = vmul.f32 %v499, %v515
  %v576 = vmul.f32 %v501, %v515
  %v577 = vmul.f32 %v504, %v515
  %v578 = vmul.f32 %v506, %v515
  %v579 = vmul.f32 %v509, %v515
  %v580 = vmul.f32 %v511, %v515
  %v581 = vld [vmem:[%s3] sm:$0x1]
  %v583 = vperm.slane %v581, 0
  %v585 = vadd.f32 %v517, %v583
  %v586 = vadd.f32 %v518, %v583
  %v587 = vadd.f32 %v519, %v583
  %v588 = vadd.f32 %v520, %v583
  %v589 = vadd.f32 %v521, %v583
  %v590 = vadd.f32 %v522, %v583
  %v591 = vadd.f32 %v523, %v583
  %v592 = vadd.f32 %v524, %v583
  %v593 = vadd.f32 %v525, %v583
  %v594 = vadd.f32 %v526, %v583
  %v595 = vadd.f32 %v527, %v583
  %v596 = vadd.f32 %v528, %v583
  %v597 = vadd.f32 %v529, %v583
  %v598 = vadd.f32 %v530, %v583
  %v599 = vadd.f32 %v531, %v583
  %v600 = vadd.f32 %v532, %v583
  %v601 = vadd.f32 %v533, %v583
  %v602 = vadd.f32 %v534, %v583
  %v603 = vadd.f32 %v535, %v583
  %v604 = vadd.f32 %v536, %v583
  %v605 = vadd.f32 %v537, %v583
  %v606 = vadd.f32 %v538, %v583
  %v607 = vadd.f32 %v539, %v583
  %v608 = vadd.f32 %v540, %v583
  %v609 = vadd.f32 %v541, %v583
  %v610 = vadd.f32 %v542, %v583
  %v611 = vadd.f32 %v543, %v583
  %v612 = vadd.f32 %v544, %v583
  %v613 = vadd.f32 %v545, %v583
  %v614 = vadd.f32 %v546, %v583
  %v615 = vadd.f32 %v547, %v583
  %v616 = vadd.f32 %v548, %v583
  %v617 = vadd.f32 %v549, %v583
  %v618 = vadd.f32 %v550, %v583
  %v619 = vadd.f32 %v551, %v583
  %v620 = vadd.f32 %v552, %v583
  %v621 = vadd.f32 %v553, %v583
  %v622 = vadd.f32 %v554, %v583
  %v623 = vadd.f32 %v555, %v583
  %v624 = vadd.f32 %v556, %v583
  %v625 = vadd.f32 %v557, %v583
  %v626 = vadd.f32 %v558, %v583
  %v627 = vadd.f32 %v559, %v583
  %v628 = vadd.f32 %v560, %v583
  %v629 = vadd.f32 %v561, %v583
  %v630 = vadd.f32 %v562, %v583
  %v631 = vadd.f32 %v563, %v583
  %v632 = vadd.f32 %v564, %v583
  %v633 = vadd.f32 %v565, %v583
  %v634 = vadd.f32 %v566, %v583
  %v635 = vadd.f32 %v567, %v583
  %v636 = vadd.f32 %v568, %v583
  %v637 = vadd.f32 %v569, %v583
  %v638 = vadd.f32 %v570, %v583
  %v639 = vadd.f32 %v571, %v583
  %v640 = vadd.f32 %v572, %v583
  %v641 = vadd.f32 %v573, %v583
  %v642 = vadd.f32 %v574, %v583
  %v643 = vadd.f32 %v575, %v583
  %v644 = vadd.f32 %v576, %v583
  %v645 = vadd.f32 %v577, %v583
  %v646 = vadd.f32 %v578, %v583
  %v647 = vadd.f32 %v579, %v583
  %v648 = vadd.f32 %v580, %v583
  %v649 = vmax.f32 %v585, 0.0
  %v650 = vmax.f32 %v586, 0.0
  %v651 = vmax.f32 %v587, 0.0
  %v652 = vmax.f32 %v588, 0.0
  %v653 = vmax.f32 %v589, 0.0
  %v654 = vmax.f32 %v590, 0.0
  %v655 = vmax.f32 %v591, 0.0
  %v656 = vmax.f32 %v592, 0.0
  %v657 = vmax.f32 %v593, 0.0
  %v658 = vmax.f32 %v594, 0.0
  %v659 = vmax.f32 %v595, 0.0
  %v660 = vmax.f32 %v596, 0.0
  %v661 = vmax.f32 %v597, 0.0
  %v662 = vmax.f32 %v598, 0.0
  %v663 = vmax.f32 %v599, 0.0
  %v664 = vmax.f32 %v600, 0.0
  %v665 = vmax.f32 %v601, 0.0
  %v666 = vmax.f32 %v602, 0.0
  %v667 = vmax.f32 %v603, 0.0
  %v668 = vmax.f32 %v604, 0.0
  %v669 = vmax.f32 %v605, 0.0
  %v670 = vmax.f32 %v606, 0.0
  %v671 = vmax.f32 %v607, 0.0
  %v672 = vmax.f32 %v608, 0.0
  %v673 = vmax.f32 %v609, 0.0
  %v674 = vmax.f32 %v610, 0.0
  %v675 = vmax.f32 %v611, 0.0
  %v676 = vmax.f32 %v612, 0.0
  %v677 = vmax.f32 %v613, 0.0
  %v678 = vmax.f32 %v614, 0.0
  %v679 = vmax.f32 %v615, 0.0
  %v680 = vmax.f32 %v616, 0.0
  %v681 = vmax.f32 %v617, 0.0
  %v682 = vmax.f32 %v618, 0.0
  %v683 = vmax.f32 %v619, 0.0
  %v684 = vmax.f32 %v620, 0.0
  %v685 = vmax.f32 %v621, 0.0
  %v686 = vmax.f32 %v622, 0.0
  %v687 = vmax.f32 %v623, 0.0
  %v688 = vmax.f32 %v624, 0.0
  %v689 = vmax.f32 %v625, 0.0
  %v690 = vmax.f32 %v626, 0.0
  %v691 = vmax.f32 %v627, 0.0
  %v692 = vmax.f32 %v628, 0.0
  %v693 = vmax.f32 %v629, 0.0
  %v694 = vmax.f32 %v630, 0.0
  %v695 = vmax.f32 %v631, 0.0
  %v696 = vmax.f32 %v632, 0.0
  %v697 = vmax.f32 %v633, 0.0
  %v698 = vmax.f32 %v634, 0.0
  %v699 = vmax.f32 %v635, 0.0
  %v700 = vmax.f32 %v636, 0.0
  %v701 = vmax.f32 %v637, 0.0
  %v702 = vmax.f32 %v638, 0.0
  %v703 = vmax.f32 %v639, 0.0
  %v704 = vmax.f32 %v640, 0.0
  %v705 = vmax.f32 %v641, 0.0
  %v706 = vmax.f32 %v642, 0.0
  %v707 = vmax.f32 %v643, 0.0
  %v708 = vmax.f32 %v644, 0.0
  %v709 = vmax.f32 %v645, 0.0
  %v710 = vmax.f32 %v646, 0.0
  %v711 = vmax.f32 %v647, 0.0
  %v712 = vmax.f32 %v648, 0.0
  %v713 = vpack.c.bf16 %v649, %v649
  %v714 = vpack.c.bf16 %v650, %v650
  %v715 = vpack.c.bf16 %v651, %v651
  %v716 = vpack.c.bf16 %v652, %v652
  %v717 = vpack.c.bf16 %v653, %v653
  %v718 = vpack.c.bf16 %v654, %v654
  %v719 = vpack.c.bf16 %v655, %v655
  %v720 = vpack.c.bf16 %v656, %v656
  %v721 = vpack.c.bf16 %v657, %v657
  %v722 = vpack.c.bf16 %v658, %v658
  %v723 = vpack.c.bf16 %v659, %v659
  %v724 = vpack.c.bf16 %v660, %v660
  %v725 = vpack.c.bf16 %v661, %v661
  %v726 = vpack.c.bf16 %v662, %v662
  %v727 = vpack.c.bf16 %v663, %v663
  %v728 = vpack.c.bf16 %v664, %v664
  %v729 = vpack.c.bf16 %v665, %v665
  %v730 = vpack.c.bf16 %v666, %v666
  %v731 = vpack.c.bf16 %v667, %v667
  %v732 = vpack.c.bf16 %v668, %v668
  %v733 = vpack.c.bf16 %v669, %v669
  %v734 = vpack.c.bf16 %v670, %v670
  %v735 = vpack.c.bf16 %v671, %v671
  %v736 = vpack.c.bf16 %v672, %v672
  %v737 = vpack.c.bf16 %v673, %v673
  %v738 = vpack.c.bf16 %v674, %v674
  %v739 = vpack.c.bf16 %v675, %v675
  %v740 = vpack.c.bf16 %v676, %v676
  %v741 = vpack.c.bf16 %v677, %v677
  %v742 = vpack.c.bf16 %v678, %v678
  %v743 = vpack.c.bf16 %v679, %v679
  %v744 = vpack.c.bf16 %v680, %v680
  %v745 = vpack.c.bf16 %v681, %v681
  %v746 = vpack.c.bf16 %v682, %v682
  %v747 = vpack.c.bf16 %v683, %v683
  %v748 = vpack.c.bf16 %v684, %v684
  %v749 = vpack.c.bf16 %v685, %v685
  %v750 = vpack.c.bf16 %v686, %v686
  %v751 = vpack.c.bf16 %v687, %v687
  %v752 = vpack.c.bf16 %v688, %v688
  %v753 = vpack.c.bf16 %v689, %v689
  %v754 = vpack.c.bf16 %v690, %v690
  %v755 = vpack.c.bf16 %v691, %v691
  %v756 = vpack.c.bf16 %v692, %v692
  %v757 = vpack.c.bf16 %v693, %v693
  %v758 = vpack.c.bf16 %v694, %v694
  %v759 = vpack.c.bf16 %v695, %v695
  %v760 = vpack.c.bf16 %v696, %v696
  %v761 = vpack.c.bf16 %v697, %v697
  %v762 = vpack.c.bf16 %v698, %v698
  %v763 = vpack.c.bf16 %v699, %v699
  %v764 = vpack.c.bf16 %v700, %v700
  %v765 = vpack.c.bf16 %v701, %v701
  %v766 = vpack.c.bf16 %v702, %v702
  %v767 = vpack.c.bf16 %v703, %v703
  %v768 = vpack.c.bf16 %v704, %v704
  %v769 = vpack.c.bf16 %v705, %v705
  %v770 = vpack.c.bf16 %v706, %v706
  %v771 = vpack.c.bf16 %v707, %v707
  %v772 = vpack.c.bf16 %v708, %v708
  %v773 = vpack.c.bf16 %v709, %v709
  %v774 = vpack.c.bf16 %v710, %v710
  %v775 = vpack.c.bf16 %v711, %v711
  %v776 = vpack.c.bf16 %v712, %v712
  %vm777 = vcmask 27648
  %778 = vst.msk [vmem:[%s4] sm:$0xf] %vm777, %v713
  %779 = vst.msk [vmem:[%s4 + $0x4] sm:$0xf] %vm777, %v714
  %780 = vst.msk [vmem:[%s4 + $0x8] sm:$0xf] %vm777, %v715
  %781 = vst.msk [vmem:[%s4 + $0xc] sm:$0xf] %vm777, %v716
  %782 = vst.msk [vmem:[%s4 + $0x10] sm:$0xf] %vm777, %v717
  %783 = vst.msk [vmem:[%s4 + $0x14] sm:$0xf] %vm777, %v718
  %784 = vst.msk [vmem:[%s4 + $0x18] sm:$0xf] %vm777, %v719
  %785 = vst.msk [vmem:[%s4 + $0x1c] sm:$0xf] %vm777, %v720
  %786 = vst.msk [vmem:[%s4 + $0x20] sm:$0xf] %vm777, %v721
  %787 = vst.msk [vmem:[%s4 + $0x24] sm:$0xf] %vm777, %v722
  %788 = vst.msk [vmem:[%s4 + $0x28] sm:$0xf] %vm777, %v723
  %789 = vst.msk [vmem:[%s4 + $0x2c] sm:$0xf] %vm777, %v724
  %790 = vst.msk [vmem:[%s4 + $0x30] sm:$0xf] %vm777, %v725
  %791 = vst.msk [vmem:[%s4 + $0x34] sm:$0xf] %vm777, %v726
  %792 = vst.msk [vmem:[%s4 + $0x38] sm:$0xf] %vm777, %v727
  %793 = vst.msk [vmem:[%s4 + $0x3c] sm:$0xf] %vm777, %v728
  %794 = vst.msk [vmem:[%s4 + $0x40] sm:$0xf] %vm777, %v729
  %795 = vst.msk [vmem:[%s4 + $0x44] sm:$0xf] %vm777, %v730
  %796 = vst.msk [vmem:[%s4 + $0x48] sm:$0xf] %vm777, %v731
  %797 = vst.msk [vmem:[%s4 + $0x4c] sm:$0xf] %vm777, %v732
  %798 = vst.msk [vmem:[%s4 + $0x50] sm:$0xf] %vm777, %v733
  %799 = vst.msk [vmem:[%s4 + $0x54] sm:$0xf] %vm777, %v734
  %800 = vst.msk [vmem:[%s4 + $0x58] sm:$0xf] %vm777, %v735
  %801 = vst.msk [vmem:[%s4 + $0x5c] sm:$0xf] %vm777, %v736
  %802 = vst.msk [vmem:[%s4 + $0x60] sm:$0xf] %vm777, %v737
  %803 = vst.msk [vmem:[%s4 + $0x64] sm:$0xf] %vm777, %v738
  %804 = vst.msk [vmem:[%s4 + $0x68] sm:$0xf] %vm777, %v739
  %805 = vst.msk [vmem:[%s4 + $0x6c] sm:$0xf] %vm777, %v740
  %806 = vst.msk [vmem:[%s4 + $0x70] sm:$0xf] %vm777, %v741
  %807 = vst.msk [vmem:[%s4 + $0x74] sm:$0xf] %vm777, %v742
  %808 = vst.msk [vmem:[%s4 + $0x78] sm:$0xf] %vm777, %v743
  %809 = vst.msk [vmem:[%s4 + $0x7c] sm:$0xf] %vm777, %v744
  %810 = vst.msk [vmem:[%s4 + $0x80] sm:$0xf] %vm777, %v745
  %811 = vst.msk [vmem:[%s4 + $0x84] sm:$0xf] %vm777, %v746
  %812 = vst.msk [vmem:[%s4 + $0x88] sm:$0xf] %vm777, %v747
  %813 = vst.msk [vmem:[%s4 + $0x8c] sm:$0xf] %vm777, %v748
  %814 = vst.msk [vmem:[%s4 + $0x90] sm:$0xf] %vm777, %v749
  %815 = vst.msk [vmem:[%s4 + $0x94] sm:$0xf] %vm777, %v750
  %816 = vst.msk [vmem:[%s4 + $0x98] sm:$0xf] %vm777, %v751
  %817 = vst.msk [vmem:[%s4 + $0x9c] sm:$0xf] %vm777, %v752
  %818 = vst.msk [vmem:[%s4 + $0xa0] sm:$0xf] %vm777, %v753
  %819 = vst.msk [vmem:[%s4 + $0xa4] sm:$0xf] %vm777, %v754
  %820 = vst.msk [vmem:[%s4 + $0xa8] sm:$0xf] %vm777, %v755
  %821 = vst.msk [vmem:[%s4 + $0xac] sm:$0xf] %vm777, %v756
  %822 = vst.msk [vmem:[%s4 + $0xb0] sm:$0xf] %vm777, %v757
  %823 = vst.msk [vmem:[%s4 + $0xb4] sm:$0xf] %vm777, %v758
  %824 = vst.msk [vmem:[%s4 + $0xb8] sm:$0xf] %vm777, %v759
  %825 = vst.msk [vmem:[%s4 + $0xbc] sm:$0xf] %vm777, %v760
  %826 = vst.msk [vmem:[%s4 + $0xc0] sm:$0xf] %vm777, %v761
  %827 = vst.msk [vmem:[%s4 + $0xc4] sm:$0xf] %vm777, %v762
  %828 = vst.msk [vmem:[%s4 + $0xc8] sm:$0xf] %vm777, %v763
  %829 = vst.msk [vmem:[%s4 + $0xcc] sm:$0xf] %vm777, %v764
  %830 = vst.msk [vmem:[%s4 + $0xd0] sm:$0xf] %vm777, %v765
  %831 = vst.msk [vmem:[%s4 + $0xd4] sm:$0xf] %vm777, %v766
  %832 = vst.msk [vmem:[%s4 + $0xd8] sm:$0xf] %vm777, %v767
  %833 = vst.msk [vmem:[%s4 + $0xdc] sm:$0xf] %vm777, %v768
  %834 = vst.msk [vmem:[%s4 + $0xe0] sm:$0xf] %vm777, %v769
  %835 = vst.msk [vmem:[%s4 + $0xe4] sm:$0xf] %vm777, %v770
  %836 = vst.msk [vmem:[%s4 + $0xe8] sm:$0xf] %vm777, %v771
  %837 = vst.msk [vmem:[%s4 + $0xec] sm:$0xf] %vm777, %v772
  %838 = vst.msk [vmem:[%s4 + $0xf0] sm:$0xf] %vm777, %v773
  %839 = vst.msk [vmem:[%s4 + $0xf4] sm:$0xf] %vm777, %v774
  %840 = vst.msk [vmem:[%s4 + $0xf8] sm:$0xf] %vm777, %v775
  %841 = vst.msk [vmem:[%s4 + $0xfc] sm:$0xf] %vm777, %v776
  // Predicated region
  $region18: #{_lambda_.3} parent=0 // pred_check
    _
  $region19: #{_lambda_.3} parent=0 // pred_check_branch
    %843 = sbr.rel (0) target = $region21
  $region20: #{_lambda_.3} parent=0 // pred_region
    _
  $region21: #{_lambda_.3} parent=0 // pred_fallthru
    _
  // Predicated region
  $region22: #{_lambda_.3} parent=0 // pred_check
    _
  $region23: #{_lambda_.3} parent=0 // pred_check_branch
    %845 = sbr.rel (0) target = $region25
  $region24: #{_lambda_.3} parent=0 // pred_region
    _
  $region25: #{_lambda_.3} parent=0 // pred_fallthru
    _

// kernel: _lambda_.5
$region0: #{_lambda_.5}
  #allocation0 [shape = 'u32[]', space=smem, size = 0x4, offset = 0x4, fixed_abs, tag = 'smem constant byte address 0x4 - core index']
  #allocation1 [shape = 'u32[72,128]{1,0:T(1,128)}', space=vmem, size = 0x9000, scoped, tag = 'internal scratch']
  %s0 = inlined_call_operand.vmem [shape: bf16[512,4], index: 0, kind: input, shape index: {}]
  %s1 = inlined_call_operand.vmem [shape: bf16[512,8], index: 1, kind: input, shape index: {}]
  %s2 = inlined_call_operand.vmem [shape: bf16[4,16], index: 2, kind: input, shape index: {}]
  %s3 = inlined_call_operand.vmem [shape: bf16[8,16], index: 3, kind: input, shape index: {}]
  %s4 = inlined_call_operand.vmem [shape: f32[1,16], index: 4, kind: input, shape index: {}]
  %s5 = inlined_call_operand.vmem [shape: f32[1,16], index: 5, kind: input, shape index: {}]
  %s6 = inlined_call_operand.vmem [shape: f32[512,16], index: 6, kind: output, shape index: {}]
  %s7 = sld [smem:[#allocation0]]
  $region34: #{_lambda_.5} parent=0
    _
  %s9 = ssub.s32 1, %s7
  %s10 = scalar_select 0, %s9, %s7
  // Predicated region
  $region2: #{_lambda_.5} parent=0 // pred_check
    _
  $region3: #{_lambda_.5} parent=0 // pred_check_branch
    %12 = sbr.rel (0) target = $region5
  $region4: #{_lambda_.5} parent=0 // pred_region
    _
  $region5: #{_lambda_.5} parent=0 // pred_fallthru
    _
  // Predicated region
  $region6: #{_lambda_.5} parent=0 // pred_check
    _
  $region7: #{_lambda_.5} parent=0 // pred_check_branch
    %14 = sbr.rel (0) target = $region9
  $region8: #{_lambda_.5} parent=0 // pred_region
    _
  $region9: #{_lambda_.5} parent=0 // pred_fallthru
    _
  // Predicated region
  $region10: #{_lambda_.5} parent=0 // pred_check
    _
  $region11: #{_lambda_.5} parent=0 // pred_check_branch
    %16 = sbr.rel (0) target = $region13
  $region12: #{_lambda_.5} parent=0 // pred_region
    _
  $region13: #{_lambda_.5} parent=0 // pred_fallthru
    _
  // Predicated region
  $region14: #{_lambda_.5} parent=0 // pred_check
    _
  $region15: #{_lambda_.5} parent=0 // pred_check_branch
    %18 = sbr.rel (0) target = $region17
  $region16: #{_lambda_.5} parent=0 // pred_region
    _
  $region17: #{_lambda_.5} parent=0 // pred_fallthru
    _
  // Predicated region
  $region18: #{_lambda_.5} parent=0 // pred_check
    _
  $region19: #{_lambda_.5} parent=0 // pred_check_branch
    %20 = sbr.rel (0) target = $region21
  $region20: #{_lambda_.5} parent=0 // pred_region
    _
  $region21: #{_lambda_.5} parent=0 // pred_fallthru
    _
  // Predicated region
  $region22: #{_lambda_.5} parent=0 // pred_check
    _
  $region23: #{_lambda_.5} parent=0 // pred_check_branch
    %22 = sbr.rel (0) target = $region25
  $region24: #{_lambda_.5} parent=0 // pred_region
    _
  $region25: #{_lambda_.5} parent=0 // pred_fallthru
    _
  %v24 = vld [vmem:[%s0] sm:$0xf]
  %v25 = vld [vmem:[%s0 + $0x4] sm:$0xf]
  %v26 = vld [vmem:[%s0 + $0x8] sm:$0xf]
  %v27 = vld [vmem:[%s0 + $0xc] sm:$0xf]
  %v28 = vld [vmem:[%s0 + $0x10] sm:$0xf]
  %v29 = vld [vmem:[%s0 + $0x14] sm:$0xf]
  %v30 = vld [vmem:[%s0 + $0x18] sm:$0xf]
  %v31 = vld [vmem:[%s0 + $0x1c] sm:$0xf]
  %v32 = vld [vmem:[%s0 + $0x20] sm:$0xf]
  %v33 = vld [vmem:[%s0 + $0x24] sm:$0xf]
  %v34 = vld [vmem:[%s0 + $0x28] sm:$0xf]
  %v35 = vld [vmem:[%s0 + $0x2c] sm:$0xf]
  %v36 = vld [vmem:[%s0 + $0x30] sm:$0xf]
  %v37 = vld [vmem:[%s0 + $0x34] sm:$0xf]
  %v38 = vld [vmem:[%s0 + $0x38] sm:$0xf]
  %v39 = vld [vmem:[%s0 + $0x3c] sm:$0xf]
  %v40 = vld [vmem:[%s0 + $0x40] sm:$0xf]
  %v41 = vld [vmem:[%s0 + $0x44] sm:$0xf]
  %v42 = vld [vmem:[%s0 + $0x48] sm:$0xf]
  %v43 = vld [vmem:[%s0 + $0x4c] sm:$0xf]
  %v44 = vld [vmem:[%s0 + $0x50] sm:$0xf]
  %v45 = vld [vmem:[%s0 + $0x54] sm:$0xf]
  %v46 = vld [vmem:[%s0 + $0x58] sm:$0xf]
  %v47 = vld [vmem:[%s0 + $0x5c] sm:$0xf]
  %v48 = vld [vmem:[%s0 + $0x60] sm:$0xf]
  %v49 = vld [vmem:[%s0 + $0x64] sm:$0xf]
  %v50 = vld [vmem:[%s0 + $0x68] sm:$0xf]
  %v51 = vld [vmem:[%s0 + $0x6c] sm:$0xf]
  %v52 = vld [vmem:[%s0 + $0x70] sm:$0xf]
  %v53 = vld [vmem:[%s0 + $0x74] sm:$0xf]
  %v54 = vld [vmem:[%s0 + $0x78] sm:$0xf]
  %v55 = vld [vmem:[%s0 + $0x7c] sm:$0xf]
  %v56 = vld [vmem:[%s0 + $0x80] sm:$0xf]
  %v57 = vld [vmem:[%s0 + $0x84] sm:$0xf]
  %v58 = vld [vmem:[%s0 + $0x88] sm:$0xf]
  %v59 = vld [vmem:[%s0 + $0x8c] sm:$0xf]
  %v60 = vld [vmem:[%s0 + $0x90] sm:$0xf]
  %v61 = vld [vmem:[%s0 + $0x94] sm:$0xf]
  %v62 = vld [vmem:[%s0 + $0x98] sm:$0xf]
  %v63 = vld [vmem:[%s0 + $0x9c] sm:$0xf]
  %v64 = vld [vmem:[%s0 + $0xa0] sm:$0xf]
  %v65 = vld [vmem:[%s0 + $0xa4] sm:$0xf]
  %v66 = vld [vmem:[%s0 + $0xa8] sm:$0xf]
  %v67 = vld [vmem:[%s0 + $0xac] sm:$0xf]
  %v68 = vld [vmem:[%s0 + $0xb0] sm:$0xf]
  %v69 = vld [vmem:[%s0 + $0xb4] sm:$0xf]
  %v70 = vld [vmem:[%s0 + $0xb8] sm:$0xf]
  %v71 = vld [vmem:[%s0 + $0xbc] sm:$0xf]
  %v72 = vld [vmem:[%s0 + $0xc0] sm:$0xf]
  %v73 = vld [vmem:[%s0 + $0xc4] sm:$0xf]
  %v74 = vld [vmem:[%s0 + $0xc8] sm:$0xf]
  %v75 = vld [vmem:[%s0 + $0xcc] sm:$0xf]
  %v76 = vld [vmem:[%s0 + $0xd0] sm:$0xf]
  %v77 = vld [vmem:[%s0 + $0xd4] sm:$0xf]
  %v78 = vld [vmem:[%s0 + $0xd8] sm:$0xf]
  %v79 = vld [vmem:[%s0 + $0xdc] sm:$0xf]
  %v80 = vld [vmem:[%s0 + $0xe0] sm:$0xf]
  %v81 = vld [vmem:[%s0 + $0xe4] sm:$0xf]
  %v82 = vld [vmem:[%s0 + $0xe8] sm:$0xf]
  %v83 = vld [vmem:[%s0 + $0xec] sm:$0xf]
  %v84 = vld [vmem:[%s0 + $0xf0] sm:$0xf]
  %v85 = vld [vmem:[%s0 + $0xf4] sm:$0xf]
  %v86 = vld [vmem:[%s0 + $0xf8] sm:$0xf]
  %v87 = vld [vmem:[%s0 + $0xfc] sm:$0xf]
  %v88 = vld [vmem:[%s2] sm:$0x3]
  %v153 = vunpack.c.l.b16 %v24
  %v154 = vunpack.c.l.b16 %v25
  %v155 = vunpack.c.l.b16 %v26
  %v156 = vunpack.c.l.b16 %v27
  %v157 = vunpack.c.l.b16 %v28
  %v158 = vunpack.c.l.b16 %v29
  %v159 = vunpack.c.l.b16 %v30
  %v160 = vunpack.c.l.b16 %v31
  %v161 = vunpack.c.l.b16 %v32
  %v162 = vunpack.c.l.b16 %v33
  %v163 = vunpack.c.l.b16 %v34
  %v164 = vunpack.c.l.b16 %v35
  %v165 = vunpack.c.l.b16 %v36
  %v166 = vunpack.c.l.b16 %v37
  %v167 = vunpack.c.l.b16 %v38
  %v168 = vunpack.c.l.b16 %v39
  %v169 = vunpack.c.l.b16 %v40
  %v170 = vunpack.c.l.b16 %v41
  %v171 = vunpack.c.l.b16 %v42
  %v172 = vunpack.c.l.b16 %v43
  %v173 = vunpack.c.l.b16 %v44
  %v174 = vunpack.c.l.b16 %v45
  %v175 = vunpack.c.l.b16 %v46
  %v176 = vunpack.c.l.b16 %v47
  %v177 = vunpack.c.l.b16 %v48
  %v178 = vunpack.c.l.b16 %v49
  %v179 = vunpack.c.l.b16 %v50
  %v180 = vunpack.c.l.b16 %v51
  %v181 = vunpack.c.l.b16 %v52
  %v182 = vunpack.c.l.b16 %v53
  %v183 = vunpack.c.l.b16 %v54
  %v184 = vunpack.c.l.b16 %v55
  %v185 = vunpack.c.l.b16 %v56
  %v186 = vunpack.c.l.b16 %v57
  %v187 = vunpack.c.l.b16 %v58
  %v188 = vunpack.c.l.b16 %v59
  %v189 = vunpack.c.l.b16 %v60
  %v190 = vunpack.c.l.b16 %v61
  %v191 = vunpack.c.l.b16 %v62
  %v192 = vunpack.c.l.b16 %v63
  %v193 = vunpack.c.l.b16 %v64
  %v194 = vunpack.c.l.b16 %v65
  %v195 = vunpack.c.l.b16 %v66
  %v196 = vunpack.c.l.b16 %v67
  %v197 = vunpack.c.l.b16 %v68
  %v198 = vunpack.c.l.b16 %v69
  %v199 = vunpack.c.l.b16 %v70
  %v200 = vunpack.c.l.b16 %v71
  %v201 = vunpack.c.l.b16 %v72
  %v202 = vunpack.c.l.b16 %v73
  %v203 = vunpack.c.l.b16 %v74
  %v204 = vunpack.c.l.b16 %v75
  %v205 = vunpack.c.l.b16 %v76
  %v206 = vunpack.c.l.b16 %v77
  %v207 = vunpack.c.l.b16 %v78
  %v208 = vunpack.c.l.b16 %v79
  %v209 = vunpack.c.l.b16 %v80
  %v210 = vunpack.c.l.b16 %v81
  %v211 = vunpack.c.l.b16 %v82
  %v212 = vunpack.c.l.b16 %v83
  %v213 = vunpack.c.l.b16 %v84
  %v214 = vunpack.c.l.b16 %v85
  %v215 = vunpack.c.l.b16 %v86
  %v216 = vunpack.c.l.b16 %v87
  %v217 = vpack.c.b16 %v154, %v153
  %v218 = vpack.c.b16 %v156, %v155
  %v219 = vpack.c.b16 %v158, %v157
  %v220 = vpack.c.b16 %v160, %v159
  %v221 = vpack.c.b16 %v162, %v161
  %v222 = vpack.c.b16 %v164, %v163
  %v223 = vpack.c.b16 %v166, %v165
  %v224 = vpack.c.b16 %v168, %v167
  %v225 = vpack.c.b16 %v170, %v169
  %v226 = vpack.c.b16 %v172, %v171
  %v227 = vpack.c.b16 %v174, %v173
  %v228 = vpack.c.b16 %v176, %v175
  %v229 = vpack.c.b16 %v178, %v177
  %v230 = vpack.c.b16 %v180, %v179
  %v231 = vpack.c.b16 %v182, %v181
  %v232 = vpack.c.b16 %v184, %v183
  %v233 = vpack.c.b16 %v186, %v185
  %v234 = vpack.c.b16 %v188, %v187
  %v235 = vpack.c.b16 %v190, %v189
  %v236 = vpack.c.b16 %v192, %v191
  %v237 = vpack.c.b16 %v194, %v193
  %v238 = vpack.c.b16 %v196, %v195
  %v239 = vpack.c.b16 %v198, %v197
  %v240 = vpack.c.b16 %v200, %v199
  %v241 = vpack.c.b16 %v202, %v201
  %v242 = vpack.c.b16 %v204, %v203
  %v243 = vpack.c.b16 %v206, %v205
  %v244 = vpack.c.b16 %v208, %v207
  %v245 = vpack.c.b16 %v210, %v209
  %v246 = vpack.c.b16 %v212, %v211
  %v247 = vpack.c.b16 %v214, %v213
  %v248 = vpack.c.b16 %v216, %v215
  %vm249 = vcmask 31744
  %v251 = vsel %vm249, %v217, 0
  %v254 = vsel %vm249, %v218, 0
  %v257 = vsel %vm249, %v219, 0
  %v260 = vsel %vm249, %v220, 0
  %v263 = vsel %vm249, %v221, 0
  %v266 = vsel %vm249, %v222, 0
  %v269 = vsel %vm249, %v223, 0
  %v272 = vsel %vm249, %v224, 0
  %v275 = vsel %vm249, %v225, 0
  %v278 = vsel %vm249, %v226, 0
  %v281 = vsel %vm249, %v227, 0
  %v284 = vsel %vm249, %v228, 0
  %v287 = vsel %vm249, %v229, 0
  %v290 = vsel %vm249, %v230, 0
  %v293 = vsel %vm249, %v231, 0
  %v296 = vsel %vm249, %v232, 0
  %v299 = vsel %vm249, %v233, 0
  %v302 = vsel %vm249, %v234, 0
  %v305 = vsel %vm249, %v235, 0
  %v308 = vsel %vm249, %v236, 0
  %v311 = vsel %vm249, %v237, 0
  %v314 = vsel %vm249, %v238, 0
  %v317 = vsel %vm249, %v239, 0
  %v320 = vsel %vm249, %v240, 0
  %v323 = vsel %vm249, %v241, 0
  %v326 = vsel %vm249, %v242, 0
  %v329 = vsel %vm249, %v243, 0
  %v332 = vsel %vm249, %v244, 0
  %v335 = vsel %vm249, %v245, 0
  %v338 = vsel %vm249, %v246, 0
  %v341 = vsel %vm249, %v247, 0
  %v344 = vsel %vm249, %v248, 0
  %vm346 = vcmask 1041408
  %v348 = vsel %vm346, %v88, 0
  %350 = vmatpush.bf16.msra.mxu0 0
  %351 = vmatpush.bf16.msra.mxu0 0
  %352 = vmatpush.bf16.msra.mxu0 0
  %353 = vmatpush.bf16.msra.mxu0 0
  %354 = vmatpush.bf16.msra.mxu0 0
  %355 = vmatpush.bf16.msra.mxu0 0
  %356 = vmatpush.bf16.msra.mxu0 0
  %357 = vmatpush.bf16.msra.mxu0 %v348
  %358 = vmatmul.bf16.gmra.mxu0 %v251
  %v359 = vpop.f32.mrf.mxu0
  %v360 = vadd.f32 0.0, %v359
  %v361 = vpop.f32.mrf.mxu0
  %v362 = vadd.f32 0.0, %v361
  %363 = vmatmul.bf16.gmra.mxu0 %v254
  %v364 = vpop.f32.mrf.mxu0
  %v365 = vadd.f32 0.0, %v364
  %v366 = vpop.f32.mrf.mxu0
  %v367 = vadd.f32 0.0, %v366
  %368 = vmatmul.bf16.gmra.mxu0 %v257
  %v369 = vpop.f32.mrf.mxu0
  %v370 = vadd.f32 0.0, %v369
  %v371 = vpop.f32.mrf.mxu0
  %v372 = vadd.f32 0.0, %v371
  %373 = vmatmul.bf16.gmra.mxu0 %v260
  %v374 = vpop.f32.mrf.mxu0
  %v375 = vadd.f32 0.0, %v374
  %v376 = vpop.f32.mrf.mxu0
  %v377 = vadd.f32 0.0, %v376
  %378 = vmatmul.bf16.gmra.mxu0 %v263
  %v379 = vpop.f32.mrf.mxu0
  %v380 = vadd.f32 0.0, %v379
  %v381 = vpop.f32.mrf.mxu0
  %v382 = vadd.f32 0.0, %v381
  %383 = vmatmul.bf16.gmra.mxu0 %v266
  %v384 = vpop.f32.mrf.mxu0
  %v385 = vadd.f32 0.0, %v384
  %v386 = vpop.f32.mrf.mxu0
  %v387 = vadd.f32 0.0, %v386
  %388 = vmatmul.bf16.gmra.mxu0 %v269
  %v389 = vpop.f32.mrf.mxu0
  %v390 = vadd.f32 0.0, %v389
  %v391 = vpop.f32.mrf.mxu0
  %v392 = vadd.f32 0.0, %v391
  %393 = vmatmul.bf16.gmra.mxu0 %v272
  %v394 = vpop.f32.mrf.mxu0
  %v395 = vadd.f32 0.0, %v394
  %v396 = vpop.f32.mrf.mxu0
  %v397 = vadd.f32 0.0, %v396
  %398 = vmatmul.bf16.gmra.mxu0 %v275
  %v399 = vpop.f32.mrf.mxu0
  %v400 = vadd.f32 0.0, %v399
  %v401 = vpop.f32.mrf.mxu0
  %v402 = vadd.f32 0.0, %v401
  %403 = vmatmul.bf16.gmra.mxu0 %v278
  %v404 = vpop.f32.mrf.mxu0
  %v405 = vadd.f32 0.0, %v404
  %v406 = vpop.f32.mrf.mxu0
  %v407 = vadd.f32 0.0, %v406
  %408 = vmatmul.bf16.gmra.mxu0 %v281
  %v409 = vpop.f32.mrf.mxu0
  %v410 = vadd.f32 0.0, %v409
  %v411 = vpop.f32.mrf.mxu0
  %v412 = vadd.f32 0.0, %v411
  %413 = vmatmul.bf16.gmra.mxu0 %v284
  %v414 = vpop.f32.mrf.mxu0
  %v415 = vadd.f32 0.0, %v414
  %v416 = vpop.f32.mrf.mxu0
  %v417 = vadd.f32 0.0, %v416
  %418 = vmatmul.bf16.gmra.mxu0 %v287
  %v419 = vpop.f32.mrf.mxu0
  %v420 = vadd.f32 0.0, %v419
  %v421 = vpop.f32.mrf.mxu0
  %v422 = vadd.f32 0.0, %v421
  %423 = vmatmul.bf16.gmra.mxu0 %v290
  %v424 = vpop.f32.mrf.mxu0
  %v425 = vadd.f32 0.0, %v424
  %v426 = vpop.f32.mrf.mxu0
  %v427 = vadd.f32 0.0, %v426
  %428 = vmatmul.bf16.gmra.mxu0 %v293
  %v429 = vpop.f32.mrf.mxu0
  %v430 = vadd.f32 0.0, %v429
  %v431 = vpop.f32.mrf.mxu0
  %v432 = vadd.f32 0.0, %v431
  %433 = vmatmul.bf16.gmra.mxu0 %v296
  %v434 = vpop.f32.mrf.mxu0
  %v435 = vadd.f32 0.0, %v434
  %v436 = vpop.f32.mrf.mxu0
  %v437 = vadd.f32 0.0, %v436
  %438 = vmatmul.bf16.gmra.mxu0 %v299
  %v439 = vpop.f32.mrf.mxu0
  %v440 = vadd.f32 0.0, %v439
  %v441 = vpop.f32.mrf.mxu0
  %v442 = vadd.f32 0.0, %v441
  %443 = vmatmul.bf16.gmra.mxu0 %v302
  %v444 = vpop.f32.mrf.mxu0
  %v445 = vadd.f32 0.0, %v444
  %v446 = vpop.f32.mrf.mxu0
  %v447 = vadd.f32 0.0, %v446
  %448 = vmatmul.bf16.gmra.mxu0 %v305
  %v449 = vpop.f32.mrf.mxu0
  %v450 = vadd.f32 0.0, %v449
  %v451 = vpop.f32.mrf.mxu0
  %v452 = vadd.f32 0.0, %v451
  %453 = vmatmul.bf16.gmra.mxu0 %v308
  %v454 = vpop.f32.mrf.mxu0
  %v455 = vadd.f32 0.0, %v454
  %v456 = vpop.f32.mrf.mxu0
  %v457 = vadd.f32 0.0, %v456
  %458 = vmatmul.bf16.gmra.mxu0 %v311
  %v459 = vpop.f32.mrf.mxu0
  %v460 = vadd.f32 0.0, %v459
  %v461 = vpop.f32.mrf.mxu0
  %v462 = vadd.f32 0.0, %v461
  %463 = vmatmul.bf16.gmra.mxu0 %v314
  %v464 = vpop.f32.mrf.mxu0
  %v465 = vadd.f32 0.0, %v464
  %v466 = vpop.f32.mrf.mxu0
  %v467 = vadd.f32 0.0, %v466
  %468 = vmatmul.bf16.gmra.mxu0 %v317
  %v469 = vpop.f32.mrf.mxu0
  %v470 = vadd.f32 0.0, %v469
  %v471 = vpop.f32.mrf.mxu0
  %v472 = vadd.f32 0.0, %v471
  %473 = vmatmul.bf16.gmra.mxu0 %v320
  %v474 = vpop.f32.mrf.mxu0
  %v475 = vadd.f32 0.0, %v474
  %v476 = vpop.f32.mrf.mxu0
  %v477 = vadd.f32 0.0, %v476
  %478 = vmatmul.bf16.gmra.mxu0 %v323
  %v479 = vpop.f32.mrf.mxu0
  %v480 = vadd.f32 0.0, %v479
  %v481 = vpop.f32.mrf.mxu0
  %v482 = vadd.f32 0.0, %v481
  %483 = vmatmul.bf16.gmra.mxu0 %v326
  %v484 = vpop.f32.mrf.mxu0
  %v485 = vadd.f32 0.0, %v484
  %v486 = vpop.f32.mrf.mxu0
  %v487 = vadd.f32 0.0, %v486
  %488 = vmatmul.bf16.gmra.mxu0 %v329
  %v489 = vpop.f32.mrf.mxu0
  %v490 = vadd.f32 0.0, %v489
  %v491 = vpop.f32.mrf.mxu0
  %v492 = vadd.f32 0.0, %v491
  %493 = vmatmul.bf16.gmra.mxu0 %v332
  %v494 = vpop.f32.mrf.mxu0
  %v495 = vadd.f32 0.0, %v494
  %v496 = vpop.f32.mrf.mxu0
  %v497 = vadd.f32 0.0, %v496
  %498 = vmatmul.bf16.gmra.mxu0 %v335
  %v499 = vpop.f32.mrf.mxu0
  %v500 = vadd.f32 0.0, %v499
  %v501 = vpop.f32.mrf.mxu0
  %v502 = vadd.f32 0.0, %v501
  %503 = vmatmul.bf16.gmra.mxu0 %v338
  %v504 = vpop.f32.mrf.mxu0
  %v505 = vadd.f32 0.0, %v504
  %v506 = vpop.f32.mrf.mxu0
  %v507 = vadd.f32 0.0, %v506
  %508 = vmatmul.bf16.gmra.mxu0 %v341
  %v509 = vpop.f32.mrf.mxu0
  %v510 = vadd.f32 0.0, %v509
  %v511 = vpop.f32.mrf.mxu0
  %v512 = vadd.f32 0.0, %v511
  %513 = vmatmul.bf16.gmra.mxu0 %v344
  %v514 = vpop.f32.mrf.mxu0
  %v515 = vadd.f32 0.0, %v514
  %v516 = vpop.f32.mrf.mxu0
  %v517 = vadd.f32 0.0, %v516
  %518 = vdwg.mxu0
  %v519 = vld [vmem:[%s4] sm:$0x1]
  %v521 = vperm.slane %v519, 0
  %v523 = vmul.f32 %v360, %v521
  %v524 = vmul.f32 %v362, %v521
  %v525 = vmul.f32 %v365, %v521
  %v526 = vmul.f32 %v367, %v521
  %v527 = vmul.f32 %v370, %v521
  %v528 = vmul.f32 %v372, %v521
  %v529 = vmul.f32 %v375, %v521
  %v530 = vmul.f32 %v377, %v521
  %v531 = vmul.f32 %v380, %v521
  %v532 = vmul.f32 %v382, %v521
  %v533 = vmul.f32 %v385, %v521
  %v534 = vmul.f32 %v387, %v521
  %v535 = vmul.f32 %v390, %v521
  %v536 = vmul.f32 %v392, %v521
  %v537 = vmul.f32 %v395, %v521
  %v538 = vmul.f32 %v397, %v521
  %v539 = vmul.f32 %v400, %v521
  %v540 = vmul.f32 %v402, %v521
  %v541 = vmul.f32 %v405, %v521
  %v542 = vmul.f32 %v407, %v521
  %v543 = vmul.f32 %v410, %v521
  %v544 = vmul.f32 %v412, %v521
  %v545 = vmul.f32 %v415, %v521
  %v546 = vmul.f32 %v417, %v521
  %v547 = vmul.f32 %v420, %v521
  %v548 = vmul.f32 %v422, %v521
  %v549 = vmul.f32 %v425, %v521
  %v550 = vmul.f32 %v427, %v521
  %v551 = vmul.f32 %v430, %v521
  %v552 = vmul.f32 %v432, %v521
  %v553 = vmul.f32 %v435, %v521
  %v554 = vmul.f32 %v437, %v521
  %v555 = vmul.f32 %v440, %v521
  %v556 = vmul.f32 %v442, %v521
  %v557 = vmul.f32 %v445, %v521
  %v558 = vmul.f32 %v447, %v521
  %v559 = vmul.f32 %v450, %v521
  %v560 = vmul.f32 %v452, %v521
  %v561 = vmul.f32 %v455, %v521
  %v562 = vmul.f32 %v457, %v521
  %v563 = vmul.f32 %v460, %v521
  %v564 = vmul.f32 %v462, %v521
  %v565 = vmul.f32 %v465, %v521
  %v566 = vmul.f32 %v467, %v521
  %v567 = vmul.f32 %v470, %v521
  %v568 = vmul.f32 %v472, %v521
  %v569 = vmul.f32 %v475, %v521
  %v570 = vmul.f32 %v477, %v521
  %v571 = vmul.f32 %v480, %v521
  %v572 = vmul.f32 %v482, %v521
  %v573 = vmul.f32 %v485, %v521
  %v574 = vmul.f32 %v487, %v521
  %v575 = vmul.f32 %v490, %v521
  %v576 = vmul.f32 %v492, %v521
  %v577 = vmul.f32 %v495, %v521
  %v578 = vmul.f32 %v497, %v521
  %v579 = vmul.f32 %v500, %v521
  %v580 = vmul.f32 %v502, %v521
  %v581 = vmul.f32 %v505, %v521
  %v582 = vmul.f32 %v507, %v521
  %v583 = vmul.f32 %v510, %v521
  %v584 = vmul.f32 %v512, %v521
  %v585 = vmul.f32 %v515, %v521
  %v586 = vmul.f32 %v517, %v521
  %v587 = vld [vmem:[%s5] sm:$0x1]
  %v589 = vperm.slane %v587, 0
  %v591 = vadd.f32 %v523, %v589
  %v592 = vadd.f32 %v524, %v589
  %v593 = vadd.f32 %v525, %v589
  %v594 = vadd.f32 %v526, %v589
  %v595 = vadd.f32 %v527, %v589
  %v596 = vadd.f32 %v528, %v589
  %v597 = vadd.f32 %v529, %v589
  %v598 = vadd.f32 %v530, %v589
  %v599 = vadd.f32 %v531, %v589
  %v600 = vadd.f32 %v532, %v589
  %v601 = vadd.f32 %v533, %v589
  %v602 = vadd.f32 %v534, %v589
  %v603 = vadd.f32 %v535, %v589
  %v604 = vadd.f32 %v536, %v589
  %v605 = vadd.f32 %v537, %v589
  %v606 = vadd.f32 %v538, %v589
  %v607 = vadd.f32 %v539, %v589
  %v608 = vadd.f32 %v540, %v589
  %v609 = vadd.f32 %v541, %v589
  %v610 = vadd.f32 %v542, %v589
  %v611 = vadd.f32 %v543, %v589
  %v612 = vadd.f32 %v544, %v589
  %v613 = vadd.f32 %v545, %v589
  %v614 = vadd.f32 %v546, %v589
  %v615 = vadd.f32 %v547, %v589
  %v616 = vadd.f32 %v548, %v589
  %v617 = vadd.f32 %v549, %v589
  %v618 = vadd.f32 %v550, %v589
  %v619 = vadd.f32 %v551, %v589
  %v620 = vadd.f32 %v552, %v589
  %v621 = vadd.f32 %v553, %v589
  %v622 = vadd.f32 %v554, %v589
  %v623 = vadd.f32 %v555, %v589
  %v624 = vadd.f32 %v556, %v589
  %v625 = vadd.f32 %v557, %v589
  %v626 = vadd.f32 %v558, %v589
  %v627 = vadd.f32 %v559, %v589
  %v628 = vadd.f32 %v560, %v589
  %v629 = vadd.f32 %v561, %v589
  %v630 = vadd.f32 %v562, %v589
  %v631 = vadd.f32 %v563, %v589
  %v632 = vadd.f32 %v564, %v589
  %v633 = vadd.f32 %v565, %v589
  %v634 = vadd.f32 %v566, %v589
  %v635 = vadd.f32 %v567, %v589
  %v636 = vadd.f32 %v568, %v589
  %v637 = vadd.f32 %v569, %v589
  %v638 = vadd.f32 %v570, %v589
  %v639 = vadd.f32 %v571, %v589
  %v640 = vadd.f32 %v572, %v589
  %v641 = vadd.f32 %v573, %v589
  %v642 = vadd.f32 %v574, %v589
  %v643 = vadd.f32 %v575, %v589
  %v644 = vadd.f32 %v576, %v589
  %v645 = vadd.f32 %v577, %v589
  %v646 = vadd.f32 %v578, %v589
  %v647 = vadd.f32 %v579, %v589
  %v648 = vadd.f32 %v580, %v589
  %v649 = vadd.f32 %v581, %v589
  %v650 = vadd.f32 %v582, %v589
  %v651 = vadd.f32 %v583, %v589
  %v652 = vadd.f32 %v584, %v589
  %v653 = vadd.f32 %v585, %v589
  %v654 = vadd.f32 %v586, %v589
  %v655 = vmax.f32 %v591, 0.0
  %v656 = vmax.f32 %v592, 0.0
  %v657 = vmax.f32 %v593, 0.0
  %v658 = vmax.f32 %v594, 0.0
  %v659 = vmax.f32 %v595, 0.0
  %v660 = vmax.f32 %v596, 0.0
  %v661 = vmax.f32 %v597, 0.0
  %v662 = vmax.f32 %v598, 0.0
  %v663 = vmax.f32 %v599, 0.0
  %v664 = vmax.f32 %v600, 0.0
  %v665 = vmax.f32 %v601, 0.0
  %v666 = vmax.f32 %v602, 0.0
  %v667 = vmax.f32 %v603, 0.0
  %v668 = vmax.f32 %v604, 0.0
  %v669 = vmax.f32 %v605, 0.0
  %v670 = vmax.f32 %v606, 0.0
  %v671 = vmax.f32 %v607, 0.0
  %v672 = vmax.f32 %v608, 0.0
  %v673 = vmax.f32 %v609, 0.0
  %v674 = vmax.f32 %v610, 0.0
  %v675 = vmax.f32 %v611, 0.0
  %v676 = vmax.f32 %v612, 0.0
  %v677 = vmax.f32 %v613, 0.0
  %v678 = vmax.f32 %v614, 0.0
  %v679 = vmax.f32 %v615, 0.0
  %v680 = vmax.f32 %v616, 0.0
  %v681 = vmax.f32 %v617, 0.0
  %v682 = vmax.f32 %v618, 0.0
  %v683 = vmax.f32 %v619, 0.0
  %v684 = vmax.f32 %v620, 0.0
  %v685 = vmax.f32 %v621, 0.0
  %v686 = vmax.f32 %v622, 0.0
  %v687 = vmax.f32 %v623, 0.0
  %v688 = vmax.f32 %v624, 0.0
  %v689 = vmax.f32 %v625, 0.0
  %v690 = vmax.f32 %v626, 0.0
  %v691 = vmax.f32 %v627, 0.0
  %v692 = vmax.f32 %v628, 0.0
  %v693 = vmax.f32 %v629, 0.0
  %v694 = vmax.f32 %v630, 0.0
  %v695 = vmax.f32 %v631, 0.0
  %v696 = vmax.f32 %v632, 0.0
  %v697 = vmax.f32 %v633, 0.0
  %v698 = vmax.f32 %v634, 0.0
  %v699 = vmax.f32 %v635, 0.0
  %v700 = vmax.f32 %v636, 0.0
  %v701 = vmax.f32 %v637, 0.0
  %v702 = vmax.f32 %v638, 0.0
  %v703 = vmax.f32 %v639, 0.0
  %v704 = vmax.f32 %v640, 0.0
  %v705 = vmax.f32 %v641, 0.0
  %v706 = vmax.f32 %v642, 0.0
  %v707 = vmax.f32 %v643, 0.0
  %v708 = vmax.f32 %v644, 0.0
  %v709 = vmax.f32 %v645, 0.0
  %v710 = vmax.f32 %v646, 0.0
  %v711 = vmax.f32 %v647, 0.0
  %v712 = vmax.f32 %v648, 0.0
  %v713 = vmax.f32 %v649, 0.0
  %v714 = vmax.f32 %v650, 0.0
  %v715 = vmax.f32 %v651, 0.0
  %v716 = vmax.f32 %v652, 0.0
  %v717 = vmax.f32 %v653, 0.0
  %v718 = vmax.f32 %v654, 0.0
  %v719 = vld [vmem:[%s1] sm:$0xf]
  %v720 = vld [vmem:[%s1 + $0x4] sm:$0xf]
  %v721 = vld [vmem:[%s1 + $0x8] sm:$0xf]
  %v722 = vld [vmem:[%s1 + $0xc] sm:$0xf]
  %v723 = vld [vmem:[%s1 + $0x10] sm:$0xf]
  %v724 = vld [vmem:[%s1 + $0x14] sm:$0xf]
  %v725 = vld [vmem:[%s1 + $0x18] sm:$0xf]
  %v726 = vld [vmem:[%s1 + $0x1c] sm:$0xf]
  %v727 = vld [vmem:[%s1 + $0x20] sm:$0xf]
  %v728 = vld [vmem:[%s1 + $0x24] sm:$0xf]
  %v729 = vld [vmem:[%s1 + $0x28] sm:$0xf]
  %v730 = vld [vmem:[%s1 + $0x2c] sm:$0xf]
  %v731 = vld [vmem:[%s1 + $0x30] sm:$0xf]
  %v732 = vld [vmem:[%s1 + $0x34] sm:$0xf]
  %v733 = vld [vmem:[%s1 + $0x38] sm:$0xf]
  %v734 = vld [vmem:[%s1 + $0x3c] sm:$0xf]
  %v735 = vld [vmem:[%s1 + $0x40] sm:$0xf]
  %v736 = vld [vmem:[%s1 + $0x44] sm:$0xf]
  %v737 = vld [vmem:[%s1 + $0x48] sm:$0xf]
  %v738 = vld [vmem:[%s1 + $0x4c] sm:$0xf]
  %v739 = vld [vmem:[%s1 + $0x50] sm:$0xf]
  %v740 = vld [vmem:[%s1 + $0x54] sm:$0xf]
  %v741 = vld [vmem:[%s1 + $0x58] sm:$0xf]
  %v742 = vld [vmem:[%s1 + $0x5c] sm:$0xf]
  %v743 = vld [vmem:[%s1 + $0x60] sm:$0xf]
  %v744 = vld [vmem:[%s1 + $0x64] sm:$0xf]
  %v745 = vld [vmem:[%s1 + $0x68] sm:$0xf]
  %v746 = vld [vmem:[%s1 + $0x6c] sm:$0xf]
  %v747 = vld [vmem:[%s1 + $0x70] sm:$0xf]
  %v748 = vld [vmem:[%s1 + $0x74] sm:$0xf]
  %v749 = vld [vmem:[%s1 + $0x78] sm:$0xf]
  %v750 = vld [vmem:[%s1 + $0x7c] sm:$0xf]
  %v751 = vld [vmem:[%s1 + $0x80] sm:$0xf]
  %v752 = vld [vmem:[%s1 + $0x84] sm:$0xf]
  %v753 = vld [vmem:[%s1 + $0x88] sm:$0xf]
  %v754 = vld [vmem:[%s1 + $0x8c] sm:$0xf]
  %v755 = vld [vmem:[%s1 + $0x90] sm:$0xf]
  %v756 = vld [vmem:[%s1 + $0x94] sm:$0xf]
  %v757 = vld [vmem:[%s1 + $0x98] sm:$0xf]
  %v758 = vld [vmem:[%s1 + $0x9c] sm:$0xf]
  %v759 = vld [vmem:[%s1 + $0xa0] sm:$0xf]
  %v760 = vld [vmem:[%s1 + $0xa4] sm:$0xf]
  %v761 = vld [vmem:[%s1 + $0xa8] sm:$0xf]
  %v762 = vld [vmem:[%s1 + $0xac] sm:$0xf]
  %v763 = vld [vmem:[%s1 + $0xb0] sm:$0xf]
  %v764 = vld [vmem:[%s1 + $0xb4] sm:$0xf]
  %v765 = vld [vmem:[%s1 + $0xb8] sm:$0xf]
  %v766 = vld [vmem:[%s1 + $0xbc] sm:$0xf]
  %v767 = vld [vmem:[%s1 + $0xc0] sm:$0xf]
  %v768 = vld [vmem:[%s1 + $0xc4] sm:$0xf]
  %v769 = vld [vmem:[%s1 + $0xc8] sm:$0xf]
  %v770 = vld [vmem:[%s1 + $0xcc] sm:$0xf]
  %v771 = vld [vmem:[%s1 + $0xd0] sm:$0xf]
  %v772 = vld [vmem:[%s1 + $0xd4] sm:$0xf]
  %v773 = vld [vmem:[%s1 + $0xd8] sm:$0xf]
  %v774 = vld [vmem:[%s1 + $0xdc] sm:$0xf]
  %v775 = vld [vmem:[%s1 + $0xe0] sm:$0xf]
  %v776 = vld [vmem:[%s1 + $0xe4] sm:$0xf]
  %v777 = vld [vmem:[%s1 + $0xe8] sm:$0xf]
  %v778 = vld [vmem:[%s1 + $0xec] sm:$0xf]
  %v779 = vld [vmem:[%s1 + $0xf0] sm:$0xf]
  %v780 = vld [vmem:[%s1 + $0xf4] sm:$0xf]
  %v781 = vld [vmem:[%s1 + $0xf8] sm:$0xf]
  %v782 = vld [vmem:[%s1 + $0xfc] sm:$0xf]
  %v783 = vld [vmem:[%s3] sm:$0xf]
  %v848 = vunpack.c.l.b16 %v719
  %v849 = vunpack.c.l.b16 %v720
  %v850 = vunpack.c.l.b16 %v721
  %v851 = vunpack.c.l.b16 %v722
  %v852 = vunpack.c.l.b16 %v723
  %v853 = vunpack.c.l.b16 %v724
  %v854 = vunpack.c.l.b16 %v725
  %v855 = vunpack.c.l.b16 %v726
  %v856 = vunpack.c.l.b16 %v727
  %v857 = vunpack.c.l.b16 %v728
  %v858 = vunpack.c.l.b16 %v729
  %v859 = vunpack.c.l.b16 %v730
  %v860 = vunpack.c.l.b16 %v731
  %v861 = vunpack.c.l.b16 %v732
  %v862 = vunpack.c.l.b16 %v733
  %v863 = vunpack.c.l.b16 %v734
  %v864 = vunpack.c.l.b16 %v735
  %v865 = vunpack.c.l.b16 %v736
  %v866 = vunpack.c.l.b16 %v737
  %v867 = vunpack.c.l.b16 %v738
  %v868 = vunpack.c.l.b16 %v739
  %v869 = vunpack.c.l.b16 %v740
  %v870 = vunpack.c.l.b16 %v741
  %v871 = vunpack.c.l.b16 %v742
  %v872 = vunpack.c.l.b16 %v743
  %v873 = vunpack.c.l.b16 %v744
  %v874 = vunpack.c.l.b16 %v745
  %v875 = vunpack.c.l.b16 %v746
  %v876 = vunpack.c.l.b16 %v747
  %v877 = vunpack.c.l.b16 %v748
  %v878 = vunpack.c.l.b16 %v749
  %v879 = vunpack.c.l.b16 %v750
  %v880 = vunpack.c.l.b16 %v751
  %v881 = vunpack.c.l.b16 %v752
  %v882 = vunpack.c.l.b16 %v753
  %v883 = vunpack.c.l.b16 %v754
  %v884 = vunpack.c.l.b16 %v755
  %v885 = vunpack.c.l.b16 %v756
  %v886 = vunpack.c.l.b16 %v757
  %v887 = vunpack.c.l.b16 %v758
  %v888 = vunpack.c.l.b16 %v759
  %v889 = vunpack.c.l.b16 %v760
  %v890 = vunpack.c.l.b16 %v761
  %v891 = vunpack.c.l.b16 %v762
  %v892 = vunpack.c.l.b16 %v763
  %v893 = vunpack.c.l.b16 %v764
  %v894 = vunpack.c.l.b16 %v765
  %v895 = vunpack.c.l.b16 %v766
  %v896 = vunpack.c.l.b16 %v767
  %v897 = vunpack.c.l.b16 %v768
  %v898 = vunpack.c.l.b16 %v769
  %v899 = vunpack.c.l.b16 %v770
  %v900 = vunpack.c.l.b16 %v771
  %v901 = vunpack.c.l.b16 %v772
  %v902 = vunpack.c.l.b16 %v773
  %v903 = vunpack.c.l.b16 %v774
  %v904 = vunpack.c.l.b16 %v775
  %v905 = vunpack.c.l.b16 %v776
  %v906 = vunpack.c.l.b16 %v777
  %v907 = vunpack.c.l.b16 %v778
  %v908 = vunpack.c.l.b16 %v779
  %v909 = vunpack.c.l.b16 %v780
  %v910 = vunpack.c.l.b16 %v781
  %v911 = vunpack.c.l.b16 %v782
  %v912 = vpack.c.b16 %v849, %v848
  %v913 = vpack.c.b16 %v851, %v850
  %v914 = vpack.c.b16 %v853, %v852
  %v915 = vpack.c.b16 %v855, %v854
  %v916 = vpack.c.b16 %v857, %v856
  %v917 = vpack.c.b16 %v859, %v858
  %v918 = vpack.c.b16 %v861, %v860
  %v919 = vpack.c.b16 %v863, %v862
  %v920 = vpack.c.b16 %v865, %v864
  %v921 = vpack.c.b16 %v867, %v866
  %v922 = vpack.c.b16 %v869, %v868
  %v923 = vpack.c.b16 %v871, %v870
  %v924 = vpack.c.b16 %v873, %v872
  %v925 = vpack.c.b16 %v875, %v874
  %v926 = vpack.c.b16 %v877, %v876
  %v927 = vpack.c.b16 %v879, %v878
  %v928 = vpack.c.b16 %v881, %v880
  %v929 = vpack.c.b16 %v883, %v882
  %v930 = vpack.c.b16 %v885, %v884
  %v931 = vpack.c.b16 %v887, %v886
  %v932 = vpack.c.b16 %v889, %v888
  %v933 = vpack.c.b16 %v891, %v890
  %v934 = vpack.c.b16 %v893, %v892
  %v935 = vpack.c.b16 %v895, %v894
  %v936 = vpack.c.b16 %v897, %v896
  %v937 = vpack.c.b16 %v899, %v898
  %v938 = vpack.c.b16 %v901, %v900
  %v939 = vpack.c.b16 %v903, %v902
  %v940 = vpack.c.b16 %v905, %v904
  %v941 = vpack.c.b16 %v907, %v906
  %v942 = vpack.c.b16 %v909, %v908
  %v943 = vpack.c.b16 %v911, %v910
  %vm944 = vcmask 64512
  %v946 = vsel %vm944, %v912, 0
  %v949 = vsel %vm944, %v913, 0
  %v952 = vsel %vm944, %v914, 0
  %v955 = vsel %vm944, %v915, 0
  %v958 = vsel %vm944, %v916, 0
  %v961 = vsel %vm944, %v917, 0
  %v964 = vsel %vm944, %v918, 0
  %v967 = vsel %vm944, %v919, 0
  %v970 = vsel %vm944, %v920, 0
  %v973 = vsel %vm944, %v921, 0
  %v976 = vsel %vm944, %v922, 0
  %v979 = vsel %vm944, %v923, 0
  %v982 = vsel %vm944, %v924, 0
  %v985 = vsel %vm944, %v925, 0
  %v988 = vsel %vm944, %v926, 0
  %v991 = vsel %vm944, %v927, 0
  %v994 = vsel %vm944, %v928, 0
  %v997 = vsel %vm944, %v929, 0
  %v1000 = vsel %vm944, %v930, 0
  %v1003 = vsel %vm944, %v931, 0
  %v1006 = vsel %vm944, %v932, 0
  %v1009 = vsel %vm944, %v933, 0
  %v1012 = vsel %vm944, %v934, 0
  %v1015 = vsel %vm944, %v935, 0
  %v1018 = vsel %vm944, %v936, 0
  %v1021 = vsel %vm944, %v937, 0
  %v1024 = vsel %vm944, %v938, 0
  %v1027 = vsel %vm944, %v939, 0
  %v1030 = vsel %vm944, %v940, 0
  %v1033 = vsel %vm944, %v941, 0
  %v1036 = vsel %vm944, %v942, 0
  %v1039 = vsel %vm944, %v943, 0
  %vm1041 = vcmask 1043456
  %v1043 = vsel %vm1041, %v783, 0
  %1045 = vmatpush.bf16.msra.mxu0 0
  %1046 = vmatpush.bf16.msra.mxu0 0
  %1047 = vmatpush.bf16.msra.mxu0 0
  %1048 = vmatpush.bf16.msra.mxu0 0
  %1049 = vmatpush.bf16.msra.mxu0 0
  %1050 = vmatpush.bf16.msra.mxu0 0
  %1051 = vmatpush.bf16.msra.mxu0 0
  %1052 = vmatpush.bf16.msra.mxu0 %v1043
  %1053 = vmatmul.bf16.gmra.mxu0 %v946
  %v1054 = vpop.f32.mrf.mxu0
  %v1055 = vadd.f32 0.0, %v1054
  %v1056 = vpop.f32.mrf.mxu0
  %v1057 = vadd.f32 0.0, %v1056
  %1058 = vmatmul.bf16.gmra.mxu0 %v949
  %v1059 = vpop.f32.mrf.mxu0
  %v1060 = vadd.f32 0.0, %v1059
  %v1061 = vpop.f32.mrf.mxu0
  %v1062 = vadd.f32 0.0, %v1061
  %1063 = vmatmul.bf16.gmra.mxu0 %v952
  %v1064 = vpop.f32.mrf.mxu0
  %v1065 = vadd.f32 0.0, %v1064
  %v1066 = vpop.f32.mrf.mxu0
  %v1067 = vadd.f32 0.0, %v1066
  %1068 = vmatmul.bf16.gmra.mxu0 %v955
  %v1069 = vpop.f32.mrf.mxu0
  %v1070 = vadd.f32 0.0, %v1069
  %v1071 = vpop.f32.mrf.mxu0
  %v1072 = vadd.f32 0.0, %v1071
  %1073 = vmatmul.bf16.gmra.mxu0 %v958
  %v1074 = vpop.f32.mrf.mxu0
  %v1075 = vadd.f32 0.0, %v1074
  %v1076 = vpop.f32.mrf.mxu0
  %v1077 = vadd.f32 0.0, %v1076
  %1078 = vmatmul.bf16.gmra.mxu0 %v961
  %v1079 = vpop.f32.mrf.mxu0
  %v1080 = vadd.f32 0.0, %v1079
  %v1081 = vpop.f32.mrf.mxu0
  %v1082 = vadd.f32 0.0, %v1081
  %1083 = vmatmul.bf16.gmra.mxu0 %v964
  %v1084 = vpop.f32.mrf.mxu0
  %v1085 = vadd.f32 0.0, %v1084
  %v1086 = vpop.f32.mrf.mxu0
  %v1087 = vadd.f32 0.0, %v1086
  %1088 = vmatmul.bf16.gmra.mxu0 %v967
  %v1089 = vpop.f32.mrf.mxu0
  %v1090 = vadd.f32 0.0, %v1089
  %v1091 = vpop.f32.mrf.mxu0
  %v1092 = vadd.f32 0.0, %v1091
  %1093 = vmatmul.bf16.gmra.mxu0 %v970
  %v1094 = vpop.f32.mrf.mxu0
  %v1095 = vadd.f32 0.0, %v1094
  %v1096 = vpop.f32.mrf.mxu0
  %v1097 = vadd.f32 0.0, %v1096
  %1098 = vmatmul.bf16.gmra.mxu0 %v973
  %v1099 = vpop.f32.mrf.mxu0
  %v1100 = vadd.f32 0.0, %v1099
  %v1101 = vpop.f32.mrf.mxu0
  %v1102 = vadd.f32 0.0, %v1101
  %1103 = vmatmul.bf16.gmra.mxu0 %v976
  %v1104 = vpop.f32.mrf.mxu0
  %v1105 = vadd.f32 0.0, %v1104
  %v1106 = vpop.f32.mrf.mxu0
  %v1107 = vadd.f32 0.0, %v1106
  %1108 = vmatmul.bf16.gmra.mxu0 %v979
  %v1109 = vpop.f32.mrf.mxu0
  %v1110 = vadd.f32 0.0, %v1109
  %v1111 = vpop.f32.mrf.mxu0
  %v1112 = vadd.f32 0.0, %v1111
  %1113 = vmatmul.bf16.gmra.mxu0 %v982
  %v1114 = vpop.f32.mrf.mxu0
  %v1115 = vadd.f32 0.0, %v1114
  %v1116 = vpop.f32.mrf.mxu0
  %v1117 = vadd.f32 0.0, %v1116
  %1118 = vmatmul.bf16.gmra.mxu0 %v985
  %v1119 = vpop.f32.mrf.mxu0
  %v1120 = vadd.f32 0.0, %v1119
  %v1121 = vpop.f32.mrf.mxu0
  %v1122 = vadd.f32 0.0, %v1121
  %1123 = vmatmul.bf16.gmra.mxu0 %v988
  %v1124 = vpop.f32.mrf.mxu0
  %v1125 = vadd.f32 0.0, %v1124
  %v1126 = vpop.f32.mrf.mxu0
  %v1127 = vadd.f32 0.0, %v1126
  %1128 = vmatmul.bf16.gmra.mxu0 %v991
  %v1129 = vpop.f32.mrf.mxu0
  %v1130 = vadd.f32 0.0, %v1129
  %v1131 = vpop.f32.mrf.mxu0
  %v1132 = vadd.f32 0.0, %v1131
  %1133 = vmatmul.bf16.gmra.mxu0 %v994
  %v1134 = vpop.f32.mrf.mxu0
  %v1135 = vadd.f32 0.0, %v1134
  %v1136 = vpop.f32.mrf.mxu0
  %v1137 = vadd.f32 0.0, %v1136
  %1138 = vmatmul.bf16.gmra.mxu0 %v997
  %v1139 = vpop.f32.mrf.mxu0
  %v1140 = vadd.f32 0.0, %v1139
  %v1141 = vpop.f32.mrf.mxu0
  %v1142 = vadd.f32 0.0, %v1141
  %1143 = vmatmul.bf16.gmra.mxu0 %v1000
  %v1144 = vpop.f32.mrf.mxu0
  %v1145 = vadd.f32 0.0, %v1144
  %v1146 = vpop.f32.mrf.mxu0
  %v1147 = vadd.f32 0.0, %v1146
  %1148 = vmatmul.bf16.gmra.mxu0 %v1003
  %v1149 = vpop.f32.mrf.mxu0
  %v1150 = vadd.f32 0.0, %v1149
  %v1151 = vpop.f32.mrf.mxu0
  %v1152 = vadd.f32 0.0, %v1151
  %1153 = vmatmul.bf16.gmra.mxu0 %v1006
  %v1154 = vpop.f32.mrf.mxu0
  %v1155 = vadd.f32 0.0, %v1154
  %v1156 = vpop.f32.mrf.mxu0
  %v1157 = vadd.f32 0.0, %v1156
  %1158 = vmatmul.bf16.gmra.mxu0 %v1009
  %v1159 = vpop.f32.mrf.mxu0
  %v1160 = vadd.f32 0.0, %v1159
  %v1161 = vpop.f32.mrf.mxu0
  %v1162 = vadd.f32 0.0, %v1161
  %1163 = vmatmul.bf16.gmra.mxu0 %v1012
  %v1164 = vpop.f32.mrf.mxu0
  %v1165 = vadd.f32 0.0, %v1164
  %v1166 = vpop.f32.mrf.mxu0
  %v1167 = vadd.f32 0.0, %v1166
  %1168 = vmatmul.bf16.gmra.mxu0 %v1015
  %v1169 = vpop.f32.mrf.mxu0
  %v1170 = vadd.f32 0.0, %v1169
  %v1171 = vpop.f32.mrf.mxu0
  %v1172 = vadd.f32 0.0, %v1171
  %1173 = vmatmul.bf16.gmra.mxu0 %v1018
  %v1174 = vpop.f32.mrf.mxu0
  %v1175 = vadd.f32 0.0, %v1174
  %v1176 = vpop.f32.mrf.mxu0
  %v1177 = vadd.f32 0.0, %v1176
  %1178 = vmatmul.bf16.gmra.mxu0 %v1021
  %v1179 = vpop.f32.mrf.mxu0
  %v1180 = vadd.f32 0.0, %v1179
  %v1181 = vpop.f32.mrf.mxu0
  %v1182 = vadd.f32 0.0, %v1181
  %1183 = vmatmul.bf16.gmra.mxu0 %v1024
  %v1184 = vpop.f32.mrf.mxu0
  %v1185 = vadd.f32 0.0, %v1184
  %v1186 = vpop.f32.mrf.mxu0
  %v1187 = vadd.f32 0.0, %v1186
  %1188 = vmatmul.bf16.gmra.mxu0 %v1027
  %v1189 = vpop.f32.mrf.mxu0
  %v1190 = vadd.f32 0.0, %v1189
  %v1191 = vpop.f32.mrf.mxu0
  %v1192 = vadd.f32 0.0, %v1191
  %1193 = vmatmul.bf16.gmra.mxu0 %v1030
  %v1194 = vpop.f32.mrf.mxu0
  %v1195 = vadd.f32 0.0, %v1194
  %v1196 = vpop.f32.mrf.mxu0
  %v1197 = vadd.f32 0.0, %v1196
  %1198 = vmatmul.bf16.gmra.mxu0 %v1033
  %v1199 = vpop.f32.mrf.mxu0
  %v1200 = vadd.f32 0.0, %v1199
  %v1201 = vpop.f32.mrf.mxu0
  %v1202 = vadd.f32 0.0, %v1201
  %1203 = vmatmul.bf16.gmra.mxu0 %v1036
  %v1204 = vpop.f32.mrf.mxu0
  %v1205 = vadd.f32 0.0, %v1204
  %v1206 = vpop.f32.mrf.mxu0
  %v1207 = vadd.f32 0.0, %v1206
  %1208 = vmatmul.bf16.gmra.mxu0 %v1039
  %v1209 = vpop.f32.mrf.mxu0
  %v1210 = vadd.f32 0.0, %v1209
  %v1211 = vpop.f32.mrf.mxu0
  %v1212 = vadd.f32 0.0, %v1211
  %1213 = vdwg.mxu0
  %v1214 = vadd.f32 %v655, %v1055
  %v1215 = vadd.f32 %v656, %v1057
  %v1216 = vadd.f32 %v657, %v1060
  %v1217 = vadd.f32 %v658, %v1062
  %v1218 = vadd.f32 %v659, %v1065
  %v1219 = vadd.f32 %v660, %v1067
  %v1220 = vadd.f32 %v661, %v1070
  %v1221 = vadd.f32 %v662, %v1072
  %v1222 = vadd.f32 %v663, %v1075
  %v1223 = vadd.f32 %v664, %v1077
  %v1224 = vadd.f32 %v665, %v1080
  %v1225 = vadd.f32 %v666, %v1082
  %v1226 = vadd.f32 %v667, %v1085
  %v1227 = vadd.f32 %v668, %v1087
  %v1228 = vadd.f32 %v669, %v1090
  %v1229 = vadd.f32 %v670, %v1092
  %v1230 = vadd.f32 %v671, %v1095
  %v1231 = vadd.f32 %v672, %v1097
  %v1232 = vadd.f32 %v673, %v1100
  %v1233 = vadd.f32 %v674, %v1102
  %v1234 = vadd.f32 %v675, %v1105
  %v1235 = vadd.f32 %v676, %v1107
  %v1236 = vadd.f32 %v677, %v1110
  %v1237 = vadd.f32 %v678, %v1112
  %v1238 = vadd.f32 %v679, %v1115
  %v1239 = vadd.f32 %v680, %v1117
  %v1240 = vadd.f32 %v681, %v1120
  %v1241 = vadd.f32 %v682, %v1122
  %v1242 = vadd.f32 %v683, %v1125
  %v1243 = vadd.f32 %v684, %v1127
  %v1244 = vadd.f32 %v685, %v1130
  %v1245 = vadd.f32 %v686, %v1132
  %v1246 = vadd.f32 %v687, %v1135
  %v1247 = vadd.f32 %v688, %v1137
  %v1248 = vadd.f32 %v689, %v1140
  %v1249 = vadd.f32 %v690, %v1142
  %v1250 = vadd.f32 %v691, %v1145
  %v1251 = vadd.f32 %v692, %v1147
  %v1252 = vadd.f32 %v693, %v1150
  %v1253 = vadd.f32 %v694, %v1152
  %v1254 = vadd.f32 %v695, %v1155
  %v1255 = vadd.f32 %v696, %v1157
  %v1256 = vadd.f32 %v697, %v1160
  %v1257 = vadd.f32 %v698, %v1162
  %v1258 = vadd.f32 %v699, %v1165
  %v1259 = vadd.f32 %v700, %v1167
  %v1260 = vadd.f32 %v701, %v1170
  %v1261 = vadd.f32 %v702, %v1172
  %v1262 = vadd.f32 %v703, %v1175
  %v1263 = vadd.f32 %v704, %v1177
  %v1264 = vadd.f32 %v705, %v1180
  %v1265 = vadd.f32 %v706, %v1182
  %v1266 = vadd.f32 %v707, %v1185
  %v1267 = vadd.f32 %v708, %v1187
  %v1268 = vadd.f32 %v709, %v1190
  %v1269 = vadd.f32 %v710, %v1192
  %v1270 = vadd.f32 %v711, %v1195
  %v1271 = vadd.f32 %v712, %v1197
  %v1272 = vadd.f32 %v713, %v1200
  %v1273 = vadd.f32 %v714, %v1202
  %v1274 = vadd.f32 %v715, %v1205
  %v1275 = vadd.f32 %v716, %v1207
  %v1276 = vadd.f32 %v717, %v1210
  %v1277 = vadd.f32 %v718, %v1212
  %vm1278 = vcmask 130048
  %1279 = vst.msk [vmem:[%s6] sm:$0xff] %vm1278, %v1214
  %1280 = vst.msk [vmem:[%s6 + $0x8] sm:$0xff] %vm1278, %v1215
  %1281 = vst.msk [vmem:[%s6 + $0x10] sm:$0xff] %vm1278, %v1216
  %1282 = vst.msk [vmem:[%s6 + $0x18] sm:$0xff] %vm1278, %v1217
  %1283 = vst.msk [vmem:[%s6 + $0x20] sm:$0xff] %vm1278, %v1218
  %1284 = vst.msk [vmem:[%s6 + $0x28] sm:$0xff] %vm1278, %v1219
  %1285 = vst.msk [vmem:[%s6 + $0x30] sm:$0xff] %vm1278, %v1220
  %1286 = vst.msk [vmem:[%s6 + $0x38] sm:$0xff] %vm1278, %v1221
  %1287 = vst.msk [vmem:[%s6 + $0x40] sm:$0xff] %vm1278, %v1222
  %1288 = vst.msk [vmem:[%s6 + $0x48] sm:$0xff] %vm1278, %v1223
  %1289 = vst.msk [vmem:[%s6 + $0x50] sm:$0xff] %vm1278, %v1224
  %1290 = vst.msk [vmem:[%s6 + $0x58] sm:$0xff] %vm1278, %v1225
  %1291 = vst.msk [vmem:[%s6 + $0x60] sm:$0xff] %vm1278, %v1226
  %1292 = vst.msk [vmem:[%s6 + $0x68] sm:$0xff] %vm1278, %v1227
  %1293 = vst.msk [vmem:[%s6 + $0x70] sm:$0xff] %vm1278, %v1228
  %1294 = vst.msk [vmem:[%s6 + $0x78] sm:$0xff] %vm1278, %v1229
  %1295 = vst.msk [vmem:[%s6 + $0x80] sm:$0xff] %vm1278, %v1230
  %1296 = vst.msk [vmem:[%s6 + $0x88] sm:$0xff] %vm1278, %v1231
  %1297 = vst.msk [vmem:[%s6 + $0x90] sm:$0xff] %vm1278, %v1232
  %1298 = vst.msk [vmem:[%s6 + $0x98] sm:$0xff] %vm1278, %v1233
  %1299 = vst.msk [vmem:[%s6 + $0xa0] sm:$0xff] %vm1278, %v1234
  %1300 = vst.msk [vmem:[%s6 + $0xa8] sm:$0xff] %vm1278, %v1235
  %1301 = vst.msk [vmem:[%s6 + $0xb0] sm:$0xff] %vm1278, %v1236
  %1302 = vst.msk [vmem:[%s6 + $0xb8] sm:$0xff] %vm1278, %v1237
  %1303 = vst.msk [vmem:[%s6 + $0xc0] sm:$0xff] %vm1278, %v1238
  %1304 = vst.msk [vmem:[%s6 + $0xc8] sm:$0xff] %vm1278, %v1239
  %1305 = vst.msk [vmem:[%s6 + $0xd0] sm:$0xff] %vm1278, %v1240
  %1306 = vst.msk [vmem:[%s6 + $0xd8] sm:$0xff] %vm1278, %v1241
  %1307 = vst.msk [vmem:[%s6 + $0xe0] sm:$0xff] %vm1278, %v1242
  %1308 = vst.msk [vmem:[%s6 + $0xe8] sm:$0xff] %vm1278, %v1243
  %1309 = vst.msk [vmem:[%s6 + $0xf0] sm:$0xff] %vm1278, %v1244
  %1310 = vst.msk [vmem:[%s6 + $0xf8] sm:$0xff] %vm1278, %v1245
  %1311 = vst.msk [vmem:[%s6 + $0x100] sm:$0xff] %vm1278, %v1246
  %1312 = vst.msk [vmem:[%s6 + $0x108] sm:$0xff] %vm1278, %v1247
  %1313 = vst.msk [vmem:[%s6 + $0x110] sm:$0xff] %vm1278, %v1248
  %1314 = vst.msk [vmem:[%s6 + $0x118] sm:$0xff] %vm1278, %v1249
  %1315 = vst.msk [vmem:[%s6 + $0x120] sm:$0xff] %vm1278, %v1250
  %1316 = vst.msk [vmem:[%s6 + $0x128] sm:$0xff] %vm1278, %v1251
  %1317 = vst.msk [vmem:[%s6 + $0x130] sm:$0xff] %vm1278, %v1252
  %1318 = vst.msk [vmem:[%s6 + $0x138] sm:$0xff] %vm1278, %v1253
  %1319 = vst.msk [vmem:[%s6 + $0x140] sm:$0xff] %vm1278, %v1254
  %1320 = vst.msk [vmem:[%s6 + $0x148] sm:$0xff] %vm1278, %v1255
  %1321 = vst.msk [vmem:[%s6 + $0x150] sm:$0xff] %vm1278, %v1256
  %1322 = vst.msk [vmem:[%s6 + $0x158] sm:$0xff] %vm1278, %v1257
  %1323 = vst.msk [vmem:[%s6 + $0x160] sm:$0xff] %vm1278, %v1258
  %1324 = vst.msk [vmem:[%s6 + $0x168] sm:$0xff] %vm1278, %v1259
  %1325 = vst.msk [vmem:[%s6 + $0x170] sm:$0xff] %vm1278, %v1260
  %1326 = vst.msk [vmem:[%s6 + $0x178] sm:$0xff] %vm1278, %v1261
  %1327 = vst.msk [vmem:[%s6 + $0x180] sm:$0xff] %vm1278, %v1262
  %1328 = vst.msk [vmem:[%s6 + $0x188] sm:$0xff] %vm1278, %v1263
  %1329 = vst.msk [vmem:[%s6 + $0x190] sm:$0xff] %vm1278, %v1264
  %1330 = vst.msk [vmem:[%s6 + $0x198] sm:$0xff] %vm1278, %v1265
  %1331 = vst.msk [vmem:[%s6 + $0x1a0] sm:$0xff] %vm1278, %v1266
  %1332 = vst.msk [vmem:[%s6 + $0x1a8] sm:$0xff] %vm1278, %v1267
  %1333 = vst.msk [vmem:[%s6 + $0x1b0] sm:$0xff] %vm1278, %v1268
  %1334 = vst.msk [vmem:[%s6 + $0x1b8] sm:$0xff] %vm1278, %v1269
  %1335 = vst.msk [vmem:[%s6 + $0x1c0] sm:$0xff] %vm1278, %v1270
  %1336 = vst.msk [vmem:[%s6 + $0x1c8] sm:$0xff] %vm1278, %v1271
  %1337 = vst.msk [vmem:[%s6 + $0x1d0] sm:$0xff] %vm1278, %v1272
  %1338 = vst.msk [vmem:[%s6 + $0x1d8] sm:$0xff] %vm1278, %v1273
  %1339 = vst.msk [vmem:[%s6 + $0x1e0] sm:$0xff] %vm1278, %v1274
  %1340 = vst.msk [vmem:[%s6 + $0x1e8] sm:$0xff] %vm1278, %v1275
  %1341 = vst.msk [vmem:[%s6 + $0x1f0] sm:$0xff] %vm1278, %v1276
  %1342 = vst.msk [vmem:[%s6 + $0x1f8] sm:$0xff] %vm1278, %v1277
  // Predicated region
  $region26: #{_lambda_.5} parent=0 // pred_check
    _
  $region27: #{_lambda_.5} parent=0 // pred_check_branch
    %1344 = sbr.rel (0) target = $region29
  $region28: #{_lambda_.5} parent=0 // pred_region
    _
  $region29: #{_lambda_.5} parent=0 // pred_fallthru
    _
  // Predicated region
  $region30: #{_lambda_.5} parent=0 // pred_check
    _
  $region31: #{_lambda_.5} parent=0 // pred_check_branch
    %1346 = sbr.rel (0) target = $region33
  $region32: #{_lambda_.5} parent=0 // pred_region
    _
  $region33: #{_lambda_.5} parent=0 // pred_fallthru
    _

// kernel: _lambda_.4
$region0: #{_lambda_.4}
  #allocation0 [shape = 'u32[]', space=smem, size = 0x4, offset = 0x4, fixed_abs, tag = 'smem constant byte address 0x4 - core index']
  #allocation1 [shape = 'u32[72,128]{1,0:T(1,128)}', space=vmem, size = 0x9000, scoped, tag = 'internal scratch']
  %s0 = inlined_call_operand.vmem [shape: bf16[2,18,18,4], index: 0, kind: input, shape index: {}]
  %s1 = inlined_call_operand.vmem [shape: bf16[3,12,4], index: 1, kind: input, shape index: {}]
  %s2 = inlined_call_operand.vmem [shape: f32[1,4], index: 2, kind: input, shape index: {}]
  %s3 = inlined_call_operand.vmem [shape: f32[1,4], index: 3, kind: input, shape index: {}]
  %s4 = inlined_call_operand.vmem [shape: bf16[2,16,16,4], index: 4, kind: output, shape index: {}]
  %s5 = sld [smem:[#allocation0]]
  $region49: #{_lambda_.4} parent=0
    _
  %s7 = ssub.s32 1, %s5
  %s8 = scalar_select 0, %s7, %s5
  loop: start=0, step=1, limit=4
  $region2: #{_lambda_.4} parent=0 // loop_pre_header
    _
  $region3: #{_lambda_.4} parent=0 // loop_header
    %s10 = sphi 0, %s14
    %p11 = scmp.ge.s32.totalorder %s10, 4
    %s17 = sphi 0, %s29
    %s18 = sphi 0, %s25
    %s19 = sphi 0, %s17
    %s20 = sphi 0, %s18
    %s21 = sphi 0, %s19
    %s22 = sphi 0, %s20
    %s32 = sphi 0, %s34
    %s35 = sphi 0, %s32
    %s36 = sphi 0, %s35
    %s52 = sphi 0, %s36
    %s56 = sphi 0, %s56
    %s58 = sphi 0, %s56
    %s59 = sphi 0, %s58
    %s73 = sphi 0, %s59
    %s77 = sphi 0, %s77
    %s79 = sphi 0, %s77
    %s80 = sphi 0, %s79
    %s94 = sphi 0, %s80
    %s98 = sphi 0, %s98
    %s100 = sphi 0, %s98
    %s101 = sphi 0, %s100
    %s115 = sphi 0, %s101
    %s123 = sphi 0, %s125
    %s126 = sphi 0, %s123
    %s127 = sphi 0, %s126
    %s143 = sphi 0, %s127
  $region4: #{_lambda_.4} parent=0 // loop_header_branch
    %13 = sbr.rel (%p11) target = $region8
  $region5: #{_lambda_.4} parent=0 // loop_body
    %s15 = ssub.s32 %s10, 1
    %s16 = ssub.s32 %s10, 2
    %s23 = sadd.s32 1, %s18
    %p24 = scmp.ge.s32.totalorder %s23, 1
    %s25 = scalar_select %p24, 0, %s23
    %s26 = sadd.s32 1, %s17
    %s27 = scalar_select %p24, %s26, %s17
    %p28 = scmp.ge.s32.totalorder %s27, 2
    %s29 = scalar_select %p28, 0, %s27
    %s30 = ssub.s32 %s17, %s29
    %p31 = scmp.eq.s32.totalorder %s30, 0
    %s33 = sadd.s32 %s32, 1
    %s34 = scalar_select %p31, %s32, %s33
    %p37 = pneg %p31
    %p38 = scmp.eq.s32.totalorder %s10, 1
    %p39 = por %p37, %p38
    %p40 = scmp.ne.s32.totalorder %s32, %s35
    %p41 = scmp.eq.s32.totalorder %s10, 0
    %p42 = por %p40, %p41
    %p43 = scmp.ne.s32.totalorder %s32, %s35
    %p44 = scmp.eq.s32.totalorder %s15, 1
    %p45 = por %p43, %p44
    %p46 = scmp.ne.s32.totalorder %s35, %s36
    %p47 = scmp.eq.s32.totalorder %s15, 0
    %p48 = por %p46, %p47
    %p49 = scmp.ne.s32.totalorder %s35, %s36
    %p50 = scmp.eq.s32.totalorder %s16, 1
    %p51 = por %p49, %p50
    %p53 = scmp.ne.s32.totalorder %s36, %s52
    %p54 = scmp.eq.s32.totalorder %s16, 0
    %p55 = por %p53, %p54
    %s57 = sadd.s32 %s56, 1
    %p60 = scmp.eq.s32.totalorder %s10, 1
    %p61 = scmp.ne.s32.totalorder %s56, %s58
    %p62 = scmp.eq.s32.totalorder %s10, 0
    %p63 = por %p61, %p62
    %p64 = scmp.ne.s32.totalorder %s56, %s58
    %p65 = scmp.eq.s32.totalorder %s15, 1
    %p66 = por %p64, %p65
    %p67 = scmp.ne.s32.totalorder %s58, %s59
    %p68 = scmp.eq.s32.totalorder %s15, 0
    %p69 = por %p67, %p68
    %p70 = scmp.ne.s32.totalorder %s58, %s59
    %p71 = scmp.eq.s32.totalorder %s16, 1
    %p72 = por %p70, %p71
    %p74 = scmp.ne.s32.totalorder %s59, %s73
    %p75 = scmp.eq.s32.totalorder %s16, 0
    %p76 = por %p74, %p75
    %s78 = sadd.s32 %s77, 1
    %p81 = scmp.eq.s32.totalorder %s10, 1
    %p82 = scmp.ne.s32.totalorder %s77, %s79
    %p83 = scmp.eq.s32.totalorder %s10, 0
    %p84 = por %p82, %p83
    %p85 = scmp.ne.s32.totalorder %s77, %s79
    %p86 = scmp.eq.s32.totalorder %s15, 1
    %p87 = por %p85, %p86
    %p88 = scmp.ne.s32.totalorder %s79, %s80
    %p89 = scmp.eq.s32.totalorder %s15, 0
    %p90 = por %p88, %p89
    %p91 = scmp.ne.s32.totalorder %s79, %s80
    %p92 = scmp.eq.s32.totalorder %s16, 1
    %p93 = por %p91, %p92
    %p95 = scmp.ne.s32.totalorder %s80, %s94
    %p96 = scmp.eq.s32.totalorder %s16, 0
    %p97 = por %p95, %p96
    %s99 = sadd.s32 %s98, 1
    %p102 = scmp.eq.s32.totalorder %s10, 1
    %p103 = scmp.ne.s32.totalorder %s98, %s100
    %p104 = scmp.eq.s32.totalorder %s10, 0
    %p105 = por %p103, %p104
    %p106 = scmp.ne.s32.totalorder %s98, %s100
    %p107 = scmp.eq.s32.totalorder %s15, 1
    %p108 = por %p106, %p107
    %p109 = scmp.ne.s32.totalorder %s100, %s101
    %p110 = scmp.eq.s32.totalorder %s15, 0
    %p111 = por %p109, %p110
    %p112 = scmp.ne.s32.totalorder %s100, %s101
    %p113 = scmp.eq.s32.totalorder %s16, 1
    %p114 = por %p112, %p113
    %p116 = scmp.ne.s32.totalorder %s101, %s115
    %p117 = scmp.eq.s32.totalorder %s16, 0
    %p118 = por %p116, %p117
    %s119 = ssub.s32 %s17, %s29
    %s120 = ssub.s32 %s18, %s25
    %s121 = sor.u32 %s119, %s120
    %p122 = scmp.eq.s32.totalorder %s121, 0
    %s124 = sadd.s32 %s123, 1
    %s125 = scalar_select %p122, %s123, %s124
    %p128 = pneg %p122
    %p129 = scmp.eq.s32.totalorder %s10, 1
    %p130 = por %p128, %p129
    %p131 = scmp.ne.s32.totalorder %s123, %s126
    %p132 = scmp.eq.s32.totalorder %s10, 0
    %p133 = por %p131, %p132
    %p134 = scmp.ne.s32.totalorder %s123, %s126
    %p135 = scmp.eq.s32.totalorder %s15, 1
    %p136 = por %p134, %p135
    %p137 = scmp.ne.s32.totalorder %s126, %s127
    %p138 = scmp.eq.s32.totalorder %s15, 0
    %p139 = por %p137, %p138
    %p140 = scmp.ne.s32.totalorder %s126, %s127
    %p141 = scmp.eq.s32.totalorder %s16, 1
    %p142 = por %p140, %p141
    %p144 = scmp.ne.s32.totalorder %s127, %s143
    %p145 = scmp.eq.s32.totalorder %s16, 0
    %p146 = por %p144, %p145
    %p147 = scmp.le.s32.totalorder 1, %s10
    %p148 = scmp.lt.s32.totalorder %s10, 3
    %p149 = pnand %p147, %p148
    %p150 = pneg %p149
    // Predicated region
    $region9: #{_lambda_.4} parent=5 // pred_check
      _
    $region10: #{_lambda_.4} parent=5 // pred_check_branch
      %152 = sbr.rel (%p149) target = $region12
    $region11: #{_lambda_.4} parent=5 // pred_region
      %s153 = ssub.s32 %s10, 1
      // Predicated region
      $region13: #{_lambda_.4} parent=11 // pred_check
        %p154 = pneg %p69
      $region14: #{_lambda_.4} parent=11 // pred_check_branch
        %156 = sbr.rel (%p154) target = $region16
      $region15: #{_lambda_.4} parent=11 // pred_region
        _
      $region16: #{_lambda_.4} parent=11 // pred_fallthru
        _
      // Predicated region
      $region17: #{_lambda_.4} parent=11 // pred_check
        %p157 = pneg %p90
      $region18: #{_lambda_.4} parent=11 // pred_check_branch
        %159 = sbr.rel (%p157) target = $region20
      $region19: #{_lambda_.4} parent=11 // pred_region
        _
      $region20: #{_lambda_.4} parent=11 // pred_fallthru
        _
      // Predicated region
      $region21: #{_lambda_.4} parent=11 // pred_check
        %p160 = pneg %p111
      $region22: #{_lambda_.4} parent=11 // pred_check_branch
        %162 = sbr.rel (%p160) target = $region24
      $region23: #{_lambda_.4} parent=11 // pred_region
        _
      $region24: #{_lambda_.4} parent=11 // pred_fallthru
        _
    $region12: #{_lambda_.4} parent=5 // pred_fallthru
      _
    %p163 = scmp.lt.s32.totalorder %s10, 2
    // Predicated region
    $region25: #{_lambda_.4} parent=5 // pred_check
      %p164 = pneg %p163
    $region26: #{_lambda_.4} parent=5 // pred_check_branch
      %166 = sbr.rel (%p164) target = $region28
    $region27: #{_lambda_.4} parent=5 // pred_region
      // Predicated region
      $region29: #{_lambda_.4} parent=27 // pred_check
        %p167 = pneg %p42
      $region30: #{_lambda_.4} parent=27 // pred_check_branch
        %169 = sbr.rel (%p167) target = $region32
      $region31: #{_lambda_.4} parent=27 // pred_region
        %p170 = scmp.lt.s32.totalorder %s17, 1
        %s171 = scalar_select %p170, %s17, 1
        %s172 = smul.addr %s171, 54
        %s173 = smul.addr %s172, 4
        %s174 = scalar_lea.vmem %s0, %s173
      $region32: #{_lambda_.4} parent=27 // pred_fallthru
        _
    $region28: #{_lambda_.4} parent=5 // pred_fallthru
      _
    %p175 = scmp.le.s32.totalorder 1, %s10
    %p176 = scmp.lt.s32.totalorder %s10, 3
    %p177 = pnand %p175, %p176
    %p178 = pneg %p177
    // Predicated region
    $region33: #{_lambda_.4} parent=5 // pred_check
      _
    $region34: #{_lambda_.4} parent=5 // pred_check_branch
      %180 = sbr.rel (%p177) target = $region36
    $region35: #{_lambda_.4} parent=5 // pred_region
      %s181 = ssub.s32 %s10, 1
      %p182 = scmp.lt.s32.totalorder %s19, 1
      %s183 = scalar_select %p182, %s19, 1
      %s184 = smul.addr %s183, 54
      %s185 = smul.addr %s184, 4
      %s186 = scalar_lea.vmem %s0, %s185
      %p187 = pneg %p48
      %p188 = pneg %p45
      %p189 = pneg %p69
      %p190 = pneg %p66
      %p191 = pneg %p90
      %p192 = pneg %p87
      %p193 = pneg %p111
      %p194 = pneg %p108
      %p195 = pneg %p139
      %p196 = pneg %p136
      %s197 = smul.u32 16, %s20
      %p198 = scmp.lt.s32.totalorder %s19, 1
      %s199 = scalar_select %p198, %s19, 1
      %p200 = scmp.lt.s32.totalorder %s197, 15
      %s201 = scalar_select %p200, %s197, 15
      %s202 = smul.addr %s201, 2
      %s203 = smul.addr %s199, 32
      %s204 = sadd.s32 %s202, %s203
      %s205 = smul.addr %s204, 4
      %s206 = scalar_lea.vmem %s4, %s205
      %p207 = scmp.lt.s32.totalorder %s19, 1
      %s208 = scalar_select %p207, %s19, 1
      %s209 = smul.addr %s208, 54
      %s210 = smul.addr %s209, 4
      %s211 = scalar_lea.vmem %s0, %s210
      %s212 = smul.u32 16, %s20
      %p213 = scmp.lt.s32.totalorder %s19, 1
      %s214 = scalar_select %p213, %s19, 1
      %p215 = scmp.lt.s32.totalorder %s212, 15
      %s216 = scalar_select %p215, %s212, 15
      %s217 = smul.addr %s216, 2
      %s218 = smul.addr %s214, 32
      %s219 = sadd.s32 %s217, %s218
      %s220 = smul.addr %s219, 4
      %s221 = scalar_lea.vmem %s4, %s220
      %s222 = smul.u32 16, %s20
      %s224 = smul.u32 %s20, 16
      %s225 = smul.u32 %s224, 3
      %s226 = smul.addr %s225, 4
      %s227 = scalar_lea.vmem %s211, %s226
      %v228 = vld [vmem:[%s227] sm:$0xf]
      %v229 = vld [vmem:[%s227 + $0x4] sm:$0xf]
      %v230 = vld [vmem:[%s227 + $0x8] sm:$0x1]
      %v231 = vld [vmem:[%s227 + $0xc] sm:$0xf]
      %v232 = vld [vmem:[%s227 + $0x10] sm:$0xf]
      %v233 = vld [vmem:[%s227 + $0x14] sm:$0x1]
      %v234 = vld [vmem:[%s227 + $0x18] sm:$0xf]
      %v235 = vld [vmem:[%s227 + $0x1c] sm:$0xf]
      %v236 = vld [vmem:[%s227 + $0x20] sm:$0x1]
      %v237 = vld [vmem:[%s227 + $0x24] sm:$0xf]
      %v238 = vld [vmem:[%s227 + $0x28] sm:$0xf]
      %v239 = vld [vmem:[%s227 + $0x2c] sm:$0x1]
      %v240 = vld [vmem:[%s227 + $0x30] sm:$0xf]
      %v241 = vld [vmem:[%s227 + $0x34] sm:$0xf]
      %v242 = vld [vmem:[%s227 + $0x38] sm:$0x1]
      %v243 = vld [vmem:[%s227 + $0x3c] sm:$0xf]
      %v244 = vld [vmem:[%s227 + $0x40] sm:$0xf]
      %v245 = vld [vmem:[%s227 + $0x44] sm:$0x1]
      %v246 = vld [vmem:[%s227 + $0x48] sm:$0xf]
      %v247 = vld [vmem:[%s227 + $0x4c] sm:$0xf]
      %v248 = vld [vmem:[%s227 + $0x50] sm:$0x1]
      %v249 = vld [vmem:[%s227 + $0x54] sm:$0xf]
      %v250 = vld [vmem:[%s227 + $0x58] sm:$0xf]
      %v251 = vld [vmem:[%s227 + $0x5c] sm:$0x1]
      %v252 = vld [vmem:[%s227 + $0x60] sm:$0xf]
      %v253 = vld [vmem:[%s227 + $0x64] sm:$0xf]
      %v254 = vld [vmem:[%s227 + $0x68] sm:$0x1]
      %v255 = vld [vmem:[%s227 + $0x6c] sm:$0xf]
      %v256 = vld [vmem:[%s227 + $0x70] sm:$0xf]
      %v257 = vld [vmem:[%s227 + $0x74] sm:$0x1]
      %v258 = vld [vmem:[%s227 + $0x78] sm:$0xf]
      %v259 = vld [vmem:[%s227 + $0x7c] sm:$0xf]
      %v260 = vld [vmem:[%s227 + $0x80] sm:$0x1]
      %v261 = vld [vmem:[%s227 + $0x84] sm:$0xf]
      %v262 = vld [vmem:[%s227 + $0x88] sm:$0xf]
      %v263 = vld [vmem:[%s227 + $0x8c] sm:$0x1]
      %v264 = vld [vmem:[%s227 + $0x90] sm:$0xf]
      %v265 = vld [vmem:[%s227 + $0x94] sm:$0xf]
      %v266 = vld [vmem:[%s227 + $0x98] sm:$0x1]
      %v267 = vld [vmem:[%s227 + $0x9c] sm:$0xf]
      %v268 = vld [vmem:[%s227 + $0xa0] sm:$0xf]
      %v269 = vld [vmem:[%s227 + $0xa4] sm:$0x1]
      %v270 = vld [vmem:[%s227 + $0xa8] sm:$0xf]
      %v271 = vld [vmem:[%s227 + $0xac] sm:$0xf]
      %v272 = vld [vmem:[%s227 + $0xb0] sm:$0x1]
      %v273 = vld [vmem:[%s227 + $0xb4] sm:$0xf]
      %v274 = vld [vmem:[%s227 + $0xb8] sm:$0xf]
      %v275 = vld [vmem:[%s227 + $0xbc] sm:$0x1]
      %v276 = vld [vmem:[%s227 + $0xc0] sm:$0xf]
      %v277 = vld [vmem:[%s227 + $0xc4] sm:$0xf]
      %v278 = vld [vmem:[%s227 + $0xc8] sm:$0x1]
      %v279 = vld [vmem:[%s227 + $0xcc] sm:$0xf]
      %v280 = vld [vmem:[%s227 + $0xd0] sm:$0xf]
      %v281 = vld [vmem:[%s227 + $0xd4] sm:$0x1]
      %v330 = vunpack.c.l.b16 %v228
      %v331 = vunpack.c.l.b16 %v229
      %v332 = vunpack.c.l.b16 %v230
      %v333 = vunpack.c.l.b16 %v231
      %v334 = vunpack.c.l.b16 %v232
      %v335 = vunpack.c.l.b16 %v233
      %v336 = vunpack.c.l.b16 %v234
      %v337 = vunpack.c.l.b16 %v235
      %v338 = vunpack.c.l.b16 %v236
      %v339 = vunpack.c.l.b16 %v237
      %v340 = vunpack.c.l.b16 %v238
      %v341 = vunpack.c.l.b16 %v239
      %v342 = vunpack.c.l.b16 %v240
      %v343 = vunpack.c.l.b16 %v241
      %v344 = vunpack.c.l.b16 %v242
      %v345 = vunpack.c.l.b16 %v243
      %v346 = vunpack.c.l.b16 %v244
      %v347 = vunpack.c.l.b16 %v245
      %v348 = vunpack.c.l.b16 %v246
      %v349 = vunpack.c.l.b16 %v247
      %v350 = vunpack.c.l.b16 %v248
      %v351 = vunpack.c.l.b16 %v249
      %v352 = vunpack.c.l.b16 %v250
      %v353 = vunpack.c.l.b16 %v251
      %v354 = vunpack.c.l.b16 %v252
      %v355 = vunpack.c.l.b16 %v253
      %v356 = vunpack.c.l.b16 %v254
      %v357 = vunpack.c.l.b16 %v255
      %v358 = vunpack.c.l.b16 %v256
      %v359 = vunpack.c.l.b16 %v257
      %v360 = vunpack.c.l.b16 %v258
      %v361 = vunpack.c.l.b16 %v259
      %v362 = vunpack.c.l.b16 %v260
      %v363 = vunpack.c.l.b16 %v261
      %v364 = vunpack.c.l.b16 %v262
      %v365 = vunpack.c.l.b16 %v263
      %v366 = vunpack.c.l.b16 %v264
      %v367 = vunpack.c.l.b16 %v265
      %v368 = vunpack.c.l.b16 %v266
      %v369 = vunpack.c.l.b16 %v267
      %v370 = vunpack.c.l.b16 %v268
      %v371 = vunpack.c.l.b16 %v269
      %v372 = vunpack.c.l.b16 %v270
      %v373 = vunpack.c.l.b16 %v271
      %v374 = vunpack.c.l.b16 %v272
      %v375 = vunpack.c.l.b16 %v273
      %v376 = vunpack.c.l.b16 %v274
      %v377 = vunpack.c.l.b16 %v275
      %v378 = vpack.c.b16 %v331, %v330
      %v379 = vpack.c.b16 %v332, %v332
      %v380 = vpack.c.b16 %v334, %v333
      %v381 = vpack.c.b16 %v335, %v335
      %v382 = vpack.c.b16 %v337, %v336
      %v383 = vpack.c.b16 %v338, %v338
      %v384 = vpack.c.b16 %v340, %v339
      %v385 = vpack.c.b16 %v341, %v341
      %v386 = vpack.c.b16 %v343, %v342
      %v387 = vpack.c.b16 %v344, %v344
      %v388 = vpack.c.b16 %v346, %v345
      %v389 = vpack.c.b16 %v347, %v347
      %v390 = vpack.c.b16 %v349, %v348
      %v391 = vpack.c.b16 %v350, %v350
      %v392 = vpack.c.b16 %v352, %v351
      %v393 = vpack.c.b16 %v353, %v353
      %v394 = vpack.c.b16 %v355, %v354
      %v395 = vpack.c.b16 %v356, %v356
      %v396 = vpack.c.b16 %v358, %v357
      %v397 = vpack.c.b16 %v359, %v359
      %v398 = vpack.c.b16 %v361, %v360
      %v399 = vpack.c.b16 %v362, %v362
      %v400 = vpack.c.b16 %v364, %v363
      %v401 = vpack.c.b16 %v365, %v365
      %v402 = vpack.c.b16 %v367, %v366
      %v403 = vpack.c.b16 %v368, %v368
      %v404 = vpack.c.b16 %v370, %v369
      %v405 = vpack.c.b16 %v371, %v371
      %v406 = vpack.c.b16 %v373, %v372
      %v407 = vpack.c.b16 %v374, %v374
      %v408 = vpack.c.b16 %v376, %v375
      %v409 = vpack.c.b16 %v377, %v377
      %v413 = vunpack.c.l.b16 %v276
      %v414 = vunpack.c.l.b16 %v277
      %v415 = vunpack.c.l.b16 %v278
      %v416 = vpack.c.b16 %v414, %v413
      %v417 = vpack.c.b16 %v415, %v415
      %418 = vrot.lane.b32.xlu0 %v380, 4
      %v419 = vpop.permute.xlu0 %418
      %420 = vrot.lane.b32.xlu0 %v381, 4
      %v421 = vpop.permute.xlu0 %420
      %422 = vrot.lane.b32.xlu0 %v382, 4
      %v423 = vpop.permute.xlu0 %422
      %424 = vrot.lane.b32.xlu0 %v383, 4
      %v425 = vpop.permute.xlu0 %424
      %426 = vrot.lane.b32.xlu0 %v384, 4
      %v427 = vpop.permute.xlu0 %426
      %428 = vrot.lane.b32.xlu0 %v385, 4
      %v429 = vpop.permute.xlu0 %428
      %430 = vrot.lane.b32.xlu0 %v386, 4
      %v431 = vpop.permute.xlu0 %430
      %432 = vrot.lane.b32.xlu0 %v387, 4
      %v433 = vpop.permute.xlu0 %432
      %434 = vrot.lane.b32.xlu0 %v388, 4
      %v435 = vpop.permute.xlu0 %434
      %436 = vrot.lane.b32.xlu0 %v389, 4
      %v437 = vpop.permute.xlu0 %436
      %438 = vrot.lane.b32.xlu0 %v390, 4
      %v439 = vpop.permute.xlu0 %438
      %440 = vrot.lane.b32.xlu0 %v391, 4
      %v441 = vpop.permute.xlu0 %440
      %442 = vrot.lane.b32.xlu0 %v392, 4
      %v443 = vpop.permute.xlu0 %442
      %444 = vrot.lane.b32.xlu0 %v393, 4
      %v445 = vpop.permute.xlu0 %444
      %446 = vrot.lane.b32.xlu0 %v394, 4
      %v447 = vpop.permute.xlu0 %446
      %448 = vrot.lane.b32.xlu0 %v395, 4
      %v449 = vpop.permute.xlu0 %448
      %450 = vrot.lane.b32.xlu0 %v396, 4
      %v451 = vpop.permute.xlu0 %450
      %452 = vrot.lane.b32.xlu0 %v397, 4
      %v453 = vpop.permute.xlu0 %452
      %454 = vrot.lane.b32.xlu0 %v398, 4
      %v455 = vpop.permute.xlu0 %454
      %456 = vrot.lane.b32.xlu0 %v399, 4
      %v457 = vpop.permute.xlu0 %456
      %458 = vrot.lane.b32.xlu0 %v400, 4
      %v459 = vpop.permute.xlu0 %458
      %460 = vrot.lane.b32.xlu0 %v401, 4
      %v461 = vpop.permute.xlu0 %460
      %462 = vrot.lane.b32.xlu0 %v402, 4
      %v463 = vpop.permute.xlu0 %462
      %464 = vrot.lane.b32.xlu0 %v403, 4
      %v465 = vpop.permute.xlu0 %464
      %466 = vrot.lane.b32.xlu0 %v404, 4
      %v467 = vpop.permute.xlu0 %466
      %468 = vrot.lane.b32.xlu0 %v405, 4
      %v469 = vpop.permute.xlu0 %468
      %470 = vrot.lane.b32.xlu0 %v406, 4
      %v471 = vpop.permute.xlu0 %470
      %472 = vrot.lane.b32.xlu0 %v407, 4
      %v473 = vpop.permute.xlu0 %472
      %474 = vrot.lane.b32.xlu0 %v408, 4
      %v475 = vpop.permute.xlu0 %474
      %476 = vrot.lane.b32.xlu0 %v409, 4
      %v477 = vpop.permute.xlu0 %476
      %478 = vrot.lane.b32.xlu0 %v416, 4
      %v479 = vpop.permute.xlu0 %478
      %480 = vrot.lane.b32.xlu0 %v417, 4
      %v481 = vpop.permute.xlu0 %480
      %v485 = vunpack.c.l.b16 %v279
      %v486 = vunpack.c.l.b16 %v280
      %v487 = vunpack.c.l.b16 %v281
      %v488 = vpack.c.b16 %v486, %v485
      %v489 = vpack.c.b16 %v487, %v487
      %490 = vrot.lane.b32.xlu0 %v382, 8
      %v491 = vpop.permute.xlu0 %490
      %492 = vrot.lane.b32.xlu0 %v383, 8
      %v493 = vpop.permute.xlu0 %492
      %494 = vrot.lane.b32.xlu0 %v384, 8
      %v495 = vpop.permute.xlu0 %494
      %496 = vrot.lane.b32.xlu0 %v385, 8
      %v497 = vpop.permute.xlu0 %496
      %498 = vrot.lane.b32.xlu0 %v386, 8
      %v499 = vpop.permute.xlu0 %498
      %500 = vrot.lane.b32.xlu0 %v387, 8
      %v501 = vpop.permute.xlu0 %500
      %502 = vrot.lane.b32.xlu0 %v388, 8
      %v503 = vpop.permute.xlu0 %502
      %504 = vrot.lane.b32.xlu0 %v389, 8
      %v505 = vpop.permute.xlu0 %504
      %506 = vrot.lane.b32.xlu0 %v390, 8
      %v507 = vpop.permute.xlu0 %506
      %508 = vrot.lane.b32.xlu0 %v391, 8
      %v509 = vpop.permute.xlu0 %508
      %510 = vrot.lane.b32.xlu0 %v392, 8
      %v511 = vpop.permute.xlu0 %510
      %512 = vrot.lane.b32.xlu0 %v393, 8
      %v513 = vpop.permute.xlu0 %512
      %514 = vrot.lane.b32.xlu0 %v394, 8
      %v515 = vpop.permute.xlu0 %514
      %516 = vrot.lane.b32.xlu0 %v395, 8
      %v517 = vpop.permute.xlu0 %516
      %518 = vrot.lane.b32.xlu0 %v396, 8
      %v519 = vpop.permute.xlu0 %518
      %520 = vrot.lane.b32.xlu0 %v397, 8
      %v521 = vpop.permute.xlu0 %520
      %522 = vrot.lane.b32.xlu0 %v398, 8
      %v523 = vpop.permute.xlu0 %522
      %524 = vrot.lane.b32.xlu0 %v399, 8
      %v525 = vpop.permute.xlu0 %524
      %526 = vrot.lane.b32.xlu0 %v400, 8
      %v527 = vpop.permute.xlu0 %526
      %528 = vrot.lane.b32.xlu0 %v401, 8
      %v529 = vpop.permute.xlu0 %528
      %530 = vrot.lane.b32.xlu0 %v402, 8
      %v531 = vpop.permute.xlu0 %530
      %532 = vrot.lane.b32.xlu0 %v403, 8
      %v533 = vpop.permute.xlu0 %532
      %534 = vrot.lane.b32.xlu0 %v404, 8
      %v535 = vpop.permute.xlu0 %534
      %536 = vrot.lane.b32.xlu0 %v405, 8
      %v537 = vpop.permute.xlu0 %536
      %538 = vrot.lane.b32.xlu0 %v406, 8
      %v539 = vpop.permute.xlu0 %538
      %540 = vrot.lane.b32.xlu0 %v407, 8
      %v541 = vpop.permute.xlu0 %540
      %542 = vrot.lane.b32.xlu0 %v408, 8
      %v543 = vpop.permute.xlu0 %542
      %544 = vrot.lane.b32.xlu0 %v409, 8
      %v545 = vpop.permute.xlu0 %544
      %546 = vrot.lane.b32.xlu0 %v416, 8
      %v547 = vpop.permute.xlu0 %546
      %548 = vrot.lane.b32.xlu0 %v417, 8
      %v549 = vpop.permute.xlu0 %548
      %550 = vrot.lane.b32.xlu0 %v488, 8
      %v551 = vpop.permute.xlu0 %550
      %552 = vrot.lane.b32.xlu0 %v489, 8
      %v553 = vpop.permute.xlu0 %552
      %vm554 = vcmask 31744
      %v557 = vsel %vm554, %v378, %v419
      %v560 = vsel %vm554, %v379, %v421
      %v563 = vsel %vm554, %v380, %v423
      %v566 = vsel %vm554, %v381, %v425
      %v569 = vsel %vm554, %v382, %v427
      %v572 = vsel %vm554, %v383, %v429
      %v575 = vsel %vm554, %v384, %v431
      %v578 = vsel %vm554, %v385, %v433
      %v581 = vsel %vm554, %v386, %v435
      %v584 = vsel %vm554, %v387, %v437
      %v587 = vsel %vm554, %v388, %v439
      %v590 = vsel %vm554, %v389, %v441
      %v593 = vsel %vm554, %v390, %v443
      %v596 = vsel %vm554, %v391, %v445
      %v599 = vsel %vm554, %v392, %v447
      %v602 = vsel %vm554, %v393, %v449
      %v605 = vsel %vm554, %v394, %v451
      %v608 = vsel %vm554, %v395, %v453
      %v611 = vsel %vm554, %v396, %v455
      %v614 = vsel %vm554, %v397, %v457
      %v617 = vsel %vm554, %v398, %v459
      %v620 = vsel %vm554, %v399, %v461
      %v623 = vsel %vm554, %v400, %v463
      %v626 = vsel %vm554, %v401, %v465
      %v629 = vsel %vm554, %v402, %v467
      %v632 = vsel %vm554, %v403, %v469
      %v635 = vsel %vm554, %v404, %v471
      %v638 = vsel %vm554, %v405, %v473
      %v641 = vsel %vm554, %v406, %v475
      %v644 = vsel %vm554, %v407, %v477
      %v647 = vsel %vm554, %v408, %v479
      %v650 = vsel %vm554, %v409, %v481
      %vm651 = vcmask 64512
      %v653 = vsel %vm651, %v557, %v491
      %v655 = vsel %vm651, %v560, %v493
      %v657 = vsel %vm651, %v563, %v495
      %v659 = vsel %vm651, %v566, %v497
      %v661 = vsel %vm651, %v569, %v499
      %v663 = vsel %vm651, %v572, %v501
      %v665 = vsel %vm651, %v575, %v503
      %v667 = vsel %vm651, %v578, %v505
      %v669 = vsel %vm651, %v581, %v507
      %v671 = vsel %vm651, %v584, %v509
      %v673 = vsel %vm651, %v587, %v511
      %v675 = vsel %vm651, %v590, %v513
      %v677 = vsel %vm651, %v593, %v515
      %v679 = vsel %vm651, %v596, %v517
      %v681 = vsel %vm651, %v599, %v519
      %v683 = vsel %vm651, %v602, %v521
      %v685 = vsel %vm651, %v605, %v523
      %v687 = vsel %vm651, %v608, %v525
      %v689 = vsel %vm651, %v611, %v527
      %v691 = vsel %vm651, %v614, %v529
      %v693 = vsel %vm651, %v617, %v531
      %v695 = vsel %vm651, %v620, %v533
      %v697 = vsel %vm651, %v623, %v535
      %v699 = vsel %vm651, %v626, %v537
      %v701 = vsel %vm651, %v629, %v539
      %v703 = vsel %vm651, %v632, %v541
      %v705 = vsel %vm651, %v635, %v543
      %v707 = vsel %vm651, %v638, %v545
      %v709 = vsel %vm651, %v641, %v547
      %v711 = vsel %vm651, %v644, %v549
      %v713 = vsel %vm651, %v647, %v551
      %v715 = vsel %vm651, %v650, %v553
      %v716 = vld [vmem:[%s1] sm:$0xf]
      %v717 = vld [vmem:[%s1 + $0x4] sm:$0x3]
      %vm718 = vsmask.f32 7424
      %v719 = vshrl.u32 %v653, 16
      %v721 = vshll.u32 %v653, 16
      %v723 = vrot.slane %v721, 1
      %v724 = vor.u32 %v719, %v723
      %v725 = vshll.u32 %v655, 16
      %v727 = vrot.slane %v725, 1
      %v728 = vsel %vm718, %v724, %v727
      %v729 = vshrl.u32 %v657, 16
      %v731 = vshll.u32 %v657, 16
      %v733 = vrot.slane %v731, 1
      %v734 = vor.u32 %v729, %v733
      %v735 = vshll.u32 %v659, 16
      %v737 = vrot.slane %v735, 1
      %v738 = vsel %vm718, %v734, %v737
      %v739 = vshrl.u32 %v661, 16
      %v741 = vshll.u32 %v661, 16
      %v743 = vrot.slane %v741, 1
      %v744 = vor.u32 %v739, %v743
      %v745 = vshll.u32 %v663, 16
      %v747 = vrot.slane %v745, 1
      %v748 = vsel %vm718, %v744, %v747
      %v749 = vshrl.u32 %v665, 16
      %v751 = vshll.u32 %v665, 16
      %v753 = vrot.slane %v751, 1
      %v754 = vor.u32 %v749, %v753
      %v755 = vshll.u32 %v667, 16
      %v757 = vrot.slane %v755, 1
      %v758 = vsel %vm718, %v754, %v757
      %v759 = vshrl.u32 %v669, 16
      %v761 = vshll.u32 %v669, 16
      %v763 = vrot.slane %v761, 1
      %v764 = vor.u32 %v759, %v763
      %v765 = vshll.u32 %v671, 16
      %v767 = vrot.slane %v765, 1
      %v768 = vsel %vm718, %v764, %v767
      %v769 = vshrl.u32 %v673, 16
      %v771 = vshll.u32 %v673, 16
      %v773 = vrot.slane %v771, 1
      %v774 = vor.u32 %v769, %v773
      %v775 = vshll.u32 %v675, 16
      %v777 = vrot.slane %v775, 1
      %v778 = vsel %vm718, %v774, %v777
      %v779 = vshrl.u32 %v677, 16
      %v781 = vshll.u32 %v677, 16
      %v783 = vrot.slane %v781, 1
      %v784 = vor.u32 %v779, %v783
      %v785 = vshll.u32 %v679, 16
      %v787 = vrot.slane %v785, 1
      %v788 = vsel %vm718, %v784, %v787
      %v789 = vshrl.u32 %v681, 16
      %v791 = vshll.u32 %v681, 16
      %v793 = vrot.slane %v791, 1
      %v794 = vor.u32 %v789, %v793
      %v795 = vshll.u32 %v683, 16
      %v797 = vrot.slane %v795, 1
      %v798 = vsel %vm718, %v794, %v797
      %v799 = vshrl.u32 %v685, 16
      %v801 = vshll.u32 %v685, 16
      %v803 = vrot.slane %v801, 1
      %v804 = vor.u32 %v799, %v803
      %v805 = vshll.u32 %v687, 16
      %v807 = vrot.slane %v805, 1
      %v808 = vsel %vm718, %v804, %v807
      %v809 = vshrl.u32 %v689, 16
      %v811 = vshll.u32 %v689, 16
      %v813 = vrot.slane %v811, 1
      %v814 = vor.u32 %v809, %v813
      %v815 = vshll.u32 %v691, 16
      %v817 = vrot.slane %v815, 1
      %v818 = vsel %vm718, %v814, %v817
      %v819 = vshrl.u32 %v693, 16
      %v821 = vshll.u32 %v693, 16
      %v823 = vrot.slane %v821, 1
      %v824 = vor.u32 %v819, %v823
      %v825 = vshll.u32 %v695, 16
      %v827 = vrot.slane %v825, 1
      %v828 = vsel %vm718, %v824, %v827
      %v829 = vshrl.u32 %v697, 16
      %v831 = vshll.u32 %v697, 16
      %v833 = vrot.slane %v831, 1
      %v834 = vor.u32 %v829, %v833
      %v835 = vshll.u32 %v699, 16
      %v837 = vrot.slane %v835, 1
      %v838 = vsel %vm718, %v834, %v837
      %v839 = vshrl.u32 %v701, 16
      %v841 = vshll.u32 %v701, 16
      %v843 = vrot.slane %v841, 1
      %v844 = vor.u32 %v839, %v843
      %v845 = vshll.u32 %v703, 16
      %v847 = vrot.slane %v845, 1
      %v848 = vsel %vm718, %v844, %v847
      %v849 = vshrl.u32 %v705, 16
      %v851 = vshll.u32 %v705, 16
      %v853 = vrot.slane %v851, 1
      %v854 = vor.u32 %v849, %v853
      %v855 = vshll.u32 %v707, 16
      %v857 = vrot.slane %v855, 1
      %v858 = vsel %vm718, %v854, %v857
      %v859 = vshrl.u32 %v709, 16
      %v861 = vshll.u32 %v709, 16
      %v863 = vrot.slane %v861, 1
      %v864 = vor.u32 %v859, %v863
      %v865 = vshll.u32 %v711, 16
      %v867 = vrot.slane %v865, 1
      %v868 = vsel %vm718, %v864, %v867
      %v869 = vshrl.u32 %v713, 16
      %v871 = vshll.u32 %v713, 16
      %v873 = vrot.slane %v871, 1
      %v874 = vor.u32 %v869, %v873
      %v875 = vshll.u32 %v715, 16
      %v877 = vrot.slane %v875, 1
      %v878 = vsel %vm718, %v874, %v877
      %s879 = scalar_lea.vmem %s1, 8
      %v880 = vld [vmem:[%s879] sm:$0xf]
      %v881 = vld [vmem:[%s879 + $0x4] sm:$0x3]
      %v884 = vunpack.c.l.b16 %v880
      %v885 = vunpack.c.l.b16 %v881
      %v886 = vpack.c.b16 %v885, %v884
      %vm887 = vcmask 97280
      %v889 = vsel %vm887, %v728, 0
      %v892 = vsel %vm887, %v738, 0
      %v895 = vsel %vm887, %v748, 0
      %v898 = vsel %vm887, %v758, 0
      %v901 = vsel %vm887, %v768, 0
      %v904 = vsel %vm887, %v778, 0
      %v907 = vsel %vm887, %v788, 0
      %v910 = vsel %vm887, %v798, 0
      %v913 = vsel %vm887, %v808, 0
      %v916 = vsel %vm887, %v818, 0
      %v919 = vsel %vm887, %v828, 0
      %v922 = vsel %vm887, %v838, 0
      %v925 = vsel %vm887, %v848, 0
      %v928 = vsel %vm887, %v858, 0
      %v931 = vsel %vm887, %v868, 0
      %v934 = vsel %vm887, %v878, 0
      %vm936 = vcmask 1045504
      %v938 = vsel %vm936, %v886, 0
      %940 = vmatpush.bf16.msra.mxu0 0
      %941 = vmatpush.bf16.msra.mxu0 0
      %942 = vmatpush.bf16.msra.mxu0 0
      %943 = vmatpush.bf16.msra.mxu0 0
      %944 = vmatpush.bf16.msra.mxu0 0
      %945 = vmatpush.bf16.msra.mxu0 0
      %946 = vmatpush.bf16.msra.mxu0 0
      %947 = vmatpush.bf16.msra.mxu0 %v938
      %948 = vmatmul.bf16.gmra.mxu0 %v889
      %v949 = vpop.f32.mrf.mxu0
      %v950 = vadd.f32 0.0, %v949
      %v951 = vpop.f32.mrf.mxu0
      %v952 = vadd.f32 0.0, %v951
      %953 = vmatmul.bf16.gmra.mxu0 %v892
      %v954 = vpop.f32.mrf.mxu0
      %v955 = vadd.f32 0.0, %v954
      %v956 = vpop.f32.mrf.mxu0
      %v957 = vadd.f32 0.0, %v956
      %958 = vmatmul.bf16.gmra.mxu0 %v895
      %v959 = vpop.f32.mrf.mxu0
      %v960 = vadd.f32 0.0, %v959
      %v961 = vpop.f32.mrf.mxu0
      %v962 = vadd.f32 0.0, %v961
      %963 = vmatmul.bf16.gmra.mxu0 %v898
      %v964 = vpop.f32.mrf.mxu0
      %v965 = vadd.f32 0.0, %v964
      %v966 = vpop.f32.mrf.mxu0
      %v967 = vadd.f32 0.0, %v966
      %968 = vmatmul.bf16.gmra.mxu0 %v901
      %v969 = vpop.f32.mrf.mxu0
      %v970 = vadd.f32 0.0, %v969
      %v971 = vpop.f32.mrf.mxu0
      %v972 = vadd.f32 0.0, %v971
      %973 = vmatmul.bf16.gmra.mxu0 %v904
      %v974 = vpop.f32.mrf.mxu0
      %v975 = vadd.f32 0.0, %v974
      %v976 = vpop.f32.mrf.mxu0
      %v977 = vadd.f32 0.0, %v976
      %978 = vmatmul.bf16.gmra.mxu0 %v907
      %v979 = vpop.f32.mrf.mxu0
      %v980 = vadd.f32 0.0, %v979
      %v981 = vpop.f32.mrf.mxu0
      %v982 = vadd.f32 0.0, %v981
      %983 = vmatmul.bf16.gmra.mxu0 %v910
      %v984 = vpop.f32.mrf.mxu0
      %v985 = vadd.f32 0.0, %v984
      %v986 = vpop.f32.mrf.mxu0
      %v987 = vadd.f32 0.0, %v986
      %988 = vmatmul.bf16.gmra.mxu0 %v913
      %v989 = vpop.f32.mrf.mxu0
      %v990 = vadd.f32 0.0, %v989
      %v991 = vpop.f32.mrf.mxu0
      %v992 = vadd.f32 0.0, %v991
      %993 = vmatmul.bf16.gmra.mxu0 %v916
      %v994 = vpop.f32.mrf.mxu0
      %v995 = vadd.f32 0.0, %v994
      %v996 = vpop.f32.mrf.mxu0
      %v997 = vadd.f32 0.0, %v996
      %998 = vmatmul.bf16.gmra.mxu0 %v919
      %v999 = vpop.f32.mrf.mxu0
      %v1000 = vadd.f32 0.0, %v999
      %v1001 = vpop.f32.mrf.mxu0
      %v1002 = vadd.f32 0.0, %v1001
      %1003 = vmatmul.bf16.gmra.mxu0 %v922
      %v1004 = vpop.f32.mrf.mxu0
      %v1005 = vadd.f32 0.0, %v1004
      %v1006 = vpop.f32.mrf.mxu0
      %v1007 = vadd.f32 0.0, %v1006
      %1008 = vmatmul.bf16.gmra.mxu0 %v925
      %v1009 = vpop.f32.mrf.mxu0
      %v1010 = vadd.f32 0.0, %v1009
      %v1011 = vpop.f32.mrf.mxu0
      %v1012 = vadd.f32 0.0, %v1011
      %1013 = vmatmul.bf16.gmra.mxu0 %v928
      %v1014 = vpop.f32.mrf.mxu0
      %v1015 = vadd.f32 0.0, %v1014
      %v1016 = vpop.f32.mrf.mxu0
      %v1017 = vadd.f32 0.0, %v1016
      %1018 = vmatmul.bf16.gmra.mxu0 %v931
      %v1019 = vpop.f32.mrf.mxu0
      %v1020 = vadd.f32 0.0, %v1019
      %v1021 = vpop.f32.mrf.mxu0
      %v1022 = vadd.f32 0.0, %v1021
      %1023 = vmatmul.bf16.gmra.mxu0 %v934
      %v1024 = vpop.f32.mrf.mxu0
      %v1025 = vadd.f32 0.0, %v1024
      %v1026 = vpop.f32.mrf.mxu0
      %v1027 = vadd.f32 0.0, %v1026
      %1028 = vdwg.mxu0
      %v1031 = vunpack.c.l.b16 %v716
      %v1032 = vunpack.c.l.b16 %v717
      %v1033 = vpack.c.b16 %v1032, %v1031
      %v1034 = vsel %vm887, %v653, 0
      %v1036 = vsel %vm887, %v657, 0
      %v1038 = vsel %vm887, %v661, 0
      %v1040 = vsel %vm887, %v665, 0
      %v1042 = vsel %vm887, %v669, 0
      %v1044 = vsel %vm887, %v673, 0
      %v1046 = vsel %vm887, %v677, 0
      %v1048 = vsel %vm887, %v681, 0
      %v1050 = vsel %vm887, %v685, 0
      %v1052 = vsel %vm887, %v689, 0
      %v1054 = vsel %vm887, %v693, 0
      %v1056 = vsel %vm887, %v697, 0
      %v1058 = vsel %vm887, %v701, 0
      %v1060 = vsel %vm887, %v705, 0
      %v1062 = vsel %vm887, %v709, 0
      %v1064 = vsel %vm887, %v713, 0
      %v1067 = vsel %vm936, %v1033, 0
      %1069 = vmatpush.bf16.msra.mxu0 0
      %1070 = vmatpush.bf16.msra.mxu0 0
      %1071 = vmatpush.bf16.msra.mxu0 0
      %1072 = vmatpush.bf16.msra.mxu0 0
      %1073 = vmatpush.bf16.msra.mxu0 0
      %1074 = vmatpush.bf16.msra.mxu0 0
      %1075 = vmatpush.bf16.msra.mxu0 0
      %1076 = vmatpush.bf16.msra.mxu0 %v1067
      %1077 = vmatmul.bf16.gmra.mxu0 %v1034
      %v1078 = vpop.f32.mrf.mxu0
      %v1079 = vadd.f32 %v950, %v1078
      %v1080 = vpop.f32.mrf.mxu0
      %v1081 = vadd.f32 %v952, %v1080
      %1082 = vmatmul.bf16.gmra.mxu0 %v1036
      %v1083 = vpop.f32.mrf.mxu0
      %v1084 = vadd.f32 %v955, %v1083
      %v1085 = vpop.f32.mrf.mxu0
      %v1086 = vadd.f32 %v957, %v1085
      %1087 = vmatmul.bf16.gmra.mxu0 %v1038
      %v1088 = vpop.f32.mrf.mxu0
      %v1089 = vadd.f32 %v960, %v1088
      %v1090 = vpop.f32.mrf.mxu0
      %v1091 = vadd.f32 %v962, %v1090
      %1092 = vmatmul.bf16.gmra.mxu0 %v1040
      %v1093 = vpop.f32.mrf.mxu0
      %v1094 = vadd.f32 %v965, %v1093
      %v1095 = vpop.f32.mrf.mxu0
      %v1096 = vadd.f32 %v967, %v1095
      %1097 = vmatmul.bf16.gmra.mxu0 %v1042
      %v1098 = vpop.f32.mrf.mxu0
      %v1099 = vadd.f32 %v970, %v1098
      %v1100 = vpop.f32.mrf.mxu0
      %v1101 = vadd.f32 %v972, %v1100
      %1102 = vmatmul.bf16.gmra.mxu0 %v1044
      %v1103 = vpop.f32.mrf.mxu0
      %v1104 = vadd.f32 %v975, %v1103
      %v1105 = vpop.f32.mrf.mxu0
      %v1106 = vadd.f32 %v977, %v1105
      %1107 = vmatmul.bf16.gmra.mxu0 %v1046
      %v1108 = vpop.f32.mrf.mxu0
      %v1109 = vadd.f32 %v980, %v1108
      %v1110 = vpop.f32.mrf.mxu0
      %v1111 = vadd.f32 %v982, %v1110
      %1112 = vmatmul.bf16.gmra.mxu0 %v1048
      %v1113 = vpop.f32.mrf.mxu0
      %v1114 = vadd.f32 %v985, %v1113
      %v1115 = vpop.f32.mrf.mxu0
      %v1116 = vadd.f32 %v987, %v1115
      %1117 = vmatmul.bf16.gmra.mxu0 %v1050
      %v1118 = vpop.f32.mrf.mxu0
      %v1119 = vadd.f32 %v990, %v1118
      %v1120 = vpop.f32.mrf.mxu0
      %v1121 = vadd.f32 %v992, %v1120
      %1122 = vmatmul.bf16.gmra.mxu0 %v1052
      %v1123 = vpop.f32.mrf.mxu0
      %v1124 = vadd.f32 %v995, %v1123
      %v1125 = vpop.f32.mrf.mxu0
      %v1126 = vadd.f32 %v997, %v1125
      %1127 = vmatmul.bf16.gmra.mxu0 %v1054
      %v1128 = vpop.f32.mrf.mxu0
      %v1129 = vadd.f32 %v1000, %v1128
      %v1130 = vpop.f32.mrf.mxu0
      %v1131 = vadd.f32 %v1002, %v1130
      %1132 = vmatmul.bf16.gmra.mxu0 %v1056
      %v1133 = vpop.f32.mrf.mxu0
      %v1134 = vadd.f32 %v1005, %v1133
      %v1135 = vpop.f32.mrf.mxu0
      %v1136 = vadd.f32 %v1007, %v1135
      %1137 = vmatmul.bf16.gmra.mxu0 %v1058
      %v1138 = vpop.f32.mrf.mxu0
      %v1139 = vadd.f32 %v1010, %v1138
      %v1140 = vpop.f32.mrf.mxu0
      %v1141 = vadd.f32 %v1012, %v1140
      %1142 = vmatmul.bf16.gmra.mxu0 %v1060
      %v1143 = vpop.f32.mrf.mxu0
      %v1144 = vadd.f32 %v1015, %v1143
      %v1145 = vpop.f32.mrf.mxu0
      %v1146 = vadd.f32 %v1017, %v1145
      %1147 = vmatmul.bf16.gmra.mxu0 %v1062
      %v1148 = vpop.f32.mrf.mxu0
      %v1149 = vadd.f32 %v1020, %v1148
      %v1150 = vpop.f32.mrf.mxu0
      %v1151 = vadd.f32 %v1022, %v1150
      %1152 = vmatmul.bf16.gmra.mxu0 %v1064
      %v1153 = vpop.f32.mrf.mxu0
      %v1154 = vadd.f32 %v1025, %v1153
      %v1155 = vpop.f32.mrf.mxu0
      %v1156 = vadd.f32 %v1027, %v1155
      %1157 = vdwg.mxu0
      %vm1190 = vcmask 1046528
      %v1191 = vrot.slane %v653, 1
      %v1192 = vrot.slane %v655, 1
      %v1193 = vsel %vm1190, %v1191, %v1192
      %v1194 = vrot.slane %v657, 1
      %v1195 = vrot.slane %v659, 1
      %v1196 = vsel %vm1190, %v1194, %v1195
      %v1197 = vrot.slane %v661, 1
      %v1198 = vrot.slane %v663, 1
      %v1199 = vsel %vm1190, %v1197, %v1198
      %v1200 = vrot.slane %v665, 1
      %v1201 = vrot.slane %v667, 1
      %v1202 = vsel %vm1190, %v1200, %v1201
      %v1203 = vrot.slane %v669, 1
      %v1204 = vrot.slane %v671, 1
      %v1205 = vsel %vm1190, %v1203, %v1204
      %v1206 = vrot.slane %v673, 1
      %v1207 = vrot.slane %v675, 1
      %v1208 = vsel %vm1190, %v1206, %v1207
      %v1209 = vrot.slane %v677, 1
      %v1210 = vrot.slane %v679, 1
      %v1211 = vsel %vm1190, %v1209, %v1210
      %v1212 = vrot.slane %v681, 1
      %v1213 = vrot.slane %v683, 1
      %v1214 = vsel %vm1190, %v1212, %v1213
      %v1215 = vrot.slane %v685, 1
      %v1216 = vrot.slane %v687, 1
      %v1217 = vsel %vm1190, %v1215, %v1216
      %v1218 = vrot.slane %v689, 1
      %v1219 = vrot.slane %v691, 1
      %v1220 = vsel %vm1190, %v1218, %v1219
      %v1221 = vrot.slane %v693, 1
      %v1222 = vrot.slane %v695, 1
      %v1223 = vsel %vm1190, %v1221, %v1222
      %v1224 = vrot.slane %v697, 1
      %v1225 = vrot.slane %v699, 1
      %v1226 = vsel %vm1190, %v1224, %v1225
      %v1227 = vrot.slane %v701, 1
      %v1228 = vrot.slane %v703, 1
      %v1229 = vsel %vm1190, %v1227, %v1228
      %v1230 = vrot.slane %v705, 1
      %v1231 = vrot.slane %v707, 1
      %v1232 = vsel %vm1190, %v1230, %v1231
      %v1233 = vrot.slane %v709, 1
      %v1234 = vrot.slane %v711, 1
      %v1235 = vsel %vm1190, %v1233, %v1234
      %v1236 = vrot.slane %v713, 1
      %v1237 = vrot.slane %v715, 1
      %v1238 = vsel %vm1190, %v1236, %v1237
      %s1239 = scalar_lea.vmem %s1, 16
      %v1240 = vld [vmem:[%s1239] sm:$0xf]
      %v1241 = vld [vmem:[%s1239 + $0x4] sm:$0x3]
      %v1244 = vunpack.c.l.b16 %v1240
      %v1245 = vunpack.c.l.b16 %v1241
      %v1246 = vpack.c.b16 %v1245, %v1244
      %v1248 = vsel %vm887, %v1193, 0
      %v1251 = vsel %vm887, %v1196, 0
      %v1254 = vsel %vm887, %v1199, 0
      %v1257 = vsel %vm887, %v1202, 0
      %v1260 = vsel %vm887, %v1205, 0
      %v1263 = vsel %vm887, %v1208, 0
      %v1266 = vsel %vm887, %v1211, 0
      %v1269 = vsel %vm887, %v1214, 0
      %v1272 = vsel %vm887, %v1217, 0
      %v1275 = vsel %vm887, %v1220, 0
      %v1278 = vsel %vm887, %v1223, 0
      %v1281 = vsel %vm887, %v1226, 0
      %v1284 = vsel %vm887, %v1229, 0
      %v1287 = vsel %vm887, %v1232, 0
      %v1290 = vsel %vm887, %v1235, 0
      %v1293 = vsel %vm887, %v1238, 0
      %v1296 = vsel %vm936, %v1246, 0
      %1298 = vmatpush.bf16.msra.mxu0 0
      %1299 = vmatpush.bf16.msra.mxu0 0
      %1300 = vmatpush.bf16.msra.mxu0 0
      %1301 = vmatpush.bf16.msra.mxu0 0
      %1302 = vmatpush.bf16.msra.mxu0 0
      %1303 = vmatpush.bf16.msra.mxu0 0
      %1304 = vmatpush.bf16.msra.mxu0 0
      %1305 = vmatpush.bf16.msra.mxu0 %v1296
      %1306 = vmatmul.bf16.gmra.mxu0 %v1248
      %v1307 = vpop.f32.mrf.mxu0
      %v1308 = vadd.f32 0.0, %v1307
      %v1309 = vpop.f32.mrf.mxu0
      %v1310 = vadd.f32 0.0, %v1309
      %1311 = vmatmul.bf16.gmra.mxu0 %v1251
      %v1312 = vpop.f32.mrf.mxu0
      %v1313 = vadd.f32 0.0, %v1312
      %v1314 = vpop.f32.mrf.mxu0
      %v1315 = vadd.f32 0.0, %v1314
      %1316 = vmatmul.bf16.gmra.mxu0 %v1254
      %v1317 = vpop.f32.mrf.mxu0
      %v1318 = vadd.f32 0.0, %v1317
      %v1319 = vpop.f32.mrf.mxu0
      %v1320 = vadd.f32 0.0, %v1319
      %1321 = vmatmul.bf16.gmra.mxu0 %v1257
      %v1322 = vpop.f32.mrf.mxu0
      %v1323 = vadd.f32 0.0, %v1322
      %v1324 = vpop.f32.mrf.mxu0
      %v1325 = vadd.f32 0.0, %v1324
      %1326 = vmatmul.bf16.gmra.mxu0 %v1260
      %v1327 = vpop.f32.mrf.mxu0
      %v1328 = vadd.f32 0.0, %v1327
      %v1329 = vpop.f32.mrf.mxu0
      %v1330 = vadd.f32 0.0, %v1329
      %1331 = vmatmul.bf16.gmra.mxu0 %v1263
      %v1332 = vpop.f32.mrf.mxu0
      %v1333 = vadd.f32 0.0, %v1332
      %v1334 = vpop.f32.mrf.mxu0
      %v1335 = vadd.f32 0.0, %v1334
      %1336 = vmatmul.bf16.gmra.mxu0 %v1266
      %v1337 = vpop.f32.mrf.mxu0
      %v1338 = vadd.f32 0.0, %v1337
      %v1339 = vpop.f32.mrf.mxu0
      %v1340 = vadd.f32 0.0, %v1339
      %1341 = vmatmul.bf16.gmra.mxu0 %v1269
      %v1342 = vpop.f32.mrf.mxu0
      %v1343 = vadd.f32 0.0, %v1342
      %v1344 = vpop.f32.mrf.mxu0
      %v1345 = vadd.f32 0.0, %v1344
      %1346 = vmatmul.bf16.gmra.mxu0 %v1272
      %v1347 = vpop.f32.mrf.mxu0
      %v1348 = vadd.f32 0.0, %v1347
      %v1349 = vpop.f32.mrf.mxu0
      %v1350 = vadd.f32 0.0, %v1349
      %1351 = vmatmul.bf16.gmra.mxu0 %v1275
      %v1352 = vpop.f32.mrf.mxu0
      %v1353 = vadd.f32 0.0, %v1352
      %v1354 = vpop.f32.mrf.mxu0
      %v1355 = vadd.f32 0.0, %v1354
      %1356 = vmatmul.bf16.gmra.mxu0 %v1278
      %v1357 = vpop.f32.mrf.mxu0
      %v1358 = vadd.f32 0.0, %v1357
      %v1359 = vpop.f32.mrf.mxu0
      %v1360 = vadd.f32 0.0, %v1359
      %1361 = vmatmul.bf16.gmra.mxu0 %v1281
      %v1362 = vpop.f32.mrf.mxu0
      %v1363 = vadd.f32 0.0, %v1362
      %v1364 = vpop.f32.mrf.mxu0
      %v1365 = vadd.f32 0.0, %v1364
      %1366 = vmatmul.bf16.gmra.mxu0 %v1284
      %v1367 = vpop.f32.mrf.mxu0
      %v1368 = vadd.f32 0.0, %v1367
      %v1369 = vpop.f32.mrf.mxu0
      %v1370 = vadd.f32 0.0, %v1369
      %1371 = vmatmul.bf16.gmra.mxu0 %v1287
      %v1372 = vpop.f32.mrf.mxu0
      %v1373 = vadd.f32 0.0, %v1372
      %v1374 = vpop.f32.mrf.mxu0
      %v1375 = vadd.f32 0.0, %v1374
      %1376 = vmatmul.bf16.gmra.mxu0 %v1290
      %v1377 = vpop.f32.mrf.mxu0
      %v1378 = vadd.f32 0.0, %v1377
      %v1379 = vpop.f32.mrf.mxu0
      %v1380 = vadd.f32 0.0, %v1379
      %1381 = vmatmul.bf16.gmra.mxu0 %v1293
      %v1382 = vpop.f32.mrf.mxu0
      %v1383 = vadd.f32 0.0, %v1382
      %v1384 = vpop.f32.mrf.mxu0
      %v1385 = vadd.f32 0.0, %v1384
      %1386 = vdwg.mxu0
      %v1387 = vadd.f32 %v1079, %v1308
      %v1388 = vadd.f32 %v1081, %v1310
      %v1389 = vadd.f32 %v1084, %v1313
      %v1390 = vadd.f32 %v1086, %v1315
      %v1391 = vadd.f32 %v1089, %v1318
      %v1392 = vadd.f32 %v1091, %v1320
      %v1393 = vadd.f32 %v1094, %v1323
      %v1394 = vadd.f32 %v1096, %v1325
      %v1395 = vadd.f32 %v1099, %v1328
      %v1396 = vadd.f32 %v1101, %v1330
      %v1397 = vadd.f32 %v1104, %v1333
      %v1398 = vadd.f32 %v1106, %v1335
      %v1399 = vadd.f32 %v1109, %v1338
      %v1400 = vadd.f32 %v1111, %v1340
      %v1401 = vadd.f32 %v1114, %v1343
      %v1402 = vadd.f32 %v1116, %v1345
      %v1403 = vadd.f32 %v1119, %v1348
      %v1404 = vadd.f32 %v1121, %v1350
      %v1405 = vadd.f32 %v1124, %v1353
      %v1406 = vadd.f32 %v1126, %v1355
      %v1407 = vadd.f32 %v1129, %v1358
      %v1408 = vadd.f32 %v1131, %v1360
      %v1409 = vadd.f32 %v1134, %v1363
      %v1410 = vadd.f32 %v1136, %v1365
      %v1411 = vadd.f32 %v1139, %v1368
      %v1412 = vadd.f32 %v1141, %v1370
      %v1413 = vadd.f32 %v1144, %v1373
      %v1414 = vadd.f32 %v1146, %v1375
      %v1415 = vadd.f32 %v1149, %v1378
      %v1416 = vadd.f32 %v1151, %v1380
      %v1417 = vadd.f32 %v1154, %v1383
      %v1418 = vadd.f32 %v1156, %v1385
      %v1419 = vld [vmem:[%s2] sm:$0x1]
      %v1421 = vperm.slane %v1419, 0
      %v1423 = vmul.f32 %v1387, %v1421
      %v1424 = vmul.f32 %v1388, %v1421
      %v1425 = vmul.f32 %v1389, %v1421
      %v1426 = vmul.f32 %v1390, %v1421
      %v1427 = vmul.f32 %v1391, %v1421
      %v1428 = vmul.f32 %v1392, %v1421
      %v1429 = vmul.f32 %v1393, %v1421
      %v1430 = vmul.f32 %v1394, %v1421
      %v1431 = vmul.f32 %v1395, %v1421
      %v1432 = vmul.f32 %v1396, %v1421
      %v1433 = vmul.f32 %v1397, %v1421
      %v1434 = vmul.f32 %v1398, %v1421
      %v1435 = vmul.f32 %v1399, %v1421
      %v1436 = vmul.f32 %v1400, %v1421
      %v1437 = vmul.f32 %v1401, %v1421
      %v1438 = vmul.f32 %v1402, %v1421
      %v1439 = vmul.f32 %v1403, %v1421
      %v1440 = vmul.f32 %v1404, %v1421
      %v1441 = vmul.f32 %v1405, %v1421
      %v1442 = vmul.f32 %v1406, %v1421
      %v1443 = vmul.f32 %v1407, %v1421
      %v1444 = vmul.f32 %v1408, %v1421
      %v1445 = vmul.f32 %v1409, %v1421
      %v1446 = vmul.f32 %v1410, %v1421
      %v1447 = vmul.f32 %v1411, %v1421
      %v1448 = vmul.f32 %v1412, %v1421
      %v1449 = vmul.f32 %v1413, %v1421
      %v1450 = vmul.f32 %v1414, %v1421
      %v1451 = vmul.f32 %v1415, %v1421
      %v1452 = vmul.f32 %v1416, %v1421
      %v1453 = vmul.f32 %v1417, %v1421
      %v1454 = vmul.f32 %v1418, %v1421
      %v1455 = vld [vmem:[%s3] sm:$0x1]
      %v1457 = vperm.slane %v1455, 0
      %v1459 = vadd.f32 %v1423, %v1457
      %v1460 = vadd.f32 %v1424, %v1457
      %v1461 = vadd.f32 %v1425, %v1457
      %v1462 = vadd.f32 %v1426, %v1457
      %v1463 = vadd.f32 %v1427, %v1457
      %v1464 = vadd.f32 %v1428, %v1457
      %v1465 = vadd.f32 %v1429, %v1457
      %v1466 = vadd.f32 %v1430, %v1457
      %v1467 = vadd.f32 %v1431, %v1457
      %v1468 = vadd.f32 %v1432, %v1457
      %v1469 = vadd.f32 %v1433, %v1457
      %v1470 = vadd.f32 %v1434, %v1457
      %v1471 = vadd.f32 %v1435, %v1457
      %v1472 = vadd.f32 %v1436, %v1457
      %v1473 = vadd.f32 %v1437, %v1457
      %v1474 = vadd.f32 %v1438, %v1457
      %v1475 = vadd.f32 %v1439, %v1457
      %v1476 = vadd.f32 %v1440, %v1457
      %v1477 = vadd.f32 %v1441, %v1457
      %v1478 = vadd.f32 %v1442, %v1457
      %v1479 = vadd.f32 %v1443, %v1457
      %v1480 = vadd.f32 %v1444, %v1457
      %v1481 = vadd.f32 %v1445, %v1457
      %v1482 = vadd.f32 %v1446, %v1457
      %v1483 = vadd.f32 %v1447, %v1457
      %v1484 = vadd.f32 %v1448, %v1457
      %v1485 = vadd.f32 %v1449, %v1457
      %v1486 = vadd.f32 %v1450, %v1457
      %v1487 = vadd.f32 %v1451, %v1457
      %v1488 = vadd.f32 %v1452, %v1457
      %v1489 = vadd.f32 %v1453, %v1457
      %v1490 = vadd.f32 %v1454, %v1457
      %v1491 = vmax.f32 %v1459, 0.0
      %v1492 = vmax.f32 %v1460, 0.0
      %v1493 = vmax.f32 %v1461, 0.0
      %v1494 = vmax.f32 %v1462, 0.0
      %v1495 = vmax.f32 %v1463, 0.0
      %v1496 = vmax.f32 %v1464, 0.0
      %v1497 = vmax.f32 %v1465, 0.0
      %v1498 = vmax.f32 %v1466, 0.0
      %v1499 = vmax.f32 %v1467, 0.0
      %v1500 = vmax.f32 %v1468, 0.0
      %v1501 = vmax.f32 %v1469, 0.0
      %v1502 = vmax.f32 %v1470, 0.0
      %v1503 = vmax.f32 %v1471, 0.0
      %v1504 = vmax.f32 %v1472, 0.0
      %v1505 = vmax.f32 %v1473, 0.0
      %v1506 = vmax.f32 %v1474, 0.0
      %v1507 = vmax.f32 %v1475, 0.0
      %v1508 = vmax.f32 %v1476, 0.0
      %v1509 = vmax.f32 %v1477, 0.0
      %v1510 = vmax.f32 %v1478, 0.0
      %v1511 = vmax.f32 %v1479, 0.0
      %v1512 = vmax.f32 %v1480, 0.0
      %v1513 = vmax.f32 %v1481, 0.0
      %v1514 = vmax.f32 %v1482, 0.0
      %v1515 = vmax.f32 %v1483, 0.0
      %v1516 = vmax.f32 %v1484, 0.0
      %v1517 = vmax.f32 %v1485, 0.0
      %v1518 = vmax.f32 %v1486, 0.0
      %v1519 = vmax.f32 %v1487, 0.0
      %v1520 = vmax.f32 %v1488, 0.0
      %v1521 = vmax.f32 %v1489, 0.0
      %v1522 = vmax.f32 %v1490, 0.0
      %v1523 = vpack.c.bf16 %v1491, %v1491
      %v1524 = vpack.c.bf16 %v1492, %v1492
      %v1525 = vpack.c.bf16 %v1493, %v1493
      %v1526 = vpack.c.bf16 %v1494, %v1494
      %v1527 = vpack.c.bf16 %v1495, %v1495
      %v1528 = vpack.c.bf16 %v1496, %v1496
      %v1529 = vpack.c.bf16 %v1497, %v1497
      %v1530 = vpack.c.bf16 %v1498, %v1498
      %v1531 = vpack.c.bf16 %v1499, %v1499
      %v1532 = vpack.c.bf16 %v1500, %v1500
      %v1533 = vpack.c.bf16 %v1501, %v1501
      %v1534 = vpack.c.bf16 %v1502, %v1502
      %v1535 = vpack.c.bf16 %v1503, %v1503
      %v1536 = vpack.c.bf16 %v1504, %v1504
      %v1537 = vpack.c.bf16 %v1505, %v1505
      %v1538 = vpack.c.bf16 %v1506, %v1506
      %v1539 = vpack.c.bf16 %v1507, %v1507
      %v1540 = vpack.c.bf16 %v1508, %v1508
      %v1541 = vpack.c.bf16 %v1509, %v1509
      %v1542 = vpack.c.bf16 %v1510, %v1510
      %v1543 = vpack.c.bf16 %v1511, %v1511
      %v1544 = vpack.c.bf16 %v1512, %v1512
      %v1545 = vpack.c.bf16 %v1513, %v1513
      %v1546 = vpack.c.bf16 %v1514, %v1514
      %v1547 = vpack.c.bf16 %v1515, %v1515
      %v1548 = vpack.c.bf16 %v1516, %v1516
      %v1549 = vpack.c.bf16 %v1517, %v1517
      %v1550 = vpack.c.bf16 %v1518, %v1518
      %v1551 = vpack.c.bf16 %v1519, %v1519
      %v1552 = vpack.c.bf16 %v1520, %v1520
      %v1553 = vpack.c.bf16 %v1521, %v1521
      %v1554 = vpack.c.bf16 %v1522, %v1522
      %vm1555 = vcmask 27648
      %1556 = vst.msk [vmem:[%s221] sm:$0xf] %vm1555, %v1523
      %1557 = vst.msk [vmem:[%s221 + $0x4] sm:$0xf] %vm1555, %v1524
      %1558 = vst.msk [vmem:[%s221 + $0x8] sm:$0xf] %vm1555, %v1525
      %1559 = vst.msk [vmem:[%s221 + $0xc] sm:$0xf] %vm1555, %v1526
      %1560 = vst.msk [vmem:[%s221 + $0x10] sm:$0xf] %vm1555, %v1527
      %1561 = vst.msk [vmem:[%s221 + $0x14] sm:$0xf] %vm1555, %v1528
      %1562 = vst.msk [vmem:[%s221 + $0x18] sm:$0xf] %vm1555, %v1529
      %1563 = vst.msk [vmem:[%s221 + $0x1c] sm:$0xf] %vm1555, %v1530
      %1564 = vst.msk [vmem:[%s221 + $0x20] sm:$0xf] %vm1555, %v1531
      %1565 = vst.msk [vmem:[%s221 + $0x24] sm:$0xf] %vm1555, %v1532
      %1566 = vst.msk [vmem:[%s221 + $0x28] sm:$0xf] %vm1555, %v1533
      %1567 = vst.msk [vmem:[%s221 + $0x2c] sm:$0xf] %vm1555, %v1534
      %1568 = vst.msk [vmem:[%s221 + $0x30] sm:$0xf] %vm1555, %v1535
      %1569 = vst.msk [vmem:[%s221 + $0x34] sm:$0xf] %vm1555, %v1536
      %1570 = vst.msk [vmem:[%s221 + $0x38] sm:$0xf] %vm1555, %v1537
      %1571 = vst.msk [vmem:[%s221 + $0x3c] sm:$0xf] %vm1555, %v1538
      %1572 = vst.msk [vmem:[%s221 + $0x40] sm:$0xf] %vm1555, %v1539
      %1573 = vst.msk [vmem:[%s221 + $0x44] sm:$0xf] %vm1555, %v1540
      %1574 = vst.msk [vmem:[%s221 + $0x48] sm:$0xf] %vm1555, %v1541
      %1575 = vst.msk [vmem:[%s221 + $0x4c] sm:$0xf] %vm1555, %v1542
      %1576 = vst.msk [vmem:[%s221 + $0x50] sm:$0xf] %vm1555, %v1543
      %1577 = vst.msk [vmem:[%s221 + $0x54] sm:$0xf] %vm1555, %v1544
      %1578 = vst.msk [vmem:[%s221 + $0x58] sm:$0xf] %vm1555, %v1545
      %1579 = vst.msk [vmem:[%s221 + $0x5c] sm:$0xf] %vm1555, %v1546
      %1580 = vst.msk [vmem:[%s221 + $0x60] sm:$0xf] %vm1555, %v1547
      %1581 = vst.msk [vmem:[%s221 + $0x64] sm:$0xf] %vm1555, %v1548
      %1582 = vst.msk [vmem:[%s221 + $0x68] sm:$0xf] %vm1555, %v1549
      %1583 = vst.msk [vmem:[%s221 + $0x6c] sm:$0xf] %vm1555, %v1550
      %1584 = vst.msk [vmem:[%s221 + $0x70] sm:$0xf] %vm1555, %v1551
      %1585 = vst.msk [vmem:[%s221 + $0x74] sm:$0xf] %vm1555, %v1552
      %1586 = vst.msk [vmem:[%s221 + $0x78] sm:$0xf] %vm1555, %v1553
      %1587 = vst.msk [vmem:[%s221 + $0x7c] sm:$0xf] %vm1555, %v1554
      %s1588 = smul.u32 16, %s20
      %p1589 = scmp.lt.s32.totalorder %s19, 1
      %s1590 = scalar_select %p1589, %s19, 1
      %p1591 = scmp.lt.s32.totalorder %s1588, 15
      %s1592 = scalar_select %p1591, %s1588, 15
      %s1593 = smul.addr %s1592, 2
      %s1594 = smul.addr %s1590, 32
      %s1595 = sadd.s32 %s1593, %s1594
      %s1596 = smul.addr %s1595, 4
      %s1597 = scalar_lea.vmem %s4, %s1596
      // Predicated region
      $region37: #{_lambda_.4} parent=35 // pred_check
        %p1598 = pneg %p136
      $region38: #{_lambda_.4} parent=35 // pred_check_branch
        %1600 = sbr.rel (%p1598) target = $region40
      $region39: #{_lambda_.4} parent=35 // pred_region
        %s1601 = smul.u32 16, %s20
      $region40: #{_lambda_.4} parent=35 // pred_fallthru
        _
    $region36: #{_lambda_.4} parent=5 // pred_fallthru
      _
    %p1602 = scmp.le.s32.totalorder 2, %s10
    // Predicated region
    $region41: #{_lambda_.4} parent=5 // pred_check
      %p1603 = pneg %p1602
    $region42: #{_lambda_.4} parent=5 // pred_check_branch
      %1605 = sbr.rel (%p1603) target = $region44
    $region43: #{_lambda_.4} parent=5 // pred_region
      %s1606 = ssub.s32 %s10, 2
      // Predicated region
      $region45: #{_lambda_.4} parent=43 // pred_check
        %p1607 = pneg %p142
      $region46: #{_lambda_.4} parent=43 // pred_check_branch
        %1609 = sbr.rel (%p1607) target = $region48
      $region47: #{_lambda_.4} parent=43 // pred_region
        %s1610 = smul.u32 16, %s22
        %p1611 = scmp.lt.s32.totalorder %s21, 1
        %s1612 = scalar_select %p1611, %s21, 1
        %p1613 = scmp.lt.s32.totalorder %s1610, 15
        %s1614 = scalar_select %p1613, %s1610, 15
        %s1615 = smul.addr %s1614, 2
        %s1616 = smul.addr %s1612, 32
        %s1617 = sadd.s32 %s1615, %s1616
        %s1618 = smul.addr %s1617, 4
        %s1619 = scalar_lea.vmem %s4, %s1618
      $region48: #{_lambda_.4} parent=43 // pred_fallthru
        _
    $region44: #{_lambda_.4} parent=5 // pred_fallthru
      _
  $region6: #{_lambda_.4} parent=0 // loop_footer
    %s14 = sadd.s32 1, %s10
  $region7: #{_lambda_.4} parent=0 // loop_footer_branch
    %9 = sbr.rel target = $region3
  $region8: #{_lambda_.4} parent=0 // loop_exit
    _

</llo_original>
